<compile_context>
chip_gen: v7x
topology: tpu7x:2x2x1
jax: 0.10.0
libtpu: 0.0.40
codegen_flags: <defaults>
</compile_context>

<pallas_src>
import jax
import jax.numpy as jnp
from jax.experimental import pallas as pl
from jax.experimental.pallas import tpu as pltpu

NUM_PROTO = 10    # len(self.Preps)
NP_PAD = 128      # lane-dense padding of the prototype axis


def mlp_proto_kernel(x_ref,
                     w1_ref, b1_ref, w2_ref, b2_ref, w3_ref, b3_ref,
                     w4_ref, b4_ref, w5_ref, b5_ref, wo_ref, bo_ref,
                     pt_ref, psq_ref, out_ref):
    def lin(h, w_ref, b_ref):
        # bf16 matmul operands, f32 accumulation, f32 bias-add.
        return jnp.dot(h.astype(w_ref.dtype), w_ref[...],
                       preferred_element_type=jnp.float32) + b_ref[...]

    # Layer 1: x already bf16 (cast in the wrapper) -> no in-kernel cast.
    h = jnp.maximum(jnp.dot(x_ref[...], w1_ref[...],
                            preferred_element_type=jnp.float32) + b1_ref[...], 0.0)
    h = jnp.maximum(lin(h, w2_ref, b2_ref), 0.0)   # relu(ff2)
    h = jnp.maximum(lin(h, w3_ref, b3_ref), 0.0)   # relu(ff3)
    h = jnp.maximum(lin(h, w4_ref, b4_ref), 0.0)   # relu(ff4)
    h = jnp.maximum(lin(h, w5_ref, b5_ref), 0.0)   # relu(ff5)
    out3 = lin(h, wo_ref, bo_ref)                  # ff_out (no relu), [TB, W] f32

    # distances[b, k] = || out3[b, :] - P_k ||_2 via one MXU matmul, in f32 so
    # the identity d^2 = ||x||^2 + ||P||^2 - 2 x @ P.T doesn't lose precision
    # near prototypes.
    x_sq = jnp.sum(out3 * out3, axis=1, keepdims=True)                    # [TB, 1]
    xp = jnp.dot(out3, pt_ref[...], preferred_element_type=jnp.float32)   # [TB, NP_PAD]
    d2 = x_sq + psq_ref[...] - 2.0 * xp
    d = jnp.sqrt(jnp.maximum(d2, 0.0))                                    # [TB, NP_PAD]

    # Only the first NUM_PROTO lanes are real prototypes; mask the padding.
    lane = jax.lax.broadcasted_iota(jnp.int32, d.shape, dimension=1)
    valid = lane < NUM_PROTO
    d_valid = jnp.where(valid, d, 0.0)
    row_sum = jnp.sum(d_valid, axis=1, keepdims=True)                     # [TB, 1]
    inv = 1.0 / row_sum                 # exact: tiny [TB,1] tensor, accuracy matters
    out_ref[...] = jnp.where(valid, 1.0 - d * inv, 0.0)                   # lane-dense store


def _resident_spec(shape):
    # Constant index_map: the same weight tile is reused for every batch step
    # (no re-DMA of an unchanged window).
    return pl.BlockSpec(shape, lambda i, _s=shape: tuple(0 for _ in _s))


def _pick_block_b(B, max_block=1024):
    """Largest batch tile <= max_block dividing B, preferring an even grid length
    so v7x's two TensorCores both get steps of the 'parallel' batch axis."""
    candidates = [b for b in range(8, min(B, max_block) + 1, 8) if B % b == 0]
    if not candidates:
        return B                      # tiny batch: one full-extent tile
    even_grid = [b for b in candidates if (B // b) % 2 == 0]
    return max(even_grid) if even_grid else max(candidates)


def net_forward(x, params, *, max_block_b=1024, return_padded=False):
    """params ordered [W1,b1,W2,b2,W3,b3,W4,b4,W5,b5,Wout,bout,P] (W already [in,out])."""
    B, in_dim = x.shape
    W1, b1, W2, b2, W3, b3, W4, b4, W5, b5, Wo, bo, P = params
    width = W1.shape[1]

    # Pad the input feature dim to a multiple of 128 so layer 1 is lane-dense.
    pad = (-in_dim) % 128
    if pad:
        x = jnp.pad(x, ((0, 0), (0, pad)))
        W1 = jnp.pad(W1, ((0, pad), (0, 0)))
    in_dim_p = in_dim + pad

    bf = jnp.bfloat16
    x = x.astype(bf)                                 # halve streamed-input HBM bytes
    ws = [w.astype(bf) for w in (W1, W2, W3, W4, W5, Wo)]
    bs = [b.astype(jnp.float32).reshape(1, -1) for b in (b1, b2, b3, b4, b5, bo)]

    # Prototype head precompute: P.T padded to NP_PAD lane-dense cols (kept f32
    # for the distance matmul), ||P||^2 in f32.
    p_t = jnp.zeros((width, NP_PAD), jnp.float32).at[:, :NUM_PROTO].set(
        P.astype(jnp.float32).T)
    p_sq = jnp.zeros((1, NP_PAD), jnp.float32).at[0, :NUM_PROTO].set(
        jnp.sum(P.astype(jnp.float32) ** 2, axis=1))

    weight_args = []
    for w, b in zip(ws, bs):
        weight_args += [w, b]
    weight_args += [p_t, p_sq]

    block_b = _pick_block_b(B, max_block_b)
    assert B % block_b == 0
    grid = (B // block_b,)

    out_padded = pl.pallas_call(
        mlp_proto_kernel,
        out_shape=jax.ShapeDtypeStruct((B, NP_PAD), jnp.float32),
        grid=grid,
        in_specs=[pl.BlockSpec((block_b, in_dim_p), lambda i: (i, 0))]
                 + [_resident_spec(a.shape) for a in weight_args],
        out_specs=pl.BlockSpec((block_b, NP_PAD), lambda i: (i, 0)),
        compiler_params=pltpu.CompilerParams(dimension_semantics=("parallel",)),
    )(x, *weight_args)

    if return_padded:
        return out_padded                       # [B, 128], first NUM_PROTO lanes valid
    return out_padded[:, :NUM_PROTO]


def net_forward_ref(x, params):
    """Pure-JAX f32 reference of Net.forward (same width-dim prototypes)."""
    W1, b1, W2, b2, W3, b3, W4, b4, W5, b5, Wo, bo, P = params
    h = x
    for W, b in ((W1, b1), (W2, b2), (W3, b3), (W4, b4), (W5, b5)):
        h = jnp.maximum(h @ W + b, 0.0)
    out3 = h @ Wo + bo
    d = jnp.linalg.norm(out3[:, None, :] - P[None, :, :], axis=-1)   # [B, NUM_PROTO]
    return 1.0 - d / jnp.sum(d, axis=1, keepdims=True)


def init_params(key, input_size, width):
    """Deterministic synthetic parameters (shapes from Net.__init__), W stored as [in, out]."""
    keys = jax.random.split(key, 16)
    dims = [(input_size, width)] + [(width, width)] * 5
    params = []
    for i, (d_in, d_out) in enumerate(dims):
        scale = 1.0 / jnp.sqrt(jnp.float32(d_in))
        w = jax.random.uniform(keys[2 * i], (d_in, d_out), jnp.float32, -scale, scale)
        b = jax.random.uniform(keys[2 * i + 1], (1, d_out), jnp.float32, -scale, scale)
        params += [w, b]
    # TODO(synk): original Preps dim (width*2) mismatches ff_out output (width); use width so forward is well-defined.
    P = jax.random.normal(keys[12], (NUM_PROTO, width), jnp.float32)
    params.append(P)
    return params


if __name__ == "__main__":
    # Shapes consistent with the module (flattened 28x28 image -> MLP of `width`),
    # kept modest: width=256 (lane-multiple), batch big enough for 2 large grid tiles.
    B, INPUT_SIZE, WIDTH = 512, 784, 256

    key = jax.random.PRNGKey(0)
    k_x, k_p = jax.random.split(key)
    x = jax.random.normal(k_x, (B, INPUT_SIZE), jnp.float32)
    params = init_params(k_p, INPUT_SIZE, WIDTH)

    out = net_forward(x, params)
    out = jax.block_until_ready(out)

    assert out.shape == (B, NUM_PROTO)
    assert bool(jnp.all(jnp.isfinite(out)))
    # Exact normalization => each row of (1 - d/sum(d)) sums to NUM_PROTO - 1.
    row_sums = jnp.sum(out, axis=1)
    assert bool(jnp.allclose(row_sums, NUM_PROTO - 1.0, atol=1e-3))
    # Cross-check against the pure-JAX f32 reference (loose tol: bf16 layer matmuls).
    ref = net_forward_ref(x, params)
    assert bool(jnp.allclose(out, ref, atol=5e-2))

    print("KERNEL_OK")
</pallas_src>

<mosaic_0001>
module attributes {stable_mosaic.version = 11 : i64} {
  func.func @mlp_proto_kernel(%arg0: i32, %arg1: memref<256x896xbf16, #tpu.memory_space<vmem>>, %arg2: memref<896x256xbf16, #tpu.memory_space<vmem>>, %arg3: memref<1x256xf32, #tpu.memory_space<vmem>>, %arg4: memref<256x256xbf16, #tpu.memory_space<vmem>>, %arg5: memref<1x256xf32, #tpu.memory_space<vmem>>, %arg6: memref<256x256xbf16, #tpu.memory_space<vmem>>, %arg7: memref<1x256xf32, #tpu.memory_space<vmem>>, %arg8: memref<256x256xbf16, #tpu.memory_space<vmem>>, %arg9: memref<1x256xf32, #tpu.memory_space<vmem>>, %arg10: memref<256x256xbf16, #tpu.memory_space<vmem>>, %arg11: memref<1x256xf32, #tpu.memory_space<vmem>>, %arg12: memref<256x256xbf16, #tpu.memory_space<vmem>>, %arg13: memref<1x256xf32, #tpu.memory_space<vmem>>, %arg14: memref<256x128xf32, #tpu.memory_space<vmem>>, %arg15: memref<1x128xf32, #tpu.memory_space<vmem>>, %arg16: memref<256x128xf32, #tpu.memory_space<vmem>>) attributes {dimension_semantics = [#tpu.dimension_semantics<parallel>], iteration_bounds = array<i64: 2>, scalar_prefetch = 0 : i64, scratch_operands = 0 : i64, tpu.core_type = #tpu.core_type<tc>, window_params = [{transform_indices = @transform_0, window_bounds = array<i64: 256, 896>}, {pipeline_mode = #tpu.pipeline_mode<synchronous>, transform_indices = @transform_1, window_bounds = array<i64: 896, 256>}, {pipeline_mode = #tpu.pipeline_mode<synchronous>, transform_indices = @transform_2, window_bounds = array<i64: 1, 256>}, {pipeline_mode = #tpu.pipeline_mode<synchronous>, transform_indices = @transform_3, window_bounds = array<i64: 256, 256>}, {pipeline_mode = #tpu.pipeline_mode<synchronous>, transform_indices = @transform_4, window_bounds = array<i64: 1, 256>}, {pipeline_mode = #tpu.pipeline_mode<synchronous>, transform_indices = @transform_5, window_bounds = array<i64: 256, 256>}, {pipeline_mode = #tpu.pipeline_mode<synchronous>, transform_indices = @transform_6, window_bounds = array<i64: 1, 256>}, {pipeline_mode = #tpu.pipeline_mode<synchronous>, transform_indices = @transform_7, window_bounds = array<i64: 256, 256>}, {pipeline_mode = #tpu.pipeline_mode<synchronous>, transform_indices = @transform_8, window_bounds = array<i64: 1, 256>}, {pipeline_mode = #tpu.pipeline_mode<synchronous>, transform_indices = @transform_9, window_bounds = array<i64: 256, 256>}, {pipeline_mode = #tpu.pipeline_mode<synchronous>, transform_indices = @transform_10, window_bounds = array<i64: 1, 256>}, {pipeline_mode = #tpu.pipeline_mode<synchronous>, transform_indices = @transform_11, window_bounds = array<i64: 256, 256>}, {pipeline_mode = #tpu.pipeline_mode<synchronous>, transform_indices = @transform_12, window_bounds = array<i64: 1, 256>}, {pipeline_mode = #tpu.pipeline_mode<synchronous>, transform_indices = @transform_13, window_bounds = array<i64: 256, 128>}, {pipeline_mode = #tpu.pipeline_mode<synchronous>, transform_indices = @transform_14, window_bounds = array<i64: 1, 128>}, {transform_indices = @transform_15, window_bounds = array<i64: 256, 128>}]} {
    %c0 = arith.constant 0 : index
    %c0_0 = arith.constant 0 : index
    %0 = vector.load %arg1[%c0, %c0_0] : memref<256x896xbf16, #tpu.memory_space<vmem>>, vector<256x896xbf16>
    %c0_1 = arith.constant 0 : index
    %c0_2 = arith.constant 0 : index
    %1 = vector.load %arg2[%c0_1, %c0_2] : memref<896x256xbf16, #tpu.memory_space<vmem>>, vector<896x256xbf16>
    %cst = arith.constant dense<0.000000e+00> : vector<256x256xf32>
    %2 = tpu.matmul %0, %1, %cst {dimension_numbers = #tpu.dot_dimension_numbers<[1], [0], [0], [1], [0, 0, 1, 1], [], []>} : vector<256x896xbf16>, vector<896x256xbf16>, vector<256x256xf32> -> vector<256x256xf32>
    %c0_3 = arith.constant 0 : index
    %c0_4 = arith.constant 0 : index
    %3 = vector.load %arg3[%c0_3, %c0_4] : memref<1x256xf32, #tpu.memory_space<vmem>>, vector<1x256xf32>
    %4 = vector.broadcast %3 : vector<1x256xf32> to vector<256x256xf32>
    %5 = arith.addf %2, %4 : vector<256x256xf32>
    %cst_5 = arith.constant 0.000000e+00 : f32
    %6 = vector.broadcast %cst_5 : f32 to vector<256x256xf32>
    %7 = arith.maximumf %5, %6 : vector<256x256xf32>
    %8 = arith.truncf %7 : vector<256x256xf32> to vector<256x256xbf16>
    %c0_6 = arith.constant 0 : index
    %c0_7 = arith.constant 0 : index
    %9 = vector.load %arg4[%c0_6, %c0_7] : memref<256x256xbf16, #tpu.memory_space<vmem>>, vector<256x256xbf16>
    %cst_8 = arith.constant dense<0.000000e+00> : vector<256x256xf32>
    %10 = tpu.matmul %8, %9, %cst_8 {dimension_numbers = #tpu.dot_dimension_numbers<[1], [0], [0], [1], [0, 0, 1, 1], [], []>} : vector<256x256xbf16>, vector<256x256xbf16>, vector<256x256xf32> -> vector<256x256xf32>
    %c0_9 = arith.constant 0 : index
    %c0_10 = arith.constant 0 : index
    %11 = vector.load %arg5[%c0_9, %c0_10] : memref<1x256xf32, #tpu.memory_space<vmem>>, vector<1x256xf32>
    %12 = vector.broadcast %11 : vector<1x256xf32> to vector<256x256xf32>
    %13 = arith.addf %10, %12 : vector<256x256xf32>
    %cst_11 = arith.constant 0.000000e+00 : f32
    %14 = vector.broadcast %cst_11 : f32 to vector<256x256xf32>
    %15 = arith.maximumf %13, %14 : vector<256x256xf32>
    %16 = arith.truncf %15 : vector<256x256xf32> to vector<256x256xbf16>
    %c0_12 = arith.constant 0 : index
    %c0_13 = arith.constant 0 : index
    %17 = vector.load %arg6[%c0_12, %c0_13] : memref<256x256xbf16, #tpu.memory_space<vmem>>, vector<256x256xbf16>
    %cst_14 = arith.constant dense<0.000000e+00> : vector<256x256xf32>
    %18 = tpu.matmul %16, %17, %cst_14 {dimension_numbers = #tpu.dot_dimension_numbers<[1], [0], [0], [1], [0, 0, 1, 1], [], []>} : vector<256x256xbf16>, vector<256x256xbf16>, vector<256x256xf32> -> vector<256x256xf32>
    %c0_15 = arith.constant 0 : index
    %c0_16 = arith.constant 0 : index
    %19 = vector.load %arg7[%c0_15, %c0_16] : memref<1x256xf32, #tpu.memory_space<vmem>>, vector<1x256xf32>
    %20 = vector.broadcast %19 : vector<1x256xf32> to vector<256x256xf32>
    %21 = arith.addf %18, %20 : vector<256x256xf32>
    %cst_17 = arith.constant 0.000000e+00 : f32
    %22 = vector.broadcast %cst_17 : f32 to vector<256x256xf32>
    %23 = arith.maximumf %21, %22 : vector<256x256xf32>
    %24 = arith.truncf %23 : vector<256x256xf32> to vector<256x256xbf16>
    %c0_18 = arith.constant 0 : index
    %c0_19 = arith.constant 0 : index
    %25 = vector.load %arg8[%c0_18, %c0_19] : memref<256x256xbf16, #tpu.memory_space<vmem>>, vector<256x256xbf16>
    %cst_20 = arith.constant dense<0.000000e+00> : vector<256x256xf32>
    %26 = tpu.matmul %24, %25, %cst_20 {dimension_numbers = #tpu.dot_dimension_numbers<[1], [0], [0], [1], [0, 0, 1, 1], [], []>} : vector<256x256xbf16>, vector<256x256xbf16>, vector<256x256xf32> -> vector<256x256xf32>
    %c0_21 = arith.constant 0 : index
    %c0_22 = arith.constant 0 : index
    %27 = vector.load %arg9[%c0_21, %c0_22] : memref<1x256xf32, #tpu.memory_space<vmem>>, vector<1x256xf32>
    %28 = vector.broadcast %27 : vector<1x256xf32> to vector<256x256xf32>
    %29 = arith.addf %26, %28 : vector<256x256xf32>
    %cst_23 = arith.constant 0.000000e+00 : f32
    %30 = vector.broadcast %cst_23 : f32 to vector<256x256xf32>
    %31 = arith.maximumf %29, %30 : vector<256x256xf32>
    %32 = arith.truncf %31 : vector<256x256xf32> to vector<256x256xbf16>
    %c0_24 = arith.constant 0 : index
    %c0_25 = arith.constant 0 : index
    %33 = vector.load %arg10[%c0_24, %c0_25] : memref<256x256xbf16, #tpu.memory_space<vmem>>, vector<256x256xbf16>
    %cst_26 = arith.constant dense<0.000000e+00> : vector<256x256xf32>
    %34 = tpu.matmul %32, %33, %cst_26 {dimension_numbers = #tpu.dot_dimension_numbers<[1], [0], [0], [1], [0, 0, 1, 1], [], []>} : vector<256x256xbf16>, vector<256x256xbf16>, vector<256x256xf32> -> vector<256x256xf32>
    %c0_27 = arith.constant 0 : index
    %c0_28 = arith.constant 0 : index
    %35 = vector.load %arg11[%c0_27, %c0_28] : memref<1x256xf32, #tpu.memory_space<vmem>>, vector<1x256xf32>
    %36 = vector.broadcast %35 : vector<1x256xf32> to vector<256x256xf32>
    %37 = arith.addf %34, %36 : vector<256x256xf32>
    %cst_29 = arith.constant 0.000000e+00 : f32
    %38 = vector.broadcast %cst_29 : f32 to vector<256x256xf32>
    %39 = arith.maximumf %37, %38 : vector<256x256xf32>
    %40 = arith.truncf %39 : vector<256x256xf32> to vector<256x256xbf16>
    %c0_30 = arith.constant 0 : index
    %c0_31 = arith.constant 0 : index
    %41 = vector.load %arg12[%c0_30, %c0_31] : memref<256x256xbf16, #tpu.memory_space<vmem>>, vector<256x256xbf16>
    %cst_32 = arith.constant dense<0.000000e+00> : vector<256x256xf32>
    %42 = tpu.matmul %40, %41, %cst_32 {dimension_numbers = #tpu.dot_dimension_numbers<[1], [0], [0], [1], [0, 0, 1, 1], [], []>} : vector<256x256xbf16>, vector<256x256xbf16>, vector<256x256xf32> -> vector<256x256xf32>
    %c0_33 = arith.constant 0 : index
    %c0_34 = arith.constant 0 : index
    %43 = vector.load %arg13[%c0_33, %c0_34] : memref<1x256xf32, #tpu.memory_space<vmem>>, vector<1x256xf32>
    %44 = vector.broadcast %43 : vector<1x256xf32> to vector<256x256xf32>
    %45 = arith.addf %42, %44 : vector<256x256xf32>
    %46 = arith.mulf %45, %45 : vector<256x256xf32>
    %cst_35 = arith.constant dense<0.000000e+00> : vector<256xf32>
    %47 = vector.multi_reduction <add>, %46, %cst_35 [1] : vector<256x256xf32> to vector<256xf32>
    %48 = vector.shape_cast %47 : vector<256xf32> to vector<256x1xf32>
    %c0_36 = arith.constant 0 : index
    %c0_37 = arith.constant 0 : index
    %49 = vector.load %arg14[%c0_36, %c0_37] : memref<256x128xf32, #tpu.memory_space<vmem>>, vector<256x128xf32>
    %cst_38 = arith.constant dense<0.000000e+00> : vector<256x128xf32>
    %50 = tpu.matmul %45, %49, %cst_38 {dimension_numbers = #tpu.dot_dimension_numbers<[1], [0], [0], [1], [0, 0, 1, 1], [], []>} : vector<256x256xf32>, vector<256x128xf32>, vector<256x128xf32> -> vector<256x128xf32>
    %c0_39 = arith.constant 0 : index
    %c0_40 = arith.constant 0 : index
    %51 = vector.load %arg15[%c0_39, %c0_40] : memref<1x128xf32, #tpu.memory_space<vmem>>, vector<1x128xf32>
    %52 = vector.broadcast %48 : vector<256x1xf32> to vector<256x128xf32>
    %53 = vector.broadcast %51 : vector<1x128xf32> to vector<256x128xf32>
    %54 = arith.addf %52, %53 : vector<256x128xf32>
    %cst_41 = arith.constant 2.000000e+00 : f32
    %55 = vector.broadcast %cst_41 : f32 to vector<256x128xf32>
    %56 = arith.mulf %55, %50 : vector<256x128xf32>
    %57 = arith.subf %54, %56 : vector<256x128xf32>
    %cst_42 = arith.constant 0.000000e+00 : f32
    %58 = vector.broadcast %cst_42 : f32 to vector<256x128xf32>
    %59 = arith.maximumf %57, %58 : vector<256x128xf32>
    %60 = math.sqrt %59 : vector<256x128xf32>
    %61 = tpu.iota {dimensions = array<i32: 1>} : vector<256x128xi32>
    %c10_i32 = arith.constant 10 : i32
    %62 = vector.broadcast %c10_i32 : i32 to vector<256x128xi32>
    %63 = arith.cmpi slt, %61, %62 : vector<256x128xi32>
    %cst_43 = arith.constant 0.000000e+00 : f32
    %64 = vector.broadcast %cst_43 : f32 to vector<256x128xf32>
    %65 = arith.select %63, %60, %64 : vector<256x128xi1>, vector<256x128xf32>
    %cst_44 = arith.constant dense<0.000000e+00> : vector<256xf32>
    %66 = vector.multi_reduction <add>, %65, %cst_44 [1] : vector<256x128xf32> to vector<256xf32>
    %67 = vector.shape_cast %66 : vector<256xf32> to vector<256x1xf32>
    %cst_45 = arith.constant 1.000000e+00 : f32
    %68 = vector.broadcast %cst_45 : f32 to vector<256x1xf32>
    %69 = arith.divf %68, %67 : vector<256x1xf32>
    %70 = vector.broadcast %69 : vector<256x1xf32> to vector<256x128xf32>
    %71 = arith.mulf %60, %70 : vector<256x128xf32>
    %cst_46 = arith.constant 1.000000e+00 : f32
    %72 = vector.broadcast %cst_46 : f32 to vector<256x128xf32>
    %73 = arith.subf %72, %71 : vector<256x128xf32>
    %cst_47 = arith.constant 0.000000e+00 : f32
    %74 = vector.broadcast %cst_47 : f32 to vector<256x128xf32>
    %75 = arith.select %63, %73, %74 : vector<256x128xi1>, vector<256x128xf32>
    %c0_48 = arith.constant 0 : index
    %c0_49 = arith.constant 0 : index
    %76 = vector.load %arg16[%c0_48, %c0_49] : memref<256x128xf32, #tpu.memory_space<vmem>>, vector<256x128xf32>
    tpu.vector_store %arg16[%c0_48, %c0_49], %75 {strides = array<i32>} : memref<256x128xf32, #tpu.memory_space<vmem>>, vector<256x128xf32>,
    return
  }
  func.func @transform_0(%arg0: i32) -> (i32, i32) {
    %c0_i32 = arith.constant 0 : i32
    %c0_i32_0 = arith.constant 0 : i32
    return %arg0, %c0_i32 : i32, i32
  }
  func.func @transform_1(%arg0: i32) -> (i32, i32) {
    %c0_i32 = arith.constant 0 : i32
    %c0_i32_0 = arith.constant 0 : i32
    %c0_i32_1 = arith.constant 0 : i32
    return %c0_i32, %c0_i32_0 : i32, i32
  }
  func.func @transform_2(%arg0: i32) -> (i32, i32) {
    %c0_i32 = arith.constant 0 : i32
    %c0_i32_0 = arith.constant 0 : i32
    %c0_i32_1 = arith.constant 0 : i32
    return %c0_i32, %c0_i32_0 : i32, i32
  }
  func.func @transform_3(%arg0: i32) -> (i32, i32) {
    %c0_i32 = arith.constant 0 : i32
    %c0_i32_0 = arith.constant 0 : i32
    %c0_i32_1 = arith.constant 0 : i32
    return %c0_i32, %c0_i32_0 : i32, i32
  }
  func.func @transform_4(%arg0: i32) -> (i32, i32) {
    %c0_i32 = arith.constant 0 : i32
    %c0_i32_0 = arith.constant 0 : i32
    %c0_i32_1 = arith.constant 0 : i32
    return %c0_i32, %c0_i32_0 : i32, i32
  }
  func.func @transform_5(%arg0: i32) -> (i32, i32) {
    %c0_i32 = arith.constant 0 : i32
    %c0_i32_0 = arith.constant 0 : i32
    %c0_i32_1 = arith.constant 0 : i32
    return %c0_i32, %c0_i32_0 : i32, i32
  }
  func.func @transform_6(%arg0: i32) -> (i32, i32) {
    %c0_i32 = arith.constant 0 : i32
    %c0_i32_0 = arith.constant 0 : i32
    %c0_i32_1 = arith.constant 0 : i32
    return %c0_i32, %c0_i32_0 : i32, i32
  }
  func.func @transform_7(%arg0: i32) -> (i32, i32) {
    %c0_i32 = arith.constant 0 : i32
    %c0_i32_0 = arith.constant 0 : i32
    %c0_i32_1 = arith.constant 0 : i32
    return %c0_i32, %c0_i32_0 : i32, i32
  }
  func.func @transform_8(%arg0: i32) -> (i32, i32) {
    %c0_i32 = arith.constant 0 : i32
    %c0_i32_0 = arith.constant 0 : i32
    %c0_i32_1 = arith.constant 0 : i32
    return %c0_i32, %c0_i32_0 : i32, i32
  }
  func.func @transform_9(%arg0: i32) -> (i32, i32) {
    %c0_i32 = arith.constant 0 : i32
    %c0_i32_0 = arith.constant 0 : i32
    %c0_i32_1 = arith.constant 0 : i32
    return %c0_i32, %c0_i32_0 : i32, i32
  }
  func.func @transform_10(%arg0: i32) -> (i32, i32) {
    %c0_i32 = arith.constant 0 : i32
    %c0_i32_0 = arith.constant 0 : i32
    %c0_i32_1 = arith.constant 0 : i32
    return %c0_i32, %c0_i32_0 : i32, i32
  }
  func.func @transform_11(%arg0: i32) -> (i32, i32) {
    %c0_i32 = arith.constant 0 : i32
    %c0_i32_0 = arith.constant 0 : i32
    %c0_i32_1 = arith.constant 0 : i32
    return %c0_i32, %c0_i32_0 : i32, i32
  }
  func.func @transform_12(%arg0: i32) -> (i32, i32) {
    %c0_i32 = arith.constant 0 : i32
    %c0_i32_0 = arith.constant 0 : i32
    %c0_i32_1 = arith.constant 0 : i32
    return %c0_i32, %c0_i32_0 : i32, i32
  }
  func.func @transform_13(%arg0: i32) -> (i32, i32) {
    %c0_i32 = arith.constant 0 : i32
    %c0_i32_0 = arith.constant 0 : i32
    %c0_i32_1 = arith.constant 0 : i32
    return %c0_i32, %c0_i32_0 : i32, i32
  }
  func.func @transform_14(%arg0: i32) -> (i32, i32) {
    %c0_i32 = arith.constant 0 : i32
    %c0_i32_0 = arith.constant 0 : i32
    %c0_i32_1 = arith.constant 0 : i32
    return %c0_i32, %c0_i32_0 : i32, i32
  }
  func.func @transform_15(%arg0: i32) -> (i32, i32) {
    %c0_i32 = arith.constant 0 : i32
    %c0_i32_0 = arith.constant 0 : i32
    return %arg0, %c0_i32 : i32, i32
  }
}

</mosaic_0001>

<llo_original>
// kernel: tpu_custom_call.1
$region0: #{tpu_custom_call.1}
  #allocation0 [shape = 'u32[]', space=smem, size = 0x4, offset = 0x4, fixed_abs, tag = 'smem constant byte address 0x4 - core index']
  #allocation1 [shape = 'u32[144,128]{1,0:T(1,128)}', space=vmem, size = 0x12000, scoped, tag = 'internal scratch']
  %s0 = inlined_call_operand.hbm [shape: bf16[512,896], index: 0, kind: input, shape index: {}]
  %s1 = inlined_call_operand.hbm [shape: bf16[896,256], index: 1, kind: input, shape index: {}]
  %s2 = inlined_call_operand.vmem [shape: f32[1,256], index: 2, kind: input, shape index: {}]
  %s3 = inlined_call_operand.hbm [shape: bf16[256,256], index: 3, kind: input, shape index: {}]
  %s4 = inlined_call_operand.vmem [shape: f32[1,256], index: 4, kind: input, shape index: {}]
  %s5 = inlined_call_operand.hbm [shape: bf16[256,256], index: 5, kind: input, shape index: {}]
  %s6 = inlined_call_operand.vmem [shape: f32[1,256], index: 6, kind: input, shape index: {}]
  %s7 = inlined_call_operand.hbm [shape: bf16[256,256], index: 7, kind: input, shape index: {}]
  %s8 = inlined_call_operand.vmem [shape: f32[1,256], index: 8, kind: input, shape index: {}]
  %s9 = inlined_call_operand.hbm [shape: bf16[256,256], index: 9, kind: input, shape index: {}]
  %s10 = inlined_call_operand.vmem [shape: f32[1,256], index: 10, kind: input, shape index: {}]
  %s11 = inlined_call_operand.hbm [shape: bf16[256,256], index: 11, kind: input, shape index: {}]
  %s12 = inlined_call_operand.vmem [shape: f32[1,256], index: 12, kind: input, shape index: {}]
  %s13 = inlined_call_operand.hbm [shape: f32[256,128], index: 13, kind: input, shape index: {}]
  %s14 = inlined_call_operand.vmem [shape: f32[1,128], index: 14, kind: input, shape index: {}]
  %s15 = inlined_call_operand.hbm [shape: f32[512,128], index: 15, kind: output, shape index: {}]
  %s16 = sld [smem:[#allocation0]]
  $region125: #{tpu_custom_call.1} parent=0
    _
  %s18 = ssub.s32 1, %s16
  %s19 = scalar_select 0, %s18, %s16
  $region1: #{tpu_custom_call.1} parent=0
    #allocation2 [shape = 'u8[917504]{0}', space=vmem, size = 0xe0000, scoped, tag = 'input window, operand 0']
    #allocation3 [shape = 's32[2]{0}', space=sflag, size = 0x8, scoped, tag = 'scoped memory for tpu_custom_call.1']
    #allocation4 [shape = 's32[2]{0}', space=sflag, size = 0x8, scoped, tag = 'scoped memory for tpu_custom_call.1']
    #allocation5 [shape = 'u8[458752]{0}', space=vmem, size = 0x70000, scoped, tag = 'input window, operand 1, single buffered']
    #allocation6 [shape = 's32[1]{0}', space=sflag, size = 0x4, scoped, tag = 'scoped memory for tpu_custom_call.1']
    #allocation7 [shape = 'u8[131072]{0}', space=vmem, size = 0x20000, scoped, tag = 'input window, operand 3, single buffered']
    #allocation8 [shape = 'u8[131072]{0}', space=vmem, size = 0x20000, scoped, tag = 'input window, operand 5, single buffered']
    #allocation9 [shape = 's32[1]{0}', space=sflag, size = 0x4, scoped, tag = 'scoped memory for tpu_custom_call.1']
    #allocation10 [shape = 'u8[131072]{0}', space=vmem, size = 0x20000, scoped, tag = 'input window, operand 7, single buffered']
    #allocation11 [shape = 'u8[131072]{0}', space=vmem, size = 0x20000, scoped, tag = 'input window, operand 9, single buffered']
    #allocation12 [shape = 's32[1]{0}', space=sflag, size = 0x4, scoped, tag = 'scoped memory for tpu_custom_call.1']
    #allocation13 [shape = 'u8[131072]{0}', space=vmem, size = 0x20000, scoped, tag = 'input window, operand 11, single buffered']
    #allocation14 [shape = 'u8[131072]{0}', space=vmem, size = 0x20000, scoped, tag = 'input window, operand 13, single buffered']
    #allocation15 [shape = 's32[1]{0}', space=sflag, size = 0x4, scoped, tag = 'scoped memory for tpu_custom_call.1']
    #allocation16 [shape = 'u8[262144]{0}', space=vmem, size = 0x40000, scoped, tag = 'output window, operand 0']
    %20 = vsyncpa [#allocation3], 0
    %s21 = scalar_lea.sflag [#allocation3], 1
    %22 = vsyncpa %s21, 0
    %23 = vsyncpa [#allocation6], 0
    %24 = vsyncpa [#allocation9], 0
    %25 = vsyncpa [#allocation12], 0
    %26 = vsyncpa [#allocation15], 0
    %27 = vsyncpa [#allocation4], 0
    %s28 = scalar_lea.sflag [#allocation4], 1
    %29 = vsyncpa %s28, 0
    loop: start=0, step=1, limit=4
    $region2: #{tpu_custom_call.1} parent=1 // loop_pre_header
      _
    $region3: #{tpu_custom_call.1} parent=1 // loop_header
      %s31 = sphi 0, %s35
      %p32 = scmp.ge.s32.totalorder %s31, 4
      %s41 = sphi 0, %s43
      %s44 = sphi 0, %s41
      %s45 = sphi 0, %s44
      %s61 = sphi 0, %s45
      %s65 = sphi 0, %s65
      %s67 = sphi 0, %s65
      %s68 = sphi 0, %s67
      %s82 = sphi 0, %s68
      %s86 = sphi 0, %s86
      %s88 = sphi 0, %s86
      %s89 = sphi 0, %s88
      %s103 = sphi 0, %s89
      %s107 = sphi 0, %s107
      %s109 = sphi 0, %s107
      %s110 = sphi 0, %s109
      %s124 = sphi 0, %s110
      %s128 = sphi 0, %s128
      %s130 = sphi 0, %s128
      %s131 = sphi 0, %s130
      %s145 = sphi 0, %s131
      %s149 = sphi 0, %s149
      %s151 = sphi 0, %s149
      %s152 = sphi 0, %s151
      %s166 = sphi 0, %s152
      %s170 = sphi 0, %s170
      %s172 = sphi 0, %s170
      %s173 = sphi 0, %s172
      %s187 = sphi 0, %s173
      %s191 = sphi 0, %s191
      %s193 = sphi 0, %s191
      %s194 = sphi 0, %s193
      %s208 = sphi 0, %s194
      %s212 = sphi 0, %s212
      %s214 = sphi 0, %s212
      %s215 = sphi 0, %s214
      %s229 = sphi 0, %s215
      %s233 = sphi 0, %s233
      %s235 = sphi 0, %s233
      %s236 = sphi 0, %s235
      %s250 = sphi 0, %s236
      %s254 = sphi 0, %s254
      %s256 = sphi 0, %s254
      %s257 = sphi 0, %s256
      %s271 = sphi 0, %s257
      %s275 = sphi 0, %s275
      %s277 = sphi 0, %s275
      %s278 = sphi 0, %s277
      %s292 = sphi 0, %s278
      %s296 = sphi 0, %s296
      %s298 = sphi 0, %s296
      %s299 = sphi 0, %s298
      %s313 = sphi 0, %s299
      %s317 = sphi 0, %s317
      %s319 = sphi 0, %s317
      %s320 = sphi 0, %s319
      %s334 = sphi 0, %s320
      %s338 = sphi 0, %s338
      %s340 = sphi 0, %s338
      %s341 = sphi 0, %s340
      %s355 = sphi 0, %s341
      %s361 = sphi 0, %s363
      %s364 = sphi 0, %s361
      %s365 = sphi 0, %s364
      %s381 = sphi 0, %s365
    $region4: #{tpu_custom_call.1} parent=1 // loop_header_branch
      %34 = sbr.rel (%p32) target = $region8
    $region5: #{tpu_custom_call.1} parent=1 // loop_body
      %s36 = ssub.s32 %s31, 1
      %s37 = ssub.s32 %s31, 2
      %s38 = sadd.s32 %s31, 1
      %s39 = ssub.s32 %s31, %s38
      %p40 = scmp.eq.s32.totalorder %s39, 0
      %s42 = sadd.s32 %s41, 1
      %s43 = scalar_select %p40, %s41, %s42
      %p46 = pneg %p40
      %p47 = scmp.eq.s32.totalorder %s31, 1
      %p48 = por %p46, %p47
      %p49 = scmp.ne.s32.totalorder %s41, %s44
      %p50 = scmp.eq.s32.totalorder %s31, 0
      %p51 = por %p49, %p50
      %p52 = scmp.ne.s32.totalorder %s41, %s44
      %p53 = scmp.eq.s32.totalorder %s36, 1
      %p54 = por %p52, %p53
      %p55 = scmp.ne.s32.totalorder %s44, %s45
      %p56 = scmp.eq.s32.totalorder %s36, 0
      %p57 = por %p55, %p56
      %p58 = scmp.ne.s32.totalorder %s44, %s45
      %p59 = scmp.eq.s32.totalorder %s37, 1
      %p60 = por %p58, %p59
      %p62 = scmp.ne.s32.totalorder %s45, %s61
      %p63 = scmp.eq.s32.totalorder %s37, 0
      %p64 = por %p62, %p63
      %s66 = sadd.s32 %s65, 1
      %p69 = scmp.eq.s32.totalorder %s31, 1
      %p70 = scmp.ne.s32.totalorder %s65, %s67
      %p71 = scmp.eq.s32.totalorder %s31, 0
      %p72 = por %p70, %p71
      %p73 = scmp.ne.s32.totalorder %s65, %s67
      %p74 = scmp.eq.s32.totalorder %s36, 1
      %p75 = por %p73, %p74
      %p76 = scmp.ne.s32.totalorder %s67, %s68
      %p77 = scmp.eq.s32.totalorder %s36, 0
      %p78 = por %p76, %p77
      %p79 = scmp.ne.s32.totalorder %s67, %s68
      %p80 = scmp.eq.s32.totalorder %s37, 1
      %p81 = por %p79, %p80
      %p83 = scmp.ne.s32.totalorder %s68, %s82
      %p84 = scmp.eq.s32.totalorder %s37, 0
      %p85 = por %p83, %p84
      %s87 = sadd.s32 %s86, 1
      %p90 = scmp.eq.s32.totalorder %s31, 1
      %p91 = scmp.ne.s32.totalorder %s86, %s88
      %p92 = scmp.eq.s32.totalorder %s31, 0
      %p93 = por %p91, %p92
      %p94 = scmp.ne.s32.totalorder %s86, %s88
      %p95 = scmp.eq.s32.totalorder %s36, 1
      %p96 = por %p94, %p95
      %p97 = scmp.ne.s32.totalorder %s88, %s89
      %p98 = scmp.eq.s32.totalorder %s36, 0
      %p99 = por %p97, %p98
      %p100 = scmp.ne.s32.totalorder %s88, %s89
      %p101 = scmp.eq.s32.totalorder %s37, 1
      %p102 = por %p100, %p101
      %p104 = scmp.ne.s32.totalorder %s89, %s103
      %p105 = scmp.eq.s32.totalorder %s37, 0
      %p106 = por %p104, %p105
      %s108 = sadd.s32 %s107, 1
      %p111 = scmp.eq.s32.totalorder %s31, 1
      %p112 = scmp.ne.s32.totalorder %s107, %s109
      %p113 = scmp.eq.s32.totalorder %s31, 0
      %p114 = por %p112, %p113
      %p115 = scmp.ne.s32.totalorder %s107, %s109
      %p116 = scmp.eq.s32.totalorder %s36, 1
      %p117 = por %p115, %p116
      %p118 = scmp.ne.s32.totalorder %s109, %s110
      %p119 = scmp.eq.s32.totalorder %s36, 0
      %p120 = por %p118, %p119
      %p121 = scmp.ne.s32.totalorder %s109, %s110
      %p122 = scmp.eq.s32.totalorder %s37, 1
      %p123 = por %p121, %p122
      %p125 = scmp.ne.s32.totalorder %s110, %s124
      %p126 = scmp.eq.s32.totalorder %s37, 0
      %p127 = por %p125, %p126
      %s129 = sadd.s32 %s128, 1
      %p132 = scmp.eq.s32.totalorder %s31, 1
      %p133 = scmp.ne.s32.totalorder %s128, %s130
      %p134 = scmp.eq.s32.totalorder %s31, 0
      %p135 = por %p133, %p134
      %p136 = scmp.ne.s32.totalorder %s128, %s130
      %p137 = scmp.eq.s32.totalorder %s36, 1
      %p138 = por %p136, %p137
      %p139 = scmp.ne.s32.totalorder %s130, %s131
      %p140 = scmp.eq.s32.totalorder %s36, 0
      %p141 = por %p139, %p140
      %p142 = scmp.ne.s32.totalorder %s130, %s131
      %p143 = scmp.eq.s32.totalorder %s37, 1
      %p144 = por %p142, %p143
      %p146 = scmp.ne.s32.totalorder %s131, %s145
      %p147 = scmp.eq.s32.totalorder %s37, 0
      %p148 = por %p146, %p147
      %s150 = sadd.s32 %s149, 1
      %p153 = scmp.eq.s32.totalorder %s31, 1
      %p154 = scmp.ne.s32.totalorder %s149, %s151
      %p155 = scmp.eq.s32.totalorder %s31, 0
      %p156 = por %p154, %p155
      %p157 = scmp.ne.s32.totalorder %s149, %s151
      %p158 = scmp.eq.s32.totalorder %s36, 1
      %p159 = por %p157, %p158
      %p160 = scmp.ne.s32.totalorder %s151, %s152
      %p161 = scmp.eq.s32.totalorder %s36, 0
      %p162 = por %p160, %p161
      %p163 = scmp.ne.s32.totalorder %s151, %s152
      %p164 = scmp.eq.s32.totalorder %s37, 1
      %p165 = por %p163, %p164
      %p167 = scmp.ne.s32.totalorder %s152, %s166
      %p168 = scmp.eq.s32.totalorder %s37, 0
      %p169 = por %p167, %p168
      %s171 = sadd.s32 %s170, 1
      %p174 = scmp.eq.s32.totalorder %s31, 1
      %p175 = scmp.ne.s32.totalorder %s170, %s172
      %p176 = scmp.eq.s32.totalorder %s31, 0
      %p177 = por %p175, %p176
      %p178 = scmp.ne.s32.totalorder %s170, %s172
      %p179 = scmp.eq.s32.totalorder %s36, 1
      %p180 = por %p178, %p179
      %p181 = scmp.ne.s32.totalorder %s172, %s173
      %p182 = scmp.eq.s32.totalorder %s36, 0
      %p183 = por %p181, %p182
      %p184 = scmp.ne.s32.totalorder %s172, %s173
      %p185 = scmp.eq.s32.totalorder %s37, 1
      %p186 = por %p184, %p185
      %p188 = scmp.ne.s32.totalorder %s173, %s187
      %p189 = scmp.eq.s32.totalorder %s37, 0
      %p190 = por %p188, %p189
      %s192 = sadd.s32 %s191, 1
      %p195 = scmp.eq.s32.totalorder %s31, 1
      %p196 = scmp.ne.s32.totalorder %s191, %s193
      %p197 = scmp.eq.s32.totalorder %s31, 0
      %p198 = por %p196, %p197
      %p199 = scmp.ne.s32.totalorder %s191, %s193
      %p200 = scmp.eq.s32.totalorder %s36, 1
      %p201 = por %p199, %p200
      %p202 = scmp.ne.s32.totalorder %s193, %s194
      %p203 = scmp.eq.s32.totalorder %s36, 0
      %p204 = por %p202, %p203
      %p205 = scmp.ne.s32.totalorder %s193, %s194
      %p206 = scmp.eq.s32.totalorder %s37, 1
      %p207 = por %p205, %p206
      %p209 = scmp.ne.s32.totalorder %s194, %s208
      %p210 = scmp.eq.s32.totalorder %s37, 0
      %p211 = por %p209, %p210
      %s213 = sadd.s32 %s212, 1
      %p216 = scmp.eq.s32.totalorder %s31, 1
      %p217 = scmp.ne.s32.totalorder %s212, %s214
      %p218 = scmp.eq.s32.totalorder %s31, 0
      %p219 = por %p217, %p218
      %p220 = scmp.ne.s32.totalorder %s212, %s214
      %p221 = scmp.eq.s32.totalorder %s36, 1
      %p222 = por %p220, %p221
      %p223 = scmp.ne.s32.totalorder %s214, %s215
      %p224 = scmp.eq.s32.totalorder %s36, 0
      %p225 = por %p223, %p224
      %p226 = scmp.ne.s32.totalorder %s214, %s215
      %p227 = scmp.eq.s32.totalorder %s37, 1
      %p228 = por %p226, %p227
      %p230 = scmp.ne.s32.totalorder %s215, %s229
      %p231 = scmp.eq.s32.totalorder %s37, 0
      %p232 = por %p230, %p231
      %s234 = sadd.s32 %s233, 1
      %p237 = scmp.eq.s32.totalorder %s31, 1
      %p238 = scmp.ne.s32.totalorder %s233, %s235
      %p239 = scmp.eq.s32.totalorder %s31, 0
      %p240 = por %p238, %p239
      %p241 = scmp.ne.s32.totalorder %s233, %s235
      %p242 = scmp.eq.s32.totalorder %s36, 1
      %p243 = por %p241, %p242
      %p244 = scmp.ne.s32.totalorder %s235, %s236
      %p245 = scmp.eq.s32.totalorder %s36, 0
      %p246 = por %p244, %p245
      %p247 = scmp.ne.s32.totalorder %s235, %s236
      %p248 = scmp.eq.s32.totalorder %s37, 1
      %p249 = por %p247, %p248
      %p251 = scmp.ne.s32.totalorder %s236, %s250
      %p252 = scmp.eq.s32.totalorder %s37, 0
      %p253 = por %p251, %p252
      %s255 = sadd.s32 %s254, 1
      %p258 = scmp.eq.s32.totalorder %s31, 1
      %p259 = scmp.ne.s32.totalorder %s254, %s256
      %p260 = scmp.eq.s32.totalorder %s31, 0
      %p261 = por %p259, %p260
      %p262 = scmp.ne.s32.totalorder %s254, %s256
      %p263 = scmp.eq.s32.totalorder %s36, 1
      %p264 = por %p262, %p263
      %p265 = scmp.ne.s32.totalorder %s256, %s257
      %p266 = scmp.eq.s32.totalorder %s36, 0
      %p267 = por %p265, %p266
      %p268 = scmp.ne.s32.totalorder %s256, %s257
      %p269 = scmp.eq.s32.totalorder %s37, 1
      %p270 = por %p268, %p269
      %p272 = scmp.ne.s32.totalorder %s257, %s271
      %p273 = scmp.eq.s32.totalorder %s37, 0
      %p274 = por %p272, %p273
      %s276 = sadd.s32 %s275, 1
      %p279 = scmp.eq.s32.totalorder %s31, 1
      %p280 = scmp.ne.s32.totalorder %s275, %s277
      %p281 = scmp.eq.s32.totalorder %s31, 0
      %p282 = por %p280, %p281
      %p283 = scmp.ne.s32.totalorder %s275, %s277
      %p284 = scmp.eq.s32.totalorder %s36, 1
      %p285 = por %p283, %p284
      %p286 = scmp.ne.s32.totalorder %s277, %s278
      %p287 = scmp.eq.s32.totalorder %s36, 0
      %p288 = por %p286, %p287
      %p289 = scmp.ne.s32.totalorder %s277, %s278
      %p290 = scmp.eq.s32.totalorder %s37, 1
      %p291 = por %p289, %p290
      %p293 = scmp.ne.s32.totalorder %s278, %s292
      %p294 = scmp.eq.s32.totalorder %s37, 0
      %p295 = por %p293, %p294
      %s297 = sadd.s32 %s296, 1
      %p300 = scmp.eq.s32.totalorder %s31, 1
      %p301 = scmp.ne.s32.totalorder %s296, %s298
      %p302 = scmp.eq.s32.totalorder %s31, 0
      %p303 = por %p301, %p302
      %p304 = scmp.ne.s32.totalorder %s296, %s298
      %p305 = scmp.eq.s32.totalorder %s36, 1
      %p306 = por %p304, %p305
      %p307 = scmp.ne.s32.totalorder %s298, %s299
      %p308 = scmp.eq.s32.totalorder %s36, 0
      %p309 = por %p307, %p308
      %p310 = scmp.ne.s32.totalorder %s298, %s299
      %p311 = scmp.eq.s32.totalorder %s37, 1
      %p312 = por %p310, %p311
      %p314 = scmp.ne.s32.totalorder %s299, %s313
      %p315 = scmp.eq.s32.totalorder %s37, 0
      %p316 = por %p314, %p315
      %s318 = sadd.s32 %s317, 1
      %p321 = scmp.eq.s32.totalorder %s31, 1
      %p322 = scmp.ne.s32.totalorder %s317, %s319
      %p323 = scmp.eq.s32.totalorder %s31, 0
      %p324 = por %p322, %p323
      %p325 = scmp.ne.s32.totalorder %s317, %s319
      %p326 = scmp.eq.s32.totalorder %s36, 1
      %p327 = por %p325, %p326
      %p328 = scmp.ne.s32.totalorder %s319, %s320
      %p329 = scmp.eq.s32.totalorder %s36, 0
      %p330 = por %p328, %p329
      %p331 = scmp.ne.s32.totalorder %s319, %s320
      %p332 = scmp.eq.s32.totalorder %s37, 1
      %p333 = por %p331, %p332
      %p335 = scmp.ne.s32.totalorder %s320, %s334
      %p336 = scmp.eq.s32.totalorder %s37, 0
      %p337 = por %p335, %p336
      %s339 = sadd.s32 %s338, 1
      %p342 = scmp.eq.s32.totalorder %s31, 1
      %p343 = scmp.ne.s32.totalorder %s338, %s340
      %p344 = scmp.eq.s32.totalorder %s31, 0
      %p345 = por %p343, %p344
      %p346 = scmp.ne.s32.totalorder %s338, %s340
      %p347 = scmp.eq.s32.totalorder %s36, 1
      %p348 = por %p346, %p347
      %p349 = scmp.ne.s32.totalorder %s340, %s341
      %p350 = scmp.eq.s32.totalorder %s36, 0
      %p351 = por %p349, %p350
      %p352 = scmp.ne.s32.totalorder %s340, %s341
      %p353 = scmp.eq.s32.totalorder %s37, 1
      %p354 = por %p352, %p353
      %p356 = scmp.ne.s32.totalorder %s341, %s355
      %p357 = scmp.eq.s32.totalorder %s37, 0
      %p358 = por %p356, %p357
      %s359 = ssub.s32 %s31, %s38
      %p360 = scmp.eq.s32.totalorder %s359, 0
      %s362 = sadd.s32 %s361, 1
      %s363 = scalar_select %p360, %s361, %s362
      %p366 = pneg %p360
      %p367 = scmp.eq.s32.totalorder %s31, 1
      %p368 = por %p366, %p367
      %p369 = scmp.ne.s32.totalorder %s361, %s364
      %p370 = scmp.eq.s32.totalorder %s31, 0
      %p371 = por %p369, %p370
      %p372 = scmp.ne.s32.totalorder %s361, %s364
      %p373 = scmp.eq.s32.totalorder %s36, 1
      %p374 = por %p372, %p373
      %p375 = scmp.ne.s32.totalorder %s364, %s365
      %p376 = scmp.eq.s32.totalorder %s36, 0
      %p377 = por %p375, %p376
      %p378 = scmp.ne.s32.totalorder %s364, %s365
      %p379 = scmp.eq.s32.totalorder %s37, 1
      %p380 = por %p378, %p379
      %p382 = scmp.ne.s32.totalorder %s365, %s381
      %p383 = scmp.eq.s32.totalorder %s37, 0
      %p384 = por %p382, %p383
      %p385 = scmp.le.s32.totalorder 1, %s31
      %p386 = scmp.lt.s32.totalorder %s31, 3
      %p387 = pnand %p385, %p386
      %p388 = pneg %p387
      // Predicated region
      $region9: #{tpu_custom_call.1} parent=5 // pred_check
        _
      $region10: #{tpu_custom_call.1} parent=5 // pred_check_branch
        %390 = sbr.rel (%p387) target = $region12
      $region11: #{tpu_custom_call.1} parent=5 // pred_region
        %s391 = ssub.s32 %s31, 1
        // Predicated region
        $region13: #{tpu_custom_call.1} parent=11 // pred_check
          %p392 = pneg %p78
        $region14: #{tpu_custom_call.1} parent=11 // pred_check_branch
          %394 = sbr.rel (%p392) target = $region16
        $region15: #{tpu_custom_call.1} parent=11 // pred_region
          %s396 = ssub.s32 14336, 14336
          %397 = vsyncadd [#allocation6], %s396
          %s398 = sshll.u32 [#allocation5], 4
          %s399 = int_to_ptr.vmem [resolvable:$true] %s398
          %404 = dma.hbm_to_vmem [thread:$0]  %s1, 14336, %s399, [#allocation6], 128, 128, 8
        $region16: #{tpu_custom_call.1} parent=11 // pred_fallthru
          _
        // Predicated region
        $region17: #{tpu_custom_call.1} parent=11 // pred_check
          %p405 = pneg %p99
        $region18: #{tpu_custom_call.1} parent=11 // pred_check_branch
          %407 = sbr.rel (%p405) target = $region20
        $region19: #{tpu_custom_call.1} parent=11 // pred_region
          _
        $region20: #{tpu_custom_call.1} parent=11 // pred_fallthru
          _
        // Predicated region
        $region21: #{tpu_custom_call.1} parent=11 // pred_check
          %p408 = pneg %p120
        $region22: #{tpu_custom_call.1} parent=11 // pred_check_branch
          %410 = sbr.rel (%p408) target = $region24
        $region23: #{tpu_custom_call.1} parent=11 // pred_region
          %s412 = ssub.s32 4096, 4096
          %413 = vsyncadd [#allocation6], %s412
          %s414 = sshll.u32 [#allocation7], 4
          %s415 = int_to_ptr.vmem [resolvable:$true] %s414
          %420 = dma.hbm_to_vmem [thread:$0]  %s3, 4096, %s415, [#allocation6], 128, 128, 8
        $region24: #{tpu_custom_call.1} parent=11 // pred_fallthru
          _
        // Predicated region
        $region25: #{tpu_custom_call.1} parent=11 // pred_check
          %p421 = pneg %p141
        $region26: #{tpu_custom_call.1} parent=11 // pred_check_branch
          %423 = sbr.rel (%p421) target = $region28
        $region27: #{tpu_custom_call.1} parent=11 // pred_region
          _
        $region28: #{tpu_custom_call.1} parent=11 // pred_fallthru
          _
        // Predicated region
        $region29: #{tpu_custom_call.1} parent=11 // pred_check
          %p424 = pneg %p162
        $region30: #{tpu_custom_call.1} parent=11 // pred_check_branch
          %426 = sbr.rel (%p424) target = $region32
        $region31: #{tpu_custom_call.1} parent=11 // pred_region
          %s428 = ssub.s32 4096, 4096
          %429 = vsyncadd [#allocation9], %s428
          %s430 = sshll.u32 [#allocation8], 4
          %s431 = int_to_ptr.vmem [resolvable:$true] %s430
          %436 = dma.hbm_to_vmem [thread:$0]  %s5, 4096, %s431, [#allocation9], 128, 128, 8
        $region32: #{tpu_custom_call.1} parent=11 // pred_fallthru
          _
        // Predicated region
        $region33: #{tpu_custom_call.1} parent=11 // pred_check
          %p437 = pneg %p183
        $region34: #{tpu_custom_call.1} parent=11 // pred_check_branch
          %439 = sbr.rel (%p437) target = $region36
        $region35: #{tpu_custom_call.1} parent=11 // pred_region
          _
        $region36: #{tpu_custom_call.1} parent=11 // pred_fallthru
          _
        // Predicated region
        $region37: #{tpu_custom_call.1} parent=11 // pred_check
          %p440 = pneg %p204
        $region38: #{tpu_custom_call.1} parent=11 // pred_check_branch
          %442 = sbr.rel (%p440) target = $region40
        $region39: #{tpu_custom_call.1} parent=11 // pred_region
          %s444 = ssub.s32 4096, 4096
          %445 = vsyncadd [#allocation9], %s444
          %s446 = sshll.u32 [#allocation10], 4
          %s447 = int_to_ptr.vmem [resolvable:$true] %s446
          %452 = dma.hbm_to_vmem [thread:$0]  %s7, 4096, %s447, [#allocation9], 128, 128, 8
        $region40: #{tpu_custom_call.1} parent=11 // pred_fallthru
          _
        // Predicated region
        $region41: #{tpu_custom_call.1} parent=11 // pred_check
          %p453 = pneg %p225
        $region42: #{tpu_custom_call.1} parent=11 // pred_check_branch
          %455 = sbr.rel (%p453) target = $region44
        $region43: #{tpu_custom_call.1} parent=11 // pred_region
          _
        $region44: #{tpu_custom_call.1} parent=11 // pred_fallthru
          _
        // Predicated region
        $region45: #{tpu_custom_call.1} parent=11 // pred_check
          %p456 = pneg %p246
        $region46: #{tpu_custom_call.1} parent=11 // pred_check_branch
          %458 = sbr.rel (%p456) target = $region48
        $region47: #{tpu_custom_call.1} parent=11 // pred_region
          %s460 = ssub.s32 4096, 4096
          %461 = vsyncadd [#allocation12], %s460
          %s462 = sshll.u32 [#allocation11], 4
          %s463 = int_to_ptr.vmem [resolvable:$true] %s462
          %468 = dma.hbm_to_vmem [thread:$0]  %s9, 4096, %s463, [#allocation12], 128, 128, 8
        $region48: #{tpu_custom_call.1} parent=11 // pred_fallthru
          _
        // Predicated region
        $region49: #{tpu_custom_call.1} parent=11 // pred_check
          %p469 = pneg %p267
        $region50: #{tpu_custom_call.1} parent=11 // pred_check_branch
          %471 = sbr.rel (%p469) target = $region52
        $region51: #{tpu_custom_call.1} parent=11 // pred_region
          _
        $region52: #{tpu_custom_call.1} parent=11 // pred_fallthru
          _
        // Predicated region
        $region53: #{tpu_custom_call.1} parent=11 // pred_check
          %p472 = pneg %p288
        $region54: #{tpu_custom_call.1} parent=11 // pred_check_branch
          %474 = sbr.rel (%p472) target = $region56
        $region55: #{tpu_custom_call.1} parent=11 // pred_region
          %s476 = ssub.s32 4096, 4096
          %477 = vsyncadd [#allocation12], %s476
          %s478 = sshll.u32 [#allocation13], 4
          %s479 = int_to_ptr.vmem [resolvable:$true] %s478
          %484 = dma.hbm_to_vmem [thread:$0]  %s11, 4096, %s479, [#allocation12], 128, 128, 8
        $region56: #{tpu_custom_call.1} parent=11 // pred_fallthru
          _
        // Predicated region
        $region57: #{tpu_custom_call.1} parent=11 // pred_check
          %p485 = pneg %p309
        $region58: #{tpu_custom_call.1} parent=11 // pred_check_branch
          %487 = sbr.rel (%p485) target = $region60
        $region59: #{tpu_custom_call.1} parent=11 // pred_region
          _
        $region60: #{tpu_custom_call.1} parent=11 // pred_fallthru
          _
        // Predicated region
        $region61: #{tpu_custom_call.1} parent=11 // pred_check
          %p488 = pneg %p330
        $region62: #{tpu_custom_call.1} parent=11 // pred_check_branch
          %490 = sbr.rel (%p488) target = $region64
        $region63: #{tpu_custom_call.1} parent=11 // pred_region
          %s492 = ssub.s32 4096, 4096
          %493 = vsyncadd [#allocation15], %s492
          %s494 = sshll.u32 [#allocation14], 4
          %s495 = int_to_ptr.vmem [resolvable:$true] %s494
          %500 = dma.hbm_to_vmem [thread:$0]  %s13, 4096, %s495, [#allocation15], 128, 128, 8
        $region64: #{tpu_custom_call.1} parent=11 // pred_fallthru
          _
        // Predicated region
        $region65: #{tpu_custom_call.1} parent=11 // pred_check
          %p501 = pneg %p351
        $region66: #{tpu_custom_call.1} parent=11 // pred_check_branch
          %503 = sbr.rel (%p501) target = $region68
        $region67: #{tpu_custom_call.1} parent=11 // pred_region
          _
        $region68: #{tpu_custom_call.1} parent=11 // pred_fallthru
          _
      $region12: #{tpu_custom_call.1} parent=5 // pred_fallthru
        _
      %p504 = scmp.lt.s32.totalorder %s31, 2
      // Predicated region
      $region69: #{tpu_custom_call.1} parent=5 // pred_check
        %p505 = pneg %p504
      $region70: #{tpu_custom_call.1} parent=5 // pred_check_branch
        %507 = sbr.rel (%p505) target = $region72
      $region71: #{tpu_custom_call.1} parent=5 // pred_region
        // Predicated region
        $region73: #{tpu_custom_call.1} parent=71 // pred_check
          %p508 = pneg %p51
        $region74: #{tpu_custom_call.1} parent=71 // pred_check_branch
          %510 = sbr.rel (%p508) target = $region76
        $region75: #{tpu_custom_call.1} parent=71 // pred_region
          %s511 = sand.u32 %s41, 1
          %s512 = scalar_lea.sflag [#allocation3], %s511
          %s513 = sand.u32 %s41, 1
          %s514 = smul.addr %s513, 896
          %s515 = scalar_lea.vmem [#allocation2], %s514
          %s516 = smul.u32 32, %s31
          %s518 = ssub.s32 14336, 14336
          %519 = vsyncadd %s512, %s518
          %s520 = smul.addr %s516, 7
          %s521 = smul.addr %s520, 64
          %s522 = scalar_lea.hbm %s0, %s521
          %s523 = sshll.u32 %s515, 4
          %s524 = int_to_ptr.vmem [resolvable:$true] %s523
          %529 = dma.hbm_to_vmem [thread:$0]  %s522, 14336, %s524, %s512, 448, 448, 28
        $region76: #{tpu_custom_call.1} parent=71 // pred_fallthru
          _
      $region72: #{tpu_custom_call.1} parent=5 // pred_fallthru
        _
      %p530 = scmp.le.s32.totalorder 1, %s31
      %p531 = scmp.lt.s32.totalorder %s31, 3
      %p532 = pnand %p530, %p531
      %p533 = pneg %p532
      // Predicated region
      $region77: #{tpu_custom_call.1} parent=5 // pred_check
        _
      $region78: #{tpu_custom_call.1} parent=5 // pred_check_branch
        %535 = sbr.rel (%p532) target = $region80
      $region79: #{tpu_custom_call.1} parent=5 // pred_region
        %s536 = ssub.s32 %s31, 1
        %s537 = sand.u32 %s44, 1
        %s538 = scalar_lea.sflag [#allocation3], %s537
        %s539 = sand.u32 %s44, 1
        %s540 = smul.addr %s539, 896
        %s541 = scalar_lea.vmem [#allocation2], %s540
        // Predicated region
        $region81: #{tpu_custom_call.1} parent=79 // pred_check
          %p542 = pneg %p57
        $region82: #{tpu_custom_call.1} parent=79 // pred_check_branch
          %544 = sbr.rel (%p542) target = $region84
        $region83: #{tpu_custom_call.1} parent=79 // pred_region
          %545 = dma.done %s538, 14336
        $region84: #{tpu_custom_call.1} parent=79 // pred_fallthru
          _
        // Predicated region
        $region85: #{tpu_custom_call.1} parent=79 // pred_check
          %p546 = pneg %p78
        $region86: #{tpu_custom_call.1} parent=79 // pred_check_branch
          %548 = sbr.rel (%p546) target = $region88
        $region87: #{tpu_custom_call.1} parent=79 // pred_region
          %549 = dma.done [#allocation6], 14336
        $region88: #{tpu_custom_call.1} parent=79 // pred_fallthru
          _
        // Predicated region
        $region89: #{tpu_custom_call.1} parent=79 // pred_check
          %p550 = pneg %p120
        $region90: #{tpu_custom_call.1} parent=79 // pred_check_branch
          %552 = sbr.rel (%p550) target = $region92
        $region91: #{tpu_custom_call.1} parent=79 // pred_region
          %553 = dma.done [#allocation6], 4096
        $region92: #{tpu_custom_call.1} parent=79 // pred_fallthru
          _
        // Predicated region
        $region93: #{tpu_custom_call.1} parent=79 // pred_check
          %p554 = pneg %p162
        $region94: #{tpu_custom_call.1} parent=79 // pred_check_branch
          %556 = sbr.rel (%p554) target = $region96
        $region95: #{tpu_custom_call.1} parent=79 // pred_region
          %557 = dma.done [#allocation9], 4096
        $region96: #{tpu_custom_call.1} parent=79 // pred_fallthru
          _
        // Predicated region
        $region97: #{tpu_custom_call.1} parent=79 // pred_check
          %p558 = pneg %p204
        $region98: #{tpu_custom_call.1} parent=79 // pred_check_branch
          %560 = sbr.rel (%p558) target = $region100
        $region99: #{tpu_custom_call.1} parent=79 // pred_region
          %561 = dma.done [#allocation9], 4096
        $region100: #{tpu_custom_call.1} parent=79 // pred_fallthru
          _
        // Predicated region
        $region101: #{tpu_custom_call.1} parent=79 // pred_check
          %p562 = pneg %p246
        $region102: #{tpu_custom_call.1} parent=79 // pred_check_branch
          %564 = sbr.rel (%p562) target = $region104
        $region103: #{tpu_custom_call.1} parent=79 // pred_region
          %565 = dma.done [#allocation12], 4096
        $region104: #{tpu_custom_call.1} parent=79 // pred_fallthru
          _
        // Predicated region
        $region105: #{tpu_custom_call.1} parent=79 // pred_check
          %p566 = pneg %p288
        $region106: #{tpu_custom_call.1} parent=79 // pred_check_branch
          %568 = sbr.rel (%p566) target = $region108
        $region107: #{tpu_custom_call.1} parent=79 // pred_region
          %569 = dma.done [#allocation12], 4096
        $region108: #{tpu_custom_call.1} parent=79 // pred_fallthru
          _
        // Predicated region
        $region109: #{tpu_custom_call.1} parent=79 // pred_check
          %p570 = pneg %p330
        $region110: #{tpu_custom_call.1} parent=79 // pred_check_branch
          %572 = sbr.rel (%p570) target = $region112
        $region111: #{tpu_custom_call.1} parent=79 // pred_region
          %573 = dma.done [#allocation15], 4096
        $region112: #{tpu_custom_call.1} parent=79 // pred_fallthru
          _
        %s574 = sand.u32 %s44, 1
        %s575 = scalar_lea.sflag [#allocation3], %s574
        %s576 = sand.u32 %s44, 1
        %s577 = smul.addr %s576, 896
        %s578 = scalar_lea.vmem [#allocation2], %s577
        %p579 = pneg %p57
        %p580 = pneg %p54
        %p581 = pneg %p78
        %p582 = pneg %p75
        %p583 = pneg %p99
        %p584 = pneg %p96
        %p585 = pneg %p120
        %p586 = pneg %p117
        %p587 = pneg %p141
        %p588 = pneg %p138
        %p589 = pneg %p162
        %p590 = pneg %p159
        %p591 = pneg %p183
        %p592 = pneg %p180
        %p593 = pneg %p204
        %p594 = pneg %p201
        %p595 = pneg %p225
        %p596 = pneg %p222
        %p597 = pneg %p246
        %p598 = pneg %p243
        %p599 = pneg %p267
        %p600 = pneg %p264
        %p601 = pneg %p288
        %p602 = pneg %p285
        %p603 = pneg %p309
        %p604 = pneg %p306
        %p605 = pneg %p330
        %p606 = pneg %p327
        %p607 = pneg %p351
        %p608 = pneg %p348
        %p609 = pneg %p377
        %p610 = pneg %p374
        %s611 = sand.u32 %s364, 1
        %s612 = scalar_lea.sflag [#allocation4], %s611
        %s613 = sand.u32 %s364, 1
        %s614 = smul.addr %s613, 256
        %s615 = scalar_lea.vmem [#allocation16], %s614
        %s616 = smul.u32 32, %s36
        %s617 = smul.u32 32, %s36
        %v619 = vld [vmem:[%s541] sm:$0xff]
        %v620 = vld [vmem:[%s541 + $0x8] sm:$0xff]
        %v621 = vld [vmem:[%s541 + $0x10] sm:$0xff]
        %v622 = vld [vmem:[%s541 + $0x18] sm:$0xf]
        %v623 = vld [vmem:[%s541 + $0x1c] sm:$0xff]
        %v624 = vld [vmem:[%s541 + $0x24] sm:$0xff]
        %v625 = vld [vmem:[%s541 + $0x2c] sm:$0xff]
        %v626 = vld [vmem:[%s541 + $0x34] sm:$0xf]
        %v627 = vld [vmem:[%s541 + $0x38] sm:$0xff]
        %v628 = vld [vmem:[%s541 + $0x40] sm:$0xff]
        %v629 = vld [vmem:[%s541 + $0x48] sm:$0xff]
        %v630 = vld [vmem:[%s541 + $0x50] sm:$0xf]
        %v631 = vld [vmem:[%s541 + $0x54] sm:$0xff]
        %v632 = vld [vmem:[%s541 + $0x5c] sm:$0xff]
        %v633 = vld [vmem:[%s541 + $0x64] sm:$0xff]
        %v634 = vld [vmem:[%s541 + $0x6c] sm:$0xf]
        %v635 = vld [vmem:[%s541 + $0x70] sm:$0xff]
        %v636 = vld [vmem:[%s541 + $0x78] sm:$0xff]
        %v637 = vld [vmem:[%s541 + $0x80] sm:$0xff]
        %v638 = vld [vmem:[%s541 + $0x88] sm:$0xf]
        %v639 = vld [vmem:[%s541 + $0x8c] sm:$0xff]
        %v640 = vld [vmem:[%s541 + $0x94] sm:$0xff]
        %v641 = vld [vmem:[%s541 + $0x9c] sm:$0xff]
        %v642 = vld [vmem:[%s541 + $0xa4] sm:$0xf]
        %v643 = vld [vmem:[%s541 + $0xa8] sm:$0xff]
        %v644 = vld [vmem:[%s541 + $0xb0] sm:$0xff]
        %v645 = vld [vmem:[%s541 + $0xb8] sm:$0xff]
        %v646 = vld [vmem:[%s541 + $0xc0] sm:$0xf]
        %v647 = vld [vmem:[%s541 + $0xc4] sm:$0xff]
        %v648 = vld [vmem:[%s541 + $0xcc] sm:$0xff]
        %v649 = vld [vmem:[%s541 + $0xd4] sm:$0xff]
        %v650 = vld [vmem:[%s541 + $0xdc] sm:$0xf]
        %v651 = vld [vmem:[%s541 + $0xe0] sm:$0xff]
        %v652 = vld [vmem:[%s541 + $0xe8] sm:$0xff]
        %v653 = vld [vmem:[%s541 + $0xf0] sm:$0xff]
        %v654 = vld [vmem:[%s541 + $0xf8] sm:$0xf]
        %v655 = vld [vmem:[%s541 + $0xfc] sm:$0xff]
        %v656 = vld [vmem:[%s541 + $0x104] sm:$0xff]
        %v657 = vld [vmem:[%s541 + $0x10c] sm:$0xff]
        %v658 = vld [vmem:[%s541 + $0x114] sm:$0xf]
        %v659 = vld [vmem:[%s541 + $0x118] sm:$0xff]
        %v660 = vld [vmem:[%s541 + $0x120] sm:$0xff]
        %v661 = vld [vmem:[%s541 + $0x128] sm:$0xff]
        %v662 = vld [vmem:[%s541 + $0x130] sm:$0xf]
        %v663 = vld [vmem:[%s541 + $0x134] sm:$0xff]
        %v664 = vld [vmem:[%s541 + $0x13c] sm:$0xff]
        %v665 = vld [vmem:[%s541 + $0x144] sm:$0xff]
        %v666 = vld [vmem:[%s541 + $0x14c] sm:$0xf]
        %v667 = vld [vmem:[%s541 + $0x150] sm:$0xff]
        %v668 = vld [vmem:[%s541 + $0x158] sm:$0xff]
        %v669 = vld [vmem:[%s541 + $0x160] sm:$0xff]
        %v670 = vld [vmem:[%s541 + $0x168] sm:$0xf]
        %v671 = vld [vmem:[%s541 + $0x16c] sm:$0xff]
        %v672 = vld [vmem:[%s541 + $0x174] sm:$0xff]
        %v673 = vld [vmem:[%s541 + $0x17c] sm:$0xff]
        %v674 = vld [vmem:[%s541 + $0x184] sm:$0xf]
        %v675 = vld [vmem:[%s541 + $0x188] sm:$0xff]
        %v676 = vld [vmem:[%s541 + $0x190] sm:$0xff]
        %v677 = vld [vmem:[%s541 + $0x198] sm:$0xff]
        %v678 = vld [vmem:[%s541 + $0x1a0] sm:$0xf]
        %v679 = vld [vmem:[%s541 + $0x1a4] sm:$0xff]
        %v680 = vld [vmem:[%s541 + $0x1ac] sm:$0xff]
        %v681 = vld [vmem:[%s541 + $0x1b4] sm:$0xff]
        %v682 = vld [vmem:[%s541 + $0x1bc] sm:$0xf]
        %v683 = vld [vmem:[%s541 + $0x1c0] sm:$0xff]
        %v684 = vld [vmem:[%s541 + $0x1c8] sm:$0xff]
        %v685 = vld [vmem:[%s541 + $0x1d0] sm:$0xff]
        %v686 = vld [vmem:[%s541 + $0x1d8] sm:$0xf]
        %v687 = vld [vmem:[%s541 + $0x1dc] sm:$0xff]
        %v688 = vld [vmem:[%s541 + $0x1e4] sm:$0xff]
        %v689 = vld [vmem:[%s541 + $0x1ec] sm:$0xff]
        %v690 = vld [vmem:[%s541 + $0x1f4] sm:$0xf]
        %v691 = vld [vmem:[%s541 + $0x1f8] sm:$0xff]
        %v692 = vld [vmem:[%s541 + $0x200] sm:$0xff]
        %v693 = vld [vmem:[%s541 + $0x208] sm:$0xff]
        %v694 = vld [vmem:[%s541 + $0x210] sm:$0xf]
        %v695 = vld [vmem:[%s541 + $0x214] sm:$0xff]
        %v696 = vld [vmem:[%s541 + $0x21c] sm:$0xff]
        %v697 = vld [vmem:[%s541 + $0x224] sm:$0xff]
        %v698 = vld [vmem:[%s541 + $0x22c] sm:$0xf]
        %v699 = vld [vmem:[%s541 + $0x230] sm:$0xff]
        %v700 = vld [vmem:[%s541 + $0x238] sm:$0xff]
        %v701 = vld [vmem:[%s541 + $0x240] sm:$0xff]
        %v702 = vld [vmem:[%s541 + $0x248] sm:$0xf]
        %v703 = vld [vmem:[%s541 + $0x24c] sm:$0xff]
        %v704 = vld [vmem:[%s541 + $0x254] sm:$0xff]
        %v705 = vld [vmem:[%s541 + $0x25c] sm:$0xff]
        %v706 = vld [vmem:[%s541 + $0x264] sm:$0xf]
        %v707 = vld [vmem:[%s541 + $0x268] sm:$0xff]
        %v708 = vld [vmem:[%s541 + $0x270] sm:$0xff]
        %v709 = vld [vmem:[%s541 + $0x278] sm:$0xff]
        %v710 = vld [vmem:[%s541 + $0x280] sm:$0xf]
        %v711 = vld [vmem:[%s541 + $0x284] sm:$0xff]
        %v712 = vld [vmem:[%s541 + $0x28c] sm:$0xff]
        %v713 = vld [vmem:[%s541 + $0x294] sm:$0xff]
        %v714 = vld [vmem:[%s541 + $0x29c] sm:$0xf]
        %v715 = vld [vmem:[%s541 + $0x2a0] sm:$0xff]
        %v716 = vld [vmem:[%s541 + $0x2a8] sm:$0xff]
        %v717 = vld [vmem:[%s541 + $0x2b0] sm:$0xff]
        %v718 = vld [vmem:[%s541 + $0x2b8] sm:$0xf]
        %v719 = vld [vmem:[%s541 + $0x2bc] sm:$0xff]
        %v720 = vld [vmem:[%s541 + $0x2c4] sm:$0xff]
        %v721 = vld [vmem:[%s541 + $0x2cc] sm:$0xff]
        %v722 = vld [vmem:[%s541 + $0x2d4] sm:$0xf]
        %v723 = vld [vmem:[%s541 + $0x2d8] sm:$0xff]
        %v724 = vld [vmem:[%s541 + $0x2e0] sm:$0xff]
        %v725 = vld [vmem:[%s541 + $0x2e8] sm:$0xff]
        %v726 = vld [vmem:[%s541 + $0x2f0] sm:$0xf]
        %v727 = vld [vmem:[%s541 + $0x2f4] sm:$0xff]
        %v728 = vld [vmem:[%s541 + $0x2fc] sm:$0xff]
        %v729 = vld [vmem:[%s541 + $0x304] sm:$0xff]
        %v730 = vld [vmem:[%s541 + $0x30c] sm:$0xf]
        %v731 = vld [vmem:[%s541 + $0x310] sm:$0xff]
        %v732 = vld [vmem:[%s541 + $0x318] sm:$0xff]
        %v733 = vld [vmem:[%s541 + $0x320] sm:$0xff]
        %v734 = vld [vmem:[%s541 + $0x328] sm:$0xf]
        %v735 = vld [vmem:[%s541 + $0x32c] sm:$0xff]
        %v736 = vld [vmem:[%s541 + $0x334] sm:$0xff]
        %v737 = vld [vmem:[%s541 + $0x33c] sm:$0xff]
        %v738 = vld [vmem:[%s541 + $0x344] sm:$0xf]
        %v739 = vld [vmem:[%s541 + $0x348] sm:$0xff]
        %v740 = vld [vmem:[%s541 + $0x350] sm:$0xff]
        %v741 = vld [vmem:[%s541 + $0x358] sm:$0xff]
        %v742 = vld [vmem:[%s541 + $0x360] sm:$0xf]
        %v743 = vld [vmem:[%s541 + $0x364] sm:$0xff]
        %v744 = vld [vmem:[%s541 + $0x36c] sm:$0xff]
        %v745 = vld [vmem:[%s541 + $0x374] sm:$0xff]
        %v746 = vld [vmem:[%s541 + $0x37c] sm:$0xf]
        %v747 = vld [vmem:[#allocation5] sm:$0xff]
        %v748 = vld [vmem:[#allocation5 + $0x8] sm:$0xff]
        %v749 = vld [vmem:[#allocation5 + $0x10] sm:$0xff]
        %v750 = vld [vmem:[#allocation5 + $0x18] sm:$0xff]
        %v751 = vld [vmem:[#allocation5 + $0x20] sm:$0xff]
        %v752 = vld [vmem:[#allocation5 + $0x28] sm:$0xff]
        %v753 = vld [vmem:[#allocation5 + $0x30] sm:$0xff]
        %v754 = vld [vmem:[#allocation5 + $0x38] sm:$0xff]
        %v755 = vld [vmem:[#allocation5 + $0x40] sm:$0xff]
        %v756 = vld [vmem:[#allocation5 + $0x48] sm:$0xff]
        %v757 = vld [vmem:[#allocation5 + $0x50] sm:$0xff]
        %v758 = vld [vmem:[#allocation5 + $0x58] sm:$0xff]
        %v759 = vld [vmem:[#allocation5 + $0x60] sm:$0xff]
        %v760 = vld [vmem:[#allocation5 + $0x68] sm:$0xff]
        %v761 = vld [vmem:[#allocation5 + $0x70] sm:$0xff]
        %v762 = vld [vmem:[#allocation5 + $0x78] sm:$0xff]
        %v763 = vld [vmem:[#allocation5 + $0x80] sm:$0xff]
        %v764 = vld [vmem:[#allocation5 + $0x88] sm:$0xff]
        %v765 = vld [vmem:[#allocation5 + $0x90] sm:$0xff]
        %v766 = vld [vmem:[#allocation5 + $0x98] sm:$0xff]
        %v767 = vld [vmem:[#allocation5 + $0xa0] sm:$0xff]
        %v768 = vld [vmem:[#allocation5 + $0xa8] sm:$0xff]
        %v769 = vld [vmem:[#allocation5 + $0xb0] sm:$0xff]
        %v770 = vld [vmem:[#allocation5 + $0xb8] sm:$0xff]
        %v771 = vld [vmem:[#allocation5 + $0xc0] sm:$0xff]
        %v772 = vld [vmem:[#allocation5 + $0xc8] sm:$0xff]
        %v773 = vld [vmem:[#allocation5 + $0xd0] sm:$0xff]
        %v774 = vld [vmem:[#allocation5 + $0xd8] sm:$0xff]
        %v775 = vld [vmem:[#allocation5 + $0xe0] sm:$0xff]
        %v776 = vld [vmem:[#allocation5 + $0xe8] sm:$0xff]
        %v777 = vld [vmem:[#allocation5 + $0xf0] sm:$0xff]
        %v778 = vld [vmem:[#allocation5 + $0xf8] sm:$0xff]
        %v779 = vld [vmem:[#allocation5 + $0x100] sm:$0xff]
        %v780 = vld [vmem:[#allocation5 + $0x108] sm:$0xff]
        %v781 = vld [vmem:[#allocation5 + $0x110] sm:$0xff]
        %v782 = vld [vmem:[#allocation5 + $0x118] sm:$0xff]
        %v783 = vld [vmem:[#allocation5 + $0x120] sm:$0xff]
        %v784 = vld [vmem:[#allocation5 + $0x128] sm:$0xff]
        %v785 = vld [vmem:[#allocation5 + $0x130] sm:$0xff]
        %v786 = vld [vmem:[#allocation5 + $0x138] sm:$0xff]
        %v787 = vld [vmem:[#allocation5 + $0x140] sm:$0xff]
        %v788 = vld [vmem:[#allocation5 + $0x148] sm:$0xff]
        %v789 = vld [vmem:[#allocation5 + $0x150] sm:$0xff]
        %v790 = vld [vmem:[#allocation5 + $0x158] sm:$0xff]
        %v791 = vld [vmem:[#allocation5 + $0x160] sm:$0xff]
        %v792 = vld [vmem:[#allocation5 + $0x168] sm:$0xff]
        %v793 = vld [vmem:[#allocation5 + $0x170] sm:$0xff]
        %v794 = vld [vmem:[#allocation5 + $0x178] sm:$0xff]
        %v795 = vld [vmem:[#allocation5 + $0x180] sm:$0xff]
        %v796 = vld [vmem:[#allocation5 + $0x188] sm:$0xff]
        %v797 = vld [vmem:[#allocation5 + $0x190] sm:$0xff]
        %v798 = vld [vmem:[#allocation5 + $0x198] sm:$0xff]
        %v799 = vld [vmem:[#allocation5 + $0x1a0] sm:$0xff]
        %v800 = vld [vmem:[#allocation5 + $0x1a8] sm:$0xff]
        %v801 = vld [vmem:[#allocation5 + $0x1b0] sm:$0xff]
        %v802 = vld [vmem:[#allocation5 + $0x1b8] sm:$0xff]
        %v803 = vld [vmem:[#allocation5 + $0x1c0] sm:$0xff]
        %v804 = vld [vmem:[#allocation5 + $0x1c8] sm:$0xff]
        %v805 = vld [vmem:[#allocation5 + $0x1d0] sm:$0xff]
        %v806 = vld [vmem:[#allocation5 + $0x1d8] sm:$0xff]
        %v807 = vld [vmem:[#allocation5 + $0x1e0] sm:$0xff]
        %v808 = vld [vmem:[#allocation5 + $0x1e8] sm:$0xff]
        %v809 = vld [vmem:[#allocation5 + $0x1f0] sm:$0xff]
        %v810 = vld [vmem:[#allocation5 + $0x1f8] sm:$0xff]
        %v811 = vld [vmem:[#allocation5 + $0x200] sm:$0xff]
        %v812 = vld [vmem:[#allocation5 + $0x208] sm:$0xff]
        %v813 = vld [vmem:[#allocation5 + $0x210] sm:$0xff]
        %v814 = vld [vmem:[#allocation5 + $0x218] sm:$0xff]
        %v815 = vld [vmem:[#allocation5 + $0x220] sm:$0xff]
        %v816 = vld [vmem:[#allocation5 + $0x228] sm:$0xff]
        %v817 = vld [vmem:[#allocation5 + $0x230] sm:$0xff]
        %v818 = vld [vmem:[#allocation5 + $0x238] sm:$0xff]
        %v819 = vld [vmem:[#allocation5 + $0x240] sm:$0xff]
        %v820 = vld [vmem:[#allocation5 + $0x248] sm:$0xff]
        %v821 = vld [vmem:[#allocation5 + $0x250] sm:$0xff]
        %v822 = vld [vmem:[#allocation5 + $0x258] sm:$0xff]
        %v823 = vld [vmem:[#allocation5 + $0x260] sm:$0xff]
        %v824 = vld [vmem:[#allocation5 + $0x268] sm:$0xff]
        %v825 = vld [vmem:[#allocation5 + $0x270] sm:$0xff]
        %v826 = vld [vmem:[#allocation5 + $0x278] sm:$0xff]
        %v827 = vld [vmem:[#allocation5 + $0x280] sm:$0xff]
        %v828 = vld [vmem:[#allocation5 + $0x288] sm:$0xff]
        %v829 = vld [vmem:[#allocation5 + $0x290] sm:$0xff]
        %v830 = vld [vmem:[#allocation5 + $0x298] sm:$0xff]
        %v831 = vld [vmem:[#allocation5 + $0x2a0] sm:$0xff]
        %v832 = vld [vmem:[#allocation5 + $0x2a8] sm:$0xff]
        %v833 = vld [vmem:[#allocation5 + $0x2b0] sm:$0xff]
        %v834 = vld [vmem:[#allocation5 + $0x2b8] sm:$0xff]
        %v835 = vld [vmem:[#allocation5 + $0x2c0] sm:$0xff]
        %v836 = vld [vmem:[#allocation5 + $0x2c8] sm:$0xff]
        %v837 = vld [vmem:[#allocation5 + $0x2d0] sm:$0xff]
        %v838 = vld [vmem:[#allocation5 + $0x2d8] sm:$0xff]
        %v839 = vld [vmem:[#allocation5 + $0x2e0] sm:$0xff]
        %v840 = vld [vmem:[#allocation5 + $0x2e8] sm:$0xff]
        %v841 = vld [vmem:[#allocation5 + $0x2f0] sm:$0xff]
        %v842 = vld [vmem:[#allocation5 + $0x2f8] sm:$0xff]
        %v843 = vld [vmem:[#allocation5 + $0x300] sm:$0xff]
        %v844 = vld [vmem:[#allocation5 + $0x308] sm:$0xff]
        %v845 = vld [vmem:[#allocation5 + $0x310] sm:$0xff]
        %v846 = vld [vmem:[#allocation5 + $0x318] sm:$0xff]
        %v847 = vld [vmem:[#allocation5 + $0x320] sm:$0xff]
        %v848 = vld [vmem:[#allocation5 + $0x328] sm:$0xff]
        %v849 = vld [vmem:[#allocation5 + $0x330] sm:$0xff]
        %v850 = vld [vmem:[#allocation5 + $0x338] sm:$0xff]
        %v851 = vld [vmem:[#allocation5 + $0x340] sm:$0xff]
        %v852 = vld [vmem:[#allocation5 + $0x348] sm:$0xff]
        %v853 = vld [vmem:[#allocation5 + $0x350] sm:$0xff]
        %v854 = vld [vmem:[#allocation5 + $0x358] sm:$0xff]
        %v855 = vld [vmem:[#allocation5 + $0x360] sm:$0xff]
        %v856 = vld [vmem:[#allocation5 + $0x368] sm:$0xff]
        %v857 = vld [vmem:[#allocation5 + $0x370] sm:$0xff]
        %v858 = vld [vmem:[#allocation5 + $0x378] sm:$0xff]
        %v859 = vld [vmem:[%s2] sm:$0x3]
        %v861 = vlaneseq
        %v862 = vshrl.u32 %v861, 7
        %v863 = vsub.s32 0, %v862
        %v864 = vrot.slane %v859, %v863
        %v865 = vlaneseq
        %v866 = vshrl.u32 %v865, 7
        %v867 = vsub.s32 1, %v866
        %v868 = vrot.slane %v859, %v867
        %v999 = vunpack.c.l.b16 %v619
        %v1000 = vunpack.c.h.b16 %v619
        %v1001 = vunpack.c.l.b16 %v620
        %v1002 = vunpack.c.h.b16 %v620
        %v1003 = vunpack.c.l.b16 %v621
        %v1004 = vunpack.c.h.b16 %v621
        %v1005 = vunpack.c.l.b16 %v622
        %v1006 = vunpack.c.l.b16 %v623
        %v1007 = vunpack.c.h.b16 %v623
        %v1008 = vunpack.c.l.b16 %v624
        %v1009 = vunpack.c.h.b16 %v624
        %v1010 = vunpack.c.l.b16 %v625
        %v1011 = vunpack.c.h.b16 %v625
        %v1012 = vunpack.c.l.b16 %v626
        %v1013 = vunpack.c.l.b16 %v627
        %v1014 = vunpack.c.h.b16 %v627
        %v1015 = vunpack.c.l.b16 %v628
        %v1016 = vunpack.c.h.b16 %v628
        %v1017 = vunpack.c.l.b16 %v629
        %v1018 = vunpack.c.h.b16 %v629
        %v1019 = vunpack.c.l.b16 %v630
        %v1020 = vunpack.c.l.b16 %v631
        %v1021 = vunpack.c.h.b16 %v631
        %v1022 = vunpack.c.l.b16 %v632
        %v1023 = vunpack.c.h.b16 %v632
        %v1024 = vunpack.c.l.b16 %v633
        %v1025 = vunpack.c.h.b16 %v633
        %v1026 = vunpack.c.l.b16 %v634
        %v1027 = vunpack.c.l.b16 %v635
        %v1028 = vunpack.c.h.b16 %v635
        %v1029 = vunpack.c.l.b16 %v636
        %v1030 = vunpack.c.h.b16 %v636
        %v1031 = vunpack.c.l.b16 %v637
        %v1032 = vunpack.c.h.b16 %v637
        %v1033 = vunpack.c.l.b16 %v638
        %v1034 = vunpack.c.l.b16 %v639
        %v1035 = vunpack.c.h.b16 %v639
        %v1036 = vunpack.c.l.b16 %v640
        %v1037 = vunpack.c.h.b16 %v640
        %v1038 = vunpack.c.l.b16 %v641
        %v1039 = vunpack.c.h.b16 %v641
        %v1040 = vunpack.c.l.b16 %v642
        %v1041 = vunpack.c.l.b16 %v643
        %v1042 = vunpack.c.h.b16 %v643
        %v1043 = vunpack.c.l.b16 %v644
        %v1044 = vunpack.c.h.b16 %v644
        %v1045 = vunpack.c.l.b16 %v645
        %v1046 = vunpack.c.h.b16 %v645
        %v1047 = vunpack.c.l.b16 %v646
        %v1048 = vunpack.c.l.b16 %v647
        %v1049 = vunpack.c.h.b16 %v647
        %v1050 = vunpack.c.l.b16 %v648
        %v1051 = vunpack.c.h.b16 %v648
        %v1052 = vunpack.c.l.b16 %v649
        %v1053 = vunpack.c.h.b16 %v649
        %v1054 = vunpack.c.l.b16 %v650
        %v1055 = vunpack.c.l.b16 %v651
        %v1056 = vunpack.c.h.b16 %v651
        %v1057 = vunpack.c.l.b16 %v652
        %v1058 = vunpack.c.h.b16 %v652
        %v1059 = vunpack.c.l.b16 %v653
        %v1060 = vunpack.c.h.b16 %v653
        %v1061 = vunpack.c.l.b16 %v654
        %v1062 = vunpack.c.l.b16 %v655
        %v1063 = vunpack.c.h.b16 %v655
        %v1064 = vunpack.c.l.b16 %v656
        %v1065 = vunpack.c.h.b16 %v656
        %v1066 = vunpack.c.l.b16 %v657
        %v1067 = vunpack.c.h.b16 %v657
        %v1068 = vunpack.c.l.b16 %v658
        %v1069 = vunpack.c.l.b16 %v659
        %v1070 = vunpack.c.h.b16 %v659
        %v1071 = vunpack.c.l.b16 %v660
        %v1072 = vunpack.c.h.b16 %v660
        %v1073 = vunpack.c.l.b16 %v661
        %v1074 = vunpack.c.h.b16 %v661
        %v1075 = vunpack.c.l.b16 %v662
        %v1076 = vunpack.c.l.b16 %v663
        %v1077 = vunpack.c.h.b16 %v663
        %v1078 = vunpack.c.l.b16 %v664
        %v1079 = vunpack.c.h.b16 %v664
        %v1080 = vunpack.c.l.b16 %v665
        %v1081 = vunpack.c.h.b16 %v665
        %v1082 = vunpack.c.l.b16 %v666
        %v1083 = vunpack.c.l.b16 %v667
        %v1084 = vunpack.c.h.b16 %v667
        %v1085 = vunpack.c.l.b16 %v668
        %v1086 = vunpack.c.h.b16 %v668
        %v1087 = vunpack.c.l.b16 %v669
        %v1088 = vunpack.c.h.b16 %v669
        %v1089 = vunpack.c.l.b16 %v670
        %v1090 = vunpack.c.l.b16 %v671
        %v1091 = vunpack.c.h.b16 %v671
        %v1092 = vunpack.c.l.b16 %v672
        %v1093 = vunpack.c.h.b16 %v672
        %v1094 = vunpack.c.l.b16 %v673
        %v1095 = vunpack.c.h.b16 %v673
        %v1096 = vunpack.c.l.b16 %v674
        %v1097 = vunpack.c.l.b16 %v675
        %v1098 = vunpack.c.h.b16 %v675
        %v1099 = vunpack.c.l.b16 %v676
        %v1100 = vunpack.c.h.b16 %v676
        %v1101 = vunpack.c.l.b16 %v677
        %v1102 = vunpack.c.h.b16 %v677
        %v1103 = vunpack.c.l.b16 %v678
        %v1104 = vunpack.c.l.b16 %v679
        %v1105 = vunpack.c.h.b16 %v679
        %v1106 = vunpack.c.l.b16 %v680
        %v1107 = vunpack.c.h.b16 %v680
        %v1108 = vunpack.c.l.b16 %v681
        %v1109 = vunpack.c.h.b16 %v681
        %v1110 = vunpack.c.l.b16 %v682
        %v1111 = vunpack.c.l.b16 %v683
        %v1112 = vunpack.c.h.b16 %v683
        %v1113 = vunpack.c.l.b16 %v684
        %v1114 = vunpack.c.h.b16 %v684
        %v1115 = vunpack.c.l.b16 %v685
        %v1116 = vunpack.c.h.b16 %v685
        %v1117 = vunpack.c.l.b16 %v686
        %v1118 = vunpack.c.l.b16 %v687
        %v1119 = vunpack.c.h.b16 %v687
        %v1120 = vunpack.c.l.b16 %v688
        %v1121 = vunpack.c.h.b16 %v688
        %v1122 = vunpack.c.l.b16 %v689
        %v1123 = vunpack.c.h.b16 %v689
        %v1124 = vunpack.c.l.b16 %v690
        %v1125 = vunpack.c.l.b16 %v691
        %v1126 = vunpack.c.h.b16 %v691
        %v1127 = vunpack.c.l.b16 %v692
        %v1128 = vunpack.c.h.b16 %v692
        %v1129 = vunpack.c.l.b16 %v693
        %v1130 = vunpack.c.h.b16 %v693
        %v1131 = vunpack.c.l.b16 %v694
        %v1132 = vunpack.c.l.b16 %v695
        %v1133 = vunpack.c.h.b16 %v695
        %v1134 = vunpack.c.l.b16 %v696
        %v1135 = vunpack.c.h.b16 %v696
        %v1136 = vunpack.c.l.b16 %v697
        %v1137 = vunpack.c.h.b16 %v697
        %v1138 = vunpack.c.l.b16 %v698
        %v1139 = vunpack.c.l.b16 %v699
        %v1140 = vunpack.c.h.b16 %v699
        %v1141 = vunpack.c.l.b16 %v700
        %v1142 = vunpack.c.h.b16 %v700
        %v1143 = vunpack.c.l.b16 %v701
        %v1144 = vunpack.c.h.b16 %v701
        %v1145 = vunpack.c.l.b16 %v702
        %v1146 = vunpack.c.l.b16 %v703
        %v1147 = vunpack.c.h.b16 %v703
        %v1148 = vunpack.c.l.b16 %v704
        %v1149 = vunpack.c.h.b16 %v704
        %v1150 = vunpack.c.l.b16 %v705
        %v1151 = vunpack.c.h.b16 %v705
        %v1152 = vunpack.c.l.b16 %v706
        %v1153 = vunpack.c.l.b16 %v707
        %v1154 = vunpack.c.h.b16 %v707
        %v1155 = vunpack.c.l.b16 %v708
        %v1156 = vunpack.c.h.b16 %v708
        %v1157 = vunpack.c.l.b16 %v709
        %v1158 = vunpack.c.h.b16 %v709
        %v1159 = vunpack.c.l.b16 %v710
        %v1160 = vunpack.c.l.b16 %v711
        %v1161 = vunpack.c.h.b16 %v711
        %v1162 = vunpack.c.l.b16 %v712
        %v1163 = vunpack.c.h.b16 %v712
        %v1164 = vunpack.c.l.b16 %v713
        %v1165 = vunpack.c.h.b16 %v713
        %v1166 = vunpack.c.l.b16 %v714
        %v1167 = vunpack.c.l.b16 %v715
        %v1168 = vunpack.c.h.b16 %v715
        %v1169 = vunpack.c.l.b16 %v716
        %v1170 = vunpack.c.h.b16 %v716
        %v1171 = vunpack.c.l.b16 %v717
        %v1172 = vunpack.c.h.b16 %v717
        %v1173 = vunpack.c.l.b16 %v718
        %v1174 = vunpack.c.l.b16 %v719
        %v1175 = vunpack.c.h.b16 %v719
        %v1176 = vunpack.c.l.b16 %v720
        %v1177 = vunpack.c.h.b16 %v720
        %v1178 = vunpack.c.l.b16 %v721
        %v1179 = vunpack.c.h.b16 %v721
        %v1180 = vunpack.c.l.b16 %v722
        %v1181 = vunpack.c.l.b16 %v723
        %v1182 = vunpack.c.h.b16 %v723
        %v1183 = vunpack.c.l.b16 %v724
        %v1184 = vunpack.c.h.b16 %v724
        %v1185 = vunpack.c.l.b16 %v725
        %v1186 = vunpack.c.h.b16 %v725
        %v1187 = vunpack.c.l.b16 %v726
        %v1188 = vunpack.c.l.b16 %v727
        %v1189 = vunpack.c.h.b16 %v727
        %v1190 = vunpack.c.l.b16 %v728
        %v1191 = vunpack.c.h.b16 %v728
        %v1192 = vunpack.c.l.b16 %v729
        %v1193 = vunpack.c.h.b16 %v729
        %v1194 = vunpack.c.l.b16 %v730
        %v1195 = vunpack.c.l.b16 %v731
        %v1196 = vunpack.c.h.b16 %v731
        %v1197 = vunpack.c.l.b16 %v732
        %v1198 = vunpack.c.h.b16 %v732
        %v1199 = vunpack.c.l.b16 %v733
        %v1200 = vunpack.c.h.b16 %v733
        %v1201 = vunpack.c.l.b16 %v734
        %v1202 = vunpack.c.l.b16 %v735
        %v1203 = vunpack.c.h.b16 %v735
        %v1204 = vunpack.c.l.b16 %v736
        %v1205 = vunpack.c.h.b16 %v736
        %v1206 = vunpack.c.l.b16 %v737
        %v1207 = vunpack.c.h.b16 %v737
        %v1208 = vunpack.c.l.b16 %v738
        %v1209 = vunpack.c.l.b16 %v739
        %v1210 = vunpack.c.h.b16 %v739
        %v1211 = vunpack.c.l.b16 %v740
        %v1212 = vunpack.c.h.b16 %v740
        %v1213 = vunpack.c.l.b16 %v741
        %v1214 = vunpack.c.h.b16 %v741
        %v1215 = vunpack.c.l.b16 %v742
        %v1216 = vunpack.c.l.b16 %v743
        %v1217 = vunpack.c.h.b16 %v743
        %v1218 = vunpack.c.l.b16 %v744
        %v1219 = vunpack.c.h.b16 %v744
        %v1220 = vunpack.c.l.b16 %v745
        %v1221 = vunpack.c.h.b16 %v745
        %v1222 = vunpack.c.l.b16 %v746
        %v1223 = vpack.c.b16 %v1006, %v999
        %v1224 = vpack.c.b16 %v1007, %v1000
        %v1225 = vpack.c.b16 %v1008, %v1001
        %v1226 = vpack.c.b16 %v1009, %v1002
        %v1227 = vpack.c.b16 %v1010, %v1003
        %v1228 = vpack.c.b16 %v1011, %v1004
        %v1229 = vpack.c.b16 %v1012, %v1005
        %v1230 = vpack.c.b16 %v1020, %v1013
        %v1231 = vpack.c.b16 %v1021, %v1014
        %v1232 = vpack.c.b16 %v1022, %v1015
        %v1233 = vpack.c.b16 %v1023, %v1016
        %v1234 = vpack.c.b16 %v1024, %v1017
        %v1235 = vpack.c.b16 %v1025, %v1018
        %v1236 = vpack.c.b16 %v1026, %v1019
        %v1237 = vpack.c.b16 %v1034, %v1027
        %v1238 = vpack.c.b16 %v1035, %v1028
        %v1239 = vpack.c.b16 %v1036, %v1029
        %v1240 = vpack.c.b16 %v1037, %v1030
        %v1241 = vpack.c.b16 %v1038, %v1031
        %v1242 = vpack.c.b16 %v1039, %v1032
        %v1243 = vpack.c.b16 %v1040, %v1033
        %v1244 = vpack.c.b16 %v1048, %v1041
        %v1245 = vpack.c.b16 %v1049, %v1042
        %v1246 = vpack.c.b16 %v1050, %v1043
        %v1247 = vpack.c.b16 %v1051, %v1044
        %v1248 = vpack.c.b16 %v1052, %v1045
        %v1249 = vpack.c.b16 %v1053, %v1046
        %v1250 = vpack.c.b16 %v1054, %v1047
        %v1251 = vpack.c.b16 %v1062, %v1055
        %v1252 = vpack.c.b16 %v1063, %v1056
        %v1253 = vpack.c.b16 %v1064, %v1057
        %v1254 = vpack.c.b16 %v1065, %v1058
        %v1255 = vpack.c.b16 %v1066, %v1059
        %v1256 = vpack.c.b16 %v1067, %v1060
        %v1257 = vpack.c.b16 %v1068, %v1061
        %v1258 = vpack.c.b16 %v1076, %v1069
        %v1259 = vpack.c.b16 %v1077, %v1070
        %v1260 = vpack.c.b16 %v1078, %v1071
        %v1261 = vpack.c.b16 %v1079, %v1072
        %v1262 = vpack.c.b16 %v1080, %v1073
        %v1263 = vpack.c.b16 %v1081, %v1074
        %v1264 = vpack.c.b16 %v1082, %v1075
        %v1265 = vpack.c.b16 %v1090, %v1083
        %v1266 = vpack.c.b16 %v1091, %v1084
        %v1267 = vpack.c.b16 %v1092, %v1085
        %v1268 = vpack.c.b16 %v1093, %v1086
        %v1269 = vpack.c.b16 %v1094, %v1087
        %v1270 = vpack.c.b16 %v1095, %v1088
        %v1271 = vpack.c.b16 %v1096, %v1089
        %v1272 = vpack.c.b16 %v1104, %v1097
        %v1273 = vpack.c.b16 %v1105, %v1098
        %v1274 = vpack.c.b16 %v1106, %v1099
        %v1275 = vpack.c.b16 %v1107, %v1100
        %v1276 = vpack.c.b16 %v1108, %v1101
        %v1277 = vpack.c.b16 %v1109, %v1102
        %v1278 = vpack.c.b16 %v1110, %v1103
        %v1279 = vpack.c.b16 %v1118, %v1111
        %v1280 = vpack.c.b16 %v1119, %v1112
        %v1281 = vpack.c.b16 %v1120, %v1113
        %v1282 = vpack.c.b16 %v1121, %v1114
        %v1283 = vpack.c.b16 %v1122, %v1115
        %v1284 = vpack.c.b16 %v1123, %v1116
        %v1285 = vpack.c.b16 %v1124, %v1117
        %v1286 = vpack.c.b16 %v1132, %v1125
        %v1287 = vpack.c.b16 %v1133, %v1126
        %v1288 = vpack.c.b16 %v1134, %v1127
        %v1289 = vpack.c.b16 %v1135, %v1128
        %v1290 = vpack.c.b16 %v1136, %v1129
        %v1291 = vpack.c.b16 %v1137, %v1130
        %v1292 = vpack.c.b16 %v1138, %v1131
        %v1293 = vpack.c.b16 %v1146, %v1139
        %v1294 = vpack.c.b16 %v1147, %v1140
        %v1295 = vpack.c.b16 %v1148, %v1141
        %v1296 = vpack.c.b16 %v1149, %v1142
        %v1297 = vpack.c.b16 %v1150, %v1143
        %v1298 = vpack.c.b16 %v1151, %v1144
        %v1299 = vpack.c.b16 %v1152, %v1145
        %v1300 = vpack.c.b16 %v1160, %v1153
        %v1301 = vpack.c.b16 %v1161, %v1154
        %v1302 = vpack.c.b16 %v1162, %v1155
        %v1303 = vpack.c.b16 %v1163, %v1156
        %v1304 = vpack.c.b16 %v1164, %v1157
        %v1305 = vpack.c.b16 %v1165, %v1158
        %v1306 = vpack.c.b16 %v1166, %v1159
        %v1307 = vpack.c.b16 %v1174, %v1167
        %v1308 = vpack.c.b16 %v1175, %v1168
        %v1309 = vpack.c.b16 %v1176, %v1169
        %v1310 = vpack.c.b16 %v1177, %v1170
        %v1311 = vpack.c.b16 %v1178, %v1171
        %v1312 = vpack.c.b16 %v1179, %v1172
        %v1313 = vpack.c.b16 %v1180, %v1173
        %v1314 = vpack.c.b16 %v1188, %v1181
        %v1315 = vpack.c.b16 %v1189, %v1182
        %v1316 = vpack.c.b16 %v1190, %v1183
        %v1317 = vpack.c.b16 %v1191, %v1184
        %v1318 = vpack.c.b16 %v1192, %v1185
        %v1319 = vpack.c.b16 %v1193, %v1186
        %v1320 = vpack.c.b16 %v1194, %v1187
        %v1321 = vpack.c.b16 %v1202, %v1195
        %v1322 = vpack.c.b16 %v1203, %v1196
        %v1323 = vpack.c.b16 %v1204, %v1197
        %v1324 = vpack.c.b16 %v1205, %v1198
        %v1325 = vpack.c.b16 %v1206, %v1199
        %v1326 = vpack.c.b16 %v1207, %v1200
        %v1327 = vpack.c.b16 %v1208, %v1201
        %v1328 = vpack.c.b16 %v1216, %v1209
        %v1329 = vpack.c.b16 %v1217, %v1210
        %v1330 = vpack.c.b16 %v1218, %v1211
        %v1331 = vpack.c.b16 %v1219, %v1212
        %v1332 = vpack.c.b16 %v1220, %v1213
        %v1333 = vpack.c.b16 %v1221, %v1214
        %v1334 = vpack.c.b16 %v1222, %v1215
        %v1559 = vunpack.c.l.b16 %v747
        %v1560 = vunpack.c.h.b16 %v747
        %v1561 = vunpack.c.l.b16 %v748
        %v1562 = vunpack.c.h.b16 %v748
        %v1563 = vunpack.c.l.b16 %v749
        %v1564 = vunpack.c.h.b16 %v749
        %v1565 = vunpack.c.l.b16 %v750
        %v1566 = vunpack.c.h.b16 %v750
        %v1567 = vunpack.c.l.b16 %v751
        %v1568 = vunpack.c.h.b16 %v751
        %v1569 = vunpack.c.l.b16 %v752
        %v1570 = vunpack.c.h.b16 %v752
        %v1571 = vunpack.c.l.b16 %v753
        %v1572 = vunpack.c.h.b16 %v753
        %v1573 = vunpack.c.l.b16 %v754
        %v1574 = vunpack.c.h.b16 %v754
        %v1575 = vunpack.c.l.b16 %v755
        %v1576 = vunpack.c.h.b16 %v755
        %v1577 = vunpack.c.l.b16 %v756
        %v1578 = vunpack.c.h.b16 %v756
        %v1579 = vunpack.c.l.b16 %v757
        %v1580 = vunpack.c.h.b16 %v757
        %v1581 = vunpack.c.l.b16 %v758
        %v1582 = vunpack.c.h.b16 %v758
        %v1583 = vunpack.c.l.b16 %v759
        %v1584 = vunpack.c.h.b16 %v759
        %v1585 = vunpack.c.l.b16 %v760
        %v1586 = vunpack.c.h.b16 %v760
        %v1587 = vunpack.c.l.b16 %v761
        %v1588 = vunpack.c.h.b16 %v761
        %v1589 = vunpack.c.l.b16 %v762
        %v1590 = vunpack.c.h.b16 %v762
        %v1591 = vunpack.c.l.b16 %v763
        %v1592 = vunpack.c.h.b16 %v763
        %v1593 = vunpack.c.l.b16 %v764
        %v1594 = vunpack.c.h.b16 %v764
        %v1595 = vunpack.c.l.b16 %v765
        %v1596 = vunpack.c.h.b16 %v765
        %v1597 = vunpack.c.l.b16 %v766
        %v1598 = vunpack.c.h.b16 %v766
        %v1599 = vunpack.c.l.b16 %v767
        %v1600 = vunpack.c.h.b16 %v767
        %v1601 = vunpack.c.l.b16 %v768
        %v1602 = vunpack.c.h.b16 %v768
        %v1603 = vunpack.c.l.b16 %v769
        %v1604 = vunpack.c.h.b16 %v769
        %v1605 = vunpack.c.l.b16 %v770
        %v1606 = vunpack.c.h.b16 %v770
        %v1607 = vunpack.c.l.b16 %v771
        %v1608 = vunpack.c.h.b16 %v771
        %v1609 = vunpack.c.l.b16 %v772
        %v1610 = vunpack.c.h.b16 %v772
        %v1611 = vunpack.c.l.b16 %v773
        %v1612 = vunpack.c.h.b16 %v773
        %v1613 = vunpack.c.l.b16 %v774
        %v1614 = vunpack.c.h.b16 %v774
        %v1615 = vunpack.c.l.b16 %v775
        %v1616 = vunpack.c.h.b16 %v775
        %v1617 = vunpack.c.l.b16 %v776
        %v1618 = vunpack.c.h.b16 %v776
        %v1619 = vunpack.c.l.b16 %v777
        %v1620 = vunpack.c.h.b16 %v777
        %v1621 = vunpack.c.l.b16 %v778
        %v1622 = vunpack.c.h.b16 %v778
        %v1623 = vunpack.c.l.b16 %v779
        %v1624 = vunpack.c.h.b16 %v779
        %v1625 = vunpack.c.l.b16 %v780
        %v1626 = vunpack.c.h.b16 %v780
        %v1627 = vunpack.c.l.b16 %v781
        %v1628 = vunpack.c.h.b16 %v781
        %v1629 = vunpack.c.l.b16 %v782
        %v1630 = vunpack.c.h.b16 %v782
        %v1631 = vunpack.c.l.b16 %v783
        %v1632 = vunpack.c.h.b16 %v783
        %v1633 = vunpack.c.l.b16 %v784
        %v1634 = vunpack.c.h.b16 %v784
        %v1635 = vunpack.c.l.b16 %v785
        %v1636 = vunpack.c.h.b16 %v785
        %v1637 = vunpack.c.l.b16 %v786
        %v1638 = vunpack.c.h.b16 %v786
        %v1639 = vunpack.c.l.b16 %v787
        %v1640 = vunpack.c.h.b16 %v787
        %v1641 = vunpack.c.l.b16 %v788
        %v1642 = vunpack.c.h.b16 %v788
        %v1643 = vunpack.c.l.b16 %v789
        %v1644 = vunpack.c.h.b16 %v789
        %v1645 = vunpack.c.l.b16 %v790
        %v1646 = vunpack.c.h.b16 %v790
        %v1647 = vunpack.c.l.b16 %v791
        %v1648 = vunpack.c.h.b16 %v791
        %v1649 = vunpack.c.l.b16 %v792
        %v1650 = vunpack.c.h.b16 %v792
        %v1651 = vunpack.c.l.b16 %v793
        %v1652 = vunpack.c.h.b16 %v793
        %v1653 = vunpack.c.l.b16 %v794
        %v1654 = vunpack.c.h.b16 %v794
        %v1655 = vunpack.c.l.b16 %v795
        %v1656 = vunpack.c.h.b16 %v795
        %v1657 = vunpack.c.l.b16 %v796
        %v1658 = vunpack.c.h.b16 %v796
        %v1659 = vunpack.c.l.b16 %v797
        %v1660 = vunpack.c.h.b16 %v797
        %v1661 = vunpack.c.l.b16 %v798
        %v1662 = vunpack.c.h.b16 %v798
        %v1663 = vunpack.c.l.b16 %v799
        %v1664 = vunpack.c.h.b16 %v799
        %v1665 = vunpack.c.l.b16 %v800
        %v1666 = vunpack.c.h.b16 %v800
        %v1667 = vunpack.c.l.b16 %v801
        %v1668 = vunpack.c.h.b16 %v801
        %v1669 = vunpack.c.l.b16 %v802
        %v1670 = vunpack.c.h.b16 %v802
        %v1671 = vunpack.c.l.b16 %v803
        %v1672 = vunpack.c.h.b16 %v803
        %v1673 = vunpack.c.l.b16 %v804
        %v1674 = vunpack.c.h.b16 %v804
        %v1675 = vunpack.c.l.b16 %v805
        %v1676 = vunpack.c.h.b16 %v805
        %v1677 = vunpack.c.l.b16 %v806
        %v1678 = vunpack.c.h.b16 %v806
        %v1679 = vunpack.c.l.b16 %v807
        %v1680 = vunpack.c.h.b16 %v807
        %v1681 = vunpack.c.l.b16 %v808
        %v1682 = vunpack.c.h.b16 %v808
        %v1683 = vunpack.c.l.b16 %v809
        %v1684 = vunpack.c.h.b16 %v809
        %v1685 = vunpack.c.l.b16 %v810
        %v1686 = vunpack.c.h.b16 %v810
        %v1687 = vunpack.c.l.b16 %v811
        %v1688 = vunpack.c.h.b16 %v811
        %v1689 = vunpack.c.l.b16 %v812
        %v1690 = vunpack.c.h.b16 %v812
        %v1691 = vunpack.c.l.b16 %v813
        %v1692 = vunpack.c.h.b16 %v813
        %v1693 = vunpack.c.l.b16 %v814
        %v1694 = vunpack.c.h.b16 %v814
        %v1695 = vunpack.c.l.b16 %v815
        %v1696 = vunpack.c.h.b16 %v815
        %v1697 = vunpack.c.l.b16 %v816
        %v1698 = vunpack.c.h.b16 %v816
        %v1699 = vunpack.c.l.b16 %v817
        %v1700 = vunpack.c.h.b16 %v817
        %v1701 = vunpack.c.l.b16 %v818
        %v1702 = vunpack.c.h.b16 %v818
        %v1703 = vunpack.c.l.b16 %v819
        %v1704 = vunpack.c.h.b16 %v819
        %v1705 = vunpack.c.l.b16 %v820
        %v1706 = vunpack.c.h.b16 %v820
        %v1707 = vunpack.c.l.b16 %v821
        %v1708 = vunpack.c.h.b16 %v821
        %v1709 = vunpack.c.l.b16 %v822
        %v1710 = vunpack.c.h.b16 %v822
        %v1711 = vunpack.c.l.b16 %v823
        %v1712 = vunpack.c.h.b16 %v823
        %v1713 = vunpack.c.l.b16 %v824
        %v1714 = vunpack.c.h.b16 %v824
        %v1715 = vunpack.c.l.b16 %v825
        %v1716 = vunpack.c.h.b16 %v825
        %v1717 = vunpack.c.l.b16 %v826
        %v1718 = vunpack.c.h.b16 %v826
        %v1719 = vunpack.c.l.b16 %v827
        %v1720 = vunpack.c.h.b16 %v827
        %v1721 = vunpack.c.l.b16 %v828
        %v1722 = vunpack.c.h.b16 %v828
        %v1723 = vunpack.c.l.b16 %v829
        %v1724 = vunpack.c.h.b16 %v829
        %v1725 = vunpack.c.l.b16 %v830
        %v1726 = vunpack.c.h.b16 %v830
        %v1727 = vunpack.c.l.b16 %v831
        %v1728 = vunpack.c.h.b16 %v831
        %v1729 = vunpack.c.l.b16 %v832
        %v1730 = vunpack.c.h.b16 %v832
        %v1731 = vunpack.c.l.b16 %v833
        %v1732 = vunpack.c.h.b16 %v833
        %v1733 = vunpack.c.l.b16 %v834
        %v1734 = vunpack.c.h.b16 %v834
        %v1735 = vunpack.c.l.b16 %v835
        %v1736 = vunpack.c.h.b16 %v835
        %v1737 = vunpack.c.l.b16 %v836
        %v1738 = vunpack.c.h.b16 %v836
        %v1739 = vunpack.c.l.b16 %v837
        %v1740 = vunpack.c.h.b16 %v837
        %v1741 = vunpack.c.l.b16 %v838
        %v1742 = vunpack.c.h.b16 %v838
        %v1743 = vunpack.c.l.b16 %v839
        %v1744 = vunpack.c.h.b16 %v839
        %v1745 = vunpack.c.l.b16 %v840
        %v1746 = vunpack.c.h.b16 %v840
        %v1747 = vunpack.c.l.b16 %v841
        %v1748 = vunpack.c.h.b16 %v841
        %v1749 = vunpack.c.l.b16 %v842
        %v1750 = vunpack.c.h.b16 %v842
        %v1751 = vunpack.c.l.b16 %v843
        %v1752 = vunpack.c.h.b16 %v843
        %v1753 = vunpack.c.l.b16 %v844
        %v1754 = vunpack.c.h.b16 %v844
        %v1755 = vunpack.c.l.b16 %v845
        %v1756 = vunpack.c.h.b16 %v845
        %v1757 = vunpack.c.l.b16 %v846
        %v1758 = vunpack.c.h.b16 %v846
        %v1759 = vunpack.c.l.b16 %v847
        %v1760 = vunpack.c.h.b16 %v847
        %v1761 = vunpack.c.l.b16 %v848
        %v1762 = vunpack.c.h.b16 %v848
        %v1763 = vunpack.c.l.b16 %v849
        %v1764 = vunpack.c.h.b16 %v849
        %v1765 = vunpack.c.l.b16 %v850
        %v1766 = vunpack.c.h.b16 %v850
        %v1767 = vunpack.c.l.b16 %v851
        %v1768 = vunpack.c.h.b16 %v851
        %v1769 = vunpack.c.l.b16 %v852
        %v1770 = vunpack.c.h.b16 %v852
        %v1771 = vunpack.c.l.b16 %v853
        %v1772 = vunpack.c.h.b16 %v853
        %v1773 = vunpack.c.l.b16 %v854
        %v1774 = vunpack.c.h.b16 %v854
        %v1775 = vunpack.c.l.b16 %v855
        %v1776 = vunpack.c.h.b16 %v855
        %v1777 = vunpack.c.l.b16 %v856
        %v1778 = vunpack.c.h.b16 %v856
        %v1779 = vunpack.c.l.b16 %v857
        %v1780 = vunpack.c.h.b16 %v857
        %v1781 = vunpack.c.l.b16 %v858
        %v1782 = vunpack.c.h.b16 %v858
        %v1783 = vpack.c.b16 %v1561, %v1559
        %v1784 = vpack.c.b16 %v1562, %v1560
        %v1785 = vpack.c.b16 %v1565, %v1563
        %v1786 = vpack.c.b16 %v1566, %v1564
        %v1787 = vpack.c.b16 %v1569, %v1567
        %v1788 = vpack.c.b16 %v1570, %v1568
        %v1789 = vpack.c.b16 %v1573, %v1571
        %v1790 = vpack.c.b16 %v1574, %v1572
        %v1791 = vpack.c.b16 %v1577, %v1575
        %v1792 = vpack.c.b16 %v1578, %v1576
        %v1793 = vpack.c.b16 %v1581, %v1579
        %v1794 = vpack.c.b16 %v1582, %v1580
        %v1795 = vpack.c.b16 %v1585, %v1583
        %v1796 = vpack.c.b16 %v1586, %v1584
        %v1797 = vpack.c.b16 %v1589, %v1587
        %v1798 = vpack.c.b16 %v1590, %v1588
        %v1799 = vpack.c.b16 %v1593, %v1591
        %v1800 = vpack.c.b16 %v1594, %v1592
        %v1801 = vpack.c.b16 %v1597, %v1595
        %v1802 = vpack.c.b16 %v1598, %v1596
        %v1803 = vpack.c.b16 %v1601, %v1599
        %v1804 = vpack.c.b16 %v1602, %v1600
        %v1805 = vpack.c.b16 %v1605, %v1603
        %v1806 = vpack.c.b16 %v1606, %v1604
        %v1807 = vpack.c.b16 %v1609, %v1607
        %v1808 = vpack.c.b16 %v1610, %v1608
        %v1809 = vpack.c.b16 %v1613, %v1611
        %v1810 = vpack.c.b16 %v1614, %v1612
        %v1811 = vpack.c.b16 %v1617, %v1615
        %v1812 = vpack.c.b16 %v1618, %v1616
        %v1813 = vpack.c.b16 %v1621, %v1619
        %v1814 = vpack.c.b16 %v1622, %v1620
        %v1815 = vpack.c.b16 %v1625, %v1623
        %v1816 = vpack.c.b16 %v1626, %v1624
        %v1817 = vpack.c.b16 %v1629, %v1627
        %v1818 = vpack.c.b16 %v1630, %v1628
        %v1819 = vpack.c.b16 %v1633, %v1631
        %v1820 = vpack.c.b16 %v1634, %v1632
        %v1821 = vpack.c.b16 %v1637, %v1635
        %v1822 = vpack.c.b16 %v1638, %v1636
        %v1823 = vpack.c.b16 %v1641, %v1639
        %v1824 = vpack.c.b16 %v1642, %v1640
        %v1825 = vpack.c.b16 %v1645, %v1643
        %v1826 = vpack.c.b16 %v1646, %v1644
        %v1827 = vpack.c.b16 %v1649, %v1647
        %v1828 = vpack.c.b16 %v1650, %v1648
        %v1829 = vpack.c.b16 %v1653, %v1651
        %v1830 = vpack.c.b16 %v1654, %v1652
        %v1831 = vpack.c.b16 %v1657, %v1655
        %v1832 = vpack.c.b16 %v1658, %v1656
        %v1833 = vpack.c.b16 %v1661, %v1659
        %v1834 = vpack.c.b16 %v1662, %v1660
        %v1835 = vpack.c.b16 %v1665, %v1663
        %v1836 = vpack.c.b16 %v1666, %v1664
        %v1837 = vpack.c.b16 %v1669, %v1667
        %v1838 = vpack.c.b16 %v1670, %v1668
        %v1839 = vpack.c.b16 %v1673, %v1671
        %v1840 = vpack.c.b16 %v1674, %v1672
        %v1841 = vpack.c.b16 %v1677, %v1675
        %v1842 = vpack.c.b16 %v1678, %v1676
        %v1843 = vpack.c.b16 %v1681, %v1679
        %v1844 = vpack.c.b16 %v1682, %v1680
        %v1845 = vpack.c.b16 %v1685, %v1683
        %v1846 = vpack.c.b16 %v1686, %v1684
        %v1847 = vpack.c.b16 %v1689, %v1687
        %v1848 = vpack.c.b16 %v1690, %v1688
        %v1849 = vpack.c.b16 %v1693, %v1691
        %v1850 = vpack.c.b16 %v1694, %v1692
        %v1851 = vpack.c.b16 %v1697, %v1695
        %v1852 = vpack.c.b16 %v1698, %v1696
        %v1853 = vpack.c.b16 %v1701, %v1699
        %v1854 = vpack.c.b16 %v1702, %v1700
        %v1855 = vpack.c.b16 %v1705, %v1703
        %v1856 = vpack.c.b16 %v1706, %v1704
        %v1857 = vpack.c.b16 %v1709, %v1707
        %v1858 = vpack.c.b16 %v1710, %v1708
        %v1859 = vpack.c.b16 %v1713, %v1711
        %v1860 = vpack.c.b16 %v1714, %v1712
        %v1861 = vpack.c.b16 %v1717, %v1715
        %v1862 = vpack.c.b16 %v1718, %v1716
        %v1863 = vpack.c.b16 %v1721, %v1719
        %v1864 = vpack.c.b16 %v1722, %v1720
        %v1865 = vpack.c.b16 %v1725, %v1723
        %v1866 = vpack.c.b16 %v1726, %v1724
        %v1867 = vpack.c.b16 %v1729, %v1727
        %v1868 = vpack.c.b16 %v1730, %v1728
        %v1869 = vpack.c.b16 %v1733, %v1731
        %v1870 = vpack.c.b16 %v1734, %v1732
        %v1871 = vpack.c.b16 %v1737, %v1735
        %v1872 = vpack.c.b16 %v1738, %v1736
        %v1873 = vpack.c.b16 %v1741, %v1739
        %v1874 = vpack.c.b16 %v1742, %v1740
        %v1875 = vpack.c.b16 %v1745, %v1743
        %v1876 = vpack.c.b16 %v1746, %v1744
        %v1877 = vpack.c.b16 %v1749, %v1747
        %v1878 = vpack.c.b16 %v1750, %v1748
        %v1879 = vpack.c.b16 %v1753, %v1751
        %v1880 = vpack.c.b16 %v1754, %v1752
        %v1881 = vpack.c.b16 %v1757, %v1755
        %v1882 = vpack.c.b16 %v1758, %v1756
        %v1883 = vpack.c.b16 %v1761, %v1759
        %v1884 = vpack.c.b16 %v1762, %v1760
        %v1885 = vpack.c.b16 %v1765, %v1763
        %v1886 = vpack.c.b16 %v1766, %v1764
        %v1887 = vpack.c.b16 %v1769, %v1767
        %v1888 = vpack.c.b16 %v1770, %v1768
        %v1889 = vpack.c.b16 %v1773, %v1771
        %v1890 = vpack.c.b16 %v1774, %v1772
        %v1891 = vpack.c.b16 %v1777, %v1775
        %v1892 = vpack.c.b16 %v1778, %v1776
        %v1893 = vpack.c.b16 %v1781, %v1779
        %v1894 = vpack.c.b16 %v1782, %v1780
        %2007 = vmatprep.subr.bf16.mxu0 %v1784
        %2008 = vmatpush1.bf16.msra.mxu0 %v1783
        %2009 = vmatprep.subr.bf16.mxu0 %v1786
        %2010 = vmatpush1.bf16.msra.mxu0 %v1785
        %2011 = vmatprep.subr.bf16.mxu0 %v1788
        %2012 = vmatpush1.bf16.msra.mxu0 %v1787
        %2013 = vmatprep.subr.bf16.mxu0 %v1790
        %2014 = vmatpush1.bf16.msra.mxu0 %v1789
        %2015 = vmatprep.subr.bf16.mxu0 %v1792
        %2016 = vmatpush1.bf16.msra.mxu0 %v1791
        %2017 = vmatprep.subr.bf16.mxu0 %v1794
        %2018 = vmatpush1.bf16.msra.mxu0 %v1793
        %2019 = vmatprep.subr.bf16.mxu0 %v1796
        %2020 = vmatpush1.bf16.msra.mxu0 %v1795
        %2021 = vmatprep.subr.bf16.mxu0 %v1798
        %2022 = vmatpush1.bf16.msra.mxu0 %v1797
        %2023 = vmatprep.subr.bf16.mxu0 %v1800
        %2024 = vmatpush1.bf16.msra.mxu0 %v1799
        %2025 = vmatprep.subr.bf16.mxu0 %v1802
        %2026 = vmatpush1.bf16.msra.mxu0 %v1801
        %2027 = vmatprep.subr.bf16.mxu0 %v1804
        %2028 = vmatpush1.bf16.msra.mxu0 %v1803
        %2029 = vmatprep.subr.bf16.mxu0 %v1806
        %2030 = vmatpush1.bf16.msra.mxu0 %v1805
        %2031 = vmatprep.subr.bf16.mxu0 %v1808
        %2032 = vmatpush1.bf16.msra.mxu0 %v1807
        %2033 = vmatprep.subr.bf16.mxu0 %v1810
        %2034 = vmatpush1.bf16.msra.mxu0 %v1809
        %2035 = vmatprep.subr.bf16.mxu0 %v1812
        %2036 = vmatpush1.bf16.msra.mxu0 %v1811
        %2037 = vmatprep.subr.bf16.mxu0 %v1814
        %2038 = vmatpush1.bf16.msra.mxu0 %v1813
        %2039 = vmatprep.mubr.bf16.mxu0 %v1224
        %2040 = vmatmul.mubr.bf16.gmra.mrb[0].mxu0 %v1223
        %v2041 = vpop.f32.mrb[0].mxu0
        %v2042 = vadd.f32 %v864, %v2041
        %v2043 = vpop.f32.mrb[0].mxu0
        %v2044 = vadd.f32 %v868, %v2043
        %v2045 = vpop.f32.mrb[0].mxu0
        %v2046 = vadd.f32 %v864, %v2045
        %v2047 = vpop.f32.mrb[0].mxu0
        %v2048 = vadd.f32 %v868, %v2047
        %2049 = vmatprep.mubr.bf16.mxu0 %v1231
        %2050 = vmatmul.mubr.bf16.gmra.mrb[0].mxu0 %v1230
        %v2051 = vpop.f32.mrb[0].mxu0
        %v2052 = vadd.f32 %v864, %v2051
        %v2053 = vpop.f32.mrb[0].mxu0
        %v2054 = vadd.f32 %v868, %v2053
        %v2055 = vpop.f32.mrb[0].mxu0
        %v2056 = vadd.f32 %v864, %v2055
        %v2057 = vpop.f32.mrb[0].mxu0
        %v2058 = vadd.f32 %v868, %v2057
        %2059 = vmatprep.mubr.bf16.mxu0 %v1238
        %2060 = vmatmul.mubr.bf16.gmra.mrb[0].mxu0 %v1237
        %v2061 = vpop.f32.mrb[0].mxu0
        %v2062 = vadd.f32 %v864, %v2061
        %v2063 = vpop.f32.mrb[0].mxu0
        %v2064 = vadd.f32 %v868, %v2063
        %v2065 = vpop.f32.mrb[0].mxu0
        %v2066 = vadd.f32 %v864, %v2065
        %v2067 = vpop.f32.mrb[0].mxu0
        %v2068 = vadd.f32 %v868, %v2067
        %2069 = vmatprep.mubr.bf16.mxu0 %v1245
        %2070 = vmatmul.mubr.bf16.gmra.mrb[0].mxu0 %v1244
        %v2071 = vpop.f32.mrb[0].mxu0
        %v2072 = vadd.f32 %v864, %v2071
        %v2073 = vpop.f32.mrb[0].mxu0
        %v2074 = vadd.f32 %v868, %v2073
        %v2075 = vpop.f32.mrb[0].mxu0
        %v2076 = vadd.f32 %v864, %v2075
        %v2077 = vpop.f32.mrb[0].mxu0
        %v2078 = vadd.f32 %v868, %v2077
        %2079 = vmatprep.mubr.bf16.mxu0 %v1252
        %2080 = vmatmul.mubr.bf16.gmra.mrb[0].mxu0 %v1251
        %v2081 = vpop.f32.mrb[0].mxu0
        %v2082 = vadd.f32 %v864, %v2081
        %v2083 = vpop.f32.mrb[0].mxu0
        %v2084 = vadd.f32 %v868, %v2083
        %v2085 = vpop.f32.mrb[0].mxu0
        %v2086 = vadd.f32 %v864, %v2085
        %v2087 = vpop.f32.mrb[0].mxu0
        %v2088 = vadd.f32 %v868, %v2087
        %2089 = vmatprep.mubr.bf16.mxu0 %v1259
        %2090 = vmatmul.mubr.bf16.gmra.mrb[0].mxu0 %v1258
        %v2091 = vpop.f32.mrb[0].mxu0
        %v2092 = vadd.f32 %v864, %v2091
        %v2093 = vpop.f32.mrb[0].mxu0
        %v2094 = vadd.f32 %v868, %v2093
        %v2095 = vpop.f32.mrb[0].mxu0
        %v2096 = vadd.f32 %v864, %v2095
        %v2097 = vpop.f32.mrb[0].mxu0
        %v2098 = vadd.f32 %v868, %v2097
        %2099 = vmatprep.mubr.bf16.mxu0 %v1266
        %2100 = vmatmul.mubr.bf16.gmra.mrb[0].mxu0 %v1265
        %v2101 = vpop.f32.mrb[0].mxu0
        %v2102 = vadd.f32 %v864, %v2101
        %v2103 = vpop.f32.mrb[0].mxu0
        %v2104 = vadd.f32 %v868, %v2103
        %v2105 = vpop.f32.mrb[0].mxu0
        %v2106 = vadd.f32 %v864, %v2105
        %v2107 = vpop.f32.mrb[0].mxu0
        %v2108 = vadd.f32 %v868, %v2107
        %2109 = vmatprep.mubr.bf16.mxu0 %v1273
        %2110 = vmatmul.mubr.bf16.gmra.mrb[0].mxu0 %v1272
        %v2111 = vpop.f32.mrb[0].mxu0
        %v2112 = vadd.f32 %v864, %v2111
        %v2113 = vpop.f32.mrb[0].mxu0
        %v2114 = vadd.f32 %v868, %v2113
        %v2115 = vpop.f32.mrb[0].mxu0
        %v2116 = vadd.f32 %v864, %v2115
        %v2117 = vpop.f32.mrb[0].mxu0
        %v2118 = vadd.f32 %v868, %v2117
        %2119 = vmatprep.mubr.bf16.mxu0 %v1280
        %2120 = vmatmul.mubr.bf16.gmra.mrb[0].mxu0 %v1279
        %v2121 = vpop.f32.mrb[0].mxu0
        %v2122 = vadd.f32 %v864, %v2121
        %v2123 = vpop.f32.mrb[0].mxu0
        %v2124 = vadd.f32 %v868, %v2123
        %v2125 = vpop.f32.mrb[0].mxu0
        %v2126 = vadd.f32 %v864, %v2125
        %v2127 = vpop.f32.mrb[0].mxu0
        %v2128 = vadd.f32 %v868, %v2127
        %2129 = vmatprep.mubr.bf16.mxu0 %v1287
        %2130 = vmatmul.mubr.bf16.gmra.mrb[0].mxu0 %v1286
        %v2131 = vpop.f32.mrb[0].mxu0
        %v2132 = vadd.f32 %v864, %v2131
        %v2133 = vpop.f32.mrb[0].mxu0
        %v2134 = vadd.f32 %v868, %v2133
        %v2135 = vpop.f32.mrb[0].mxu0
        %v2136 = vadd.f32 %v864, %v2135
        %v2137 = vpop.f32.mrb[0].mxu0
        %v2138 = vadd.f32 %v868, %v2137
        %2139 = vmatprep.mubr.bf16.mxu0 %v1294
        %2140 = vmatmul.mubr.bf16.gmra.mrb[0].mxu0 %v1293
        %v2141 = vpop.f32.mrb[0].mxu0
        %v2142 = vadd.f32 %v864, %v2141
        %v2143 = vpop.f32.mrb[0].mxu0
        %v2144 = vadd.f32 %v868, %v2143
        %v2145 = vpop.f32.mrb[0].mxu0
        %v2146 = vadd.f32 %v864, %v2145
        %v2147 = vpop.f32.mrb[0].mxu0
        %v2148 = vadd.f32 %v868, %v2147
        %2149 = vmatprep.mubr.bf16.mxu0 %v1301
        %2150 = vmatmul.mubr.bf16.gmra.mrb[0].mxu0 %v1300
        %v2151 = vpop.f32.mrb[0].mxu0
        %v2152 = vadd.f32 %v864, %v2151
        %v2153 = vpop.f32.mrb[0].mxu0
        %v2154 = vadd.f32 %v868, %v2153
        %v2155 = vpop.f32.mrb[0].mxu0
        %v2156 = vadd.f32 %v864, %v2155
        %v2157 = vpop.f32.mrb[0].mxu0
        %v2158 = vadd.f32 %v868, %v2157
        %2159 = vmatprep.mubr.bf16.mxu0 %v1308
        %2160 = vmatmul.mubr.bf16.gmra.mrb[0].mxu0 %v1307
        %v2161 = vpop.f32.mrb[0].mxu0
        %v2162 = vadd.f32 %v864, %v2161
        %v2163 = vpop.f32.mrb[0].mxu0
        %v2164 = vadd.f32 %v868, %v2163
        %v2165 = vpop.f32.mrb[0].mxu0
        %v2166 = vadd.f32 %v864, %v2165
        %v2167 = vpop.f32.mrb[0].mxu0
        %v2168 = vadd.f32 %v868, %v2167
        %2169 = vmatprep.mubr.bf16.mxu0 %v1315
        %2170 = vmatmul.mubr.bf16.gmra.mrb[0].mxu0 %v1314
        %v2171 = vpop.f32.mrb[0].mxu0
        %v2172 = vadd.f32 %v864, %v2171
        %v2173 = vpop.f32.mrb[0].mxu0
        %v2174 = vadd.f32 %v868, %v2173
        %v2175 = vpop.f32.mrb[0].mxu0
        %v2176 = vadd.f32 %v864, %v2175
        %v2177 = vpop.f32.mrb[0].mxu0
        %v2178 = vadd.f32 %v868, %v2177
        %2179 = vmatprep.mubr.bf16.mxu0 %v1322
        %2180 = vmatmul.mubr.bf16.gmra.mrb[0].mxu0 %v1321
        %v2181 = vpop.f32.mrb[0].mxu0
        %v2182 = vadd.f32 %v864, %v2181
        %v2183 = vpop.f32.mrb[0].mxu0
        %v2184 = vadd.f32 %v868, %v2183
        %v2185 = vpop.f32.mrb[0].mxu0
        %v2186 = vadd.f32 %v864, %v2185
        %v2187 = vpop.f32.mrb[0].mxu0
        %v2188 = vadd.f32 %v868, %v2187
        %2189 = vmatprep.mubr.bf16.mxu0 %v1329
        %2190 = vmatmul.mubr.bf16.gmra.mrb[0].mxu0 %v1328
        %v2191 = vpop.f32.mrb[0].mxu0
        %v2192 = vadd.f32 %v864, %v2191
        %v2193 = vpop.f32.mrb[0].mxu0
        %v2194 = vadd.f32 %v868, %v2193
        %v2195 = vpop.f32.mrb[0].mxu0
        %v2196 = vadd.f32 %v864, %v2195
        %v2197 = vpop.f32.mrb[0].mxu0
        %v2198 = vadd.f32 %v868, %v2197
        %2199 = vdwg.mxu0
        %2200 = vmatprep.subr.bf16.mxu0 %v1816
        %2201 = vmatpush1.bf16.msra.mxu0 %v1815
        %2202 = vmatprep.subr.bf16.mxu0 %v1818
        %2203 = vmatpush1.bf16.msra.mxu0 %v1817
        %2204 = vmatprep.subr.bf16.mxu0 %v1820
        %2205 = vmatpush1.bf16.msra.mxu0 %v1819
        %2206 = vmatprep.subr.bf16.mxu0 %v1822
        %2207 = vmatpush1.bf16.msra.mxu0 %v1821
        %2208 = vmatprep.subr.bf16.mxu0 %v1824
        %2209 = vmatpush1.bf16.msra.mxu0 %v1823
        %2210 = vmatprep.subr.bf16.mxu0 %v1826
        %2211 = vmatpush1.bf16.msra.mxu0 %v1825
        %2212 = vmatprep.subr.bf16.mxu0 %v1828
        %2213 = vmatpush1.bf16.msra.mxu0 %v1827
        %2214 = vmatprep.subr.bf16.mxu0 %v1830
        %2215 = vmatpush1.bf16.msra.mxu0 %v1829
        %2216 = vmatprep.subr.bf16.mxu0 %v1832
        %2217 = vmatpush1.bf16.msra.mxu0 %v1831
        %2218 = vmatprep.subr.bf16.mxu0 %v1834
        %2219 = vmatpush1.bf16.msra.mxu0 %v1833
        %2220 = vmatprep.subr.bf16.mxu0 %v1836
        %2221 = vmatpush1.bf16.msra.mxu0 %v1835
        %2222 = vmatprep.subr.bf16.mxu0 %v1838
        %2223 = vmatpush1.bf16.msra.mxu0 %v1837
        %2224 = vmatprep.subr.bf16.mxu0 %v1840
        %2225 = vmatpush1.bf16.msra.mxu0 %v1839
        %2226 = vmatprep.subr.bf16.mxu0 %v1842
        %2227 = vmatpush1.bf16.msra.mxu0 %v1841
        %2228 = vmatprep.subr.bf16.mxu0 %v1844
        %2229 = vmatpush1.bf16.msra.mxu0 %v1843
        %2230 = vmatprep.subr.bf16.mxu0 %v1846
        %2231 = vmatpush1.bf16.msra.mxu0 %v1845
        %2232 = vmatprep.mubr.bf16.mxu0 %v1226
        %2233 = vmatmul.mubr.bf16.gmra.mrb[0].mxu0 %v1225
        %v2234 = vpop.f32.mrb[0].mxu0
        %v2235 = vadd.f32 %v2042, %v2234
        %v2236 = vpop.f32.mrb[0].mxu0
        %v2237 = vadd.f32 %v2044, %v2236
        %v2238 = vpop.f32.mrb[0].mxu0
        %v2239 = vadd.f32 %v2046, %v2238
        %v2240 = vpop.f32.mrb[0].mxu0
        %v2241 = vadd.f32 %v2048, %v2240
        %2242 = vmatprep.mubr.bf16.mxu0 %v1233
        %2243 = vmatmul.mubr.bf16.gmra.mrb[0].mxu0 %v1232
        %v2244 = vpop.f32.mrb[0].mxu0
        %v2245 = vadd.f32 %v2052, %v2244
        %v2246 = vpop.f32.mrb[0].mxu0
        %v2247 = vadd.f32 %v2054, %v2246
        %v2248 = vpop.f32.mrb[0].mxu0
        %v2249 = vadd.f32 %v2056, %v2248
        %v2250 = vpop.f32.mrb[0].mxu0
        %v2251 = vadd.f32 %v2058, %v2250
        %2252 = vmatprep.mubr.bf16.mxu0 %v1240
        %2253 = vmatmul.mubr.bf16.gmra.mrb[0].mxu0 %v1239
        %v2254 = vpop.f32.mrb[0].mxu0
        %v2255 = vadd.f32 %v2062, %v2254
        %v2256 = vpop.f32.mrb[0].mxu0
        %v2257 = vadd.f32 %v2064, %v2256
        %v2258 = vpop.f32.mrb[0].mxu0
        %v2259 = vadd.f32 %v2066, %v2258
        %v2260 = vpop.f32.mrb[0].mxu0
        %v2261 = vadd.f32 %v2068, %v2260
        %2262 = vmatprep.mubr.bf16.mxu0 %v1247
        %2263 = vmatmul.mubr.bf16.gmra.mrb[0].mxu0 %v1246
        %v2264 = vpop.f32.mrb[0].mxu0
        %v2265 = vadd.f32 %v2072, %v2264
        %v2266 = vpop.f32.mrb[0].mxu0
        %v2267 = vadd.f32 %v2074, %v2266
        %v2268 = vpop.f32.mrb[0].mxu0
        %v2269 = vadd.f32 %v2076, %v2268
        %v2270 = vpop.f32.mrb[0].mxu0
        %v2271 = vadd.f32 %v2078, %v2270
        %2272 = vmatprep.mubr.bf16.mxu0 %v1254
        %2273 = vmatmul.mubr.bf16.gmra.mrb[0].mxu0 %v1253
        %v2274 = vpop.f32.mrb[0].mxu0
        %v2275 = vadd.f32 %v2082, %v2274
        %v2276 = vpop.f32.mrb[0].mxu0
        %v2277 = vadd.f32 %v2084, %v2276
        %v2278 = vpop.f32.mrb[0].mxu0
        %v2279 = vadd.f32 %v2086, %v2278
        %v2280 = vpop.f32.mrb[0].mxu0
        %v2281 = vadd.f32 %v2088, %v2280
        %2282 = vmatprep.mubr.bf16.mxu0 %v1261
        %2283 = vmatmul.mubr.bf16.gmra.mrb[0].mxu0 %v1260
        %v2284 = vpop.f32.mrb[0].mxu0
        %v2285 = vadd.f32 %v2092, %v2284
        %v2286 = vpop.f32.mrb[0].mxu0
        %v2287 = vadd.f32 %v2094, %v2286
        %v2288 = vpop.f32.mrb[0].mxu0
        %v2289 = vadd.f32 %v2096, %v2288
        %v2290 = vpop.f32.mrb[0].mxu0
        %v2291 = vadd.f32 %v2098, %v2290
        %2292 = vmatprep.mubr.bf16.mxu0 %v1268
        %2293 = vmatmul.mubr.bf16.gmra.mrb[0].mxu0 %v1267
        %v2294 = vpop.f32.mrb[0].mxu0
        %v2295 = vadd.f32 %v2102, %v2294
        %v2296 = vpop.f32.mrb[0].mxu0
        %v2297 = vadd.f32 %v2104, %v2296
        %v2298 = vpop.f32.mrb[0].mxu0
        %v2299 = vadd.f32 %v2106, %v2298
        %v2300 = vpop.f32.mrb[0].mxu0
        %v2301 = vadd.f32 %v2108, %v2300
        %2302 = vmatprep.mubr.bf16.mxu0 %v1275
        %2303 = vmatmul.mubr.bf16.gmra.mrb[0].mxu0 %v1274
        %v2304 = vpop.f32.mrb[0].mxu0
        %v2305 = vadd.f32 %v2112, %v2304
        %v2306 = vpop.f32.mrb[0].mxu0
        %v2307 = vadd.f32 %v2114, %v2306
        %v2308 = vpop.f32.mrb[0].mxu0
        %v2309 = vadd.f32 %v2116, %v2308
        %v2310 = vpop.f32.mrb[0].mxu0
        %v2311 = vadd.f32 %v2118, %v2310
        %2312 = vmatprep.mubr.bf16.mxu0 %v1282
        %2313 = vmatmul.mubr.bf16.gmra.mrb[0].mxu0 %v1281
        %v2314 = vpop.f32.mrb[0].mxu0
        %v2315 = vadd.f32 %v2122, %v2314
        %v2316 = vpop.f32.mrb[0].mxu0
        %v2317 = vadd.f32 %v2124, %v2316
        %v2318 = vpop.f32.mrb[0].mxu0
        %v2319 = vadd.f32 %v2126, %v2318
        %v2320 = vpop.f32.mrb[0].mxu0
        %v2321 = vadd.f32 %v2128, %v2320
        %2322 = vmatprep.mubr.bf16.mxu0 %v1289
        %2323 = vmatmul.mubr.bf16.gmra.mrb[0].mxu0 %v1288
        %v2324 = vpop.f32.mrb[0].mxu0
        %v2325 = vadd.f32 %v2132, %v2324
        %v2326 = vpop.f32.mrb[0].mxu0
        %v2327 = vadd.f32 %v2134, %v2326
        %v2328 = vpop.f32.mrb[0].mxu0
        %v2329 = vadd.f32 %v2136, %v2328
        %v2330 = vpop.f32.mrb[0].mxu0
        %v2331 = vadd.f32 %v2138, %v2330
        %2332 = vmatprep.mubr.bf16.mxu0 %v1296
        %2333 = vmatmul.mubr.bf16.gmra.mrb[0].mxu0 %v1295
        %v2334 = vpop.f32.mrb[0].mxu0
        %v2335 = vadd.f32 %v2142, %v2334
        %v2336 = vpop.f32.mrb[0].mxu0
        %v2337 = vadd.f32 %v2144, %v2336
        %v2338 = vpop.f32.mrb[0].mxu0
        %v2339 = vadd.f32 %v2146, %v2338
        %v2340 = vpop.f32.mrb[0].mxu0
        %v2341 = vadd.f32 %v2148, %v2340
        %2342 = vmatprep.mubr.bf16.mxu0 %v1303
        %2343 = vmatmul.mubr.bf16.gmra.mrb[0].mxu0 %v1302
        %v2344 = vpop.f32.mrb[0].mxu0
        %v2345 = vadd.f32 %v2152, %v2344
        %v2346 = vpop.f32.mrb[0].mxu0
        %v2347 = vadd.f32 %v2154, %v2346
        %v2348 = vpop.f32.mrb[0].mxu0
        %v2349 = vadd.f32 %v2156, %v2348
        %v2350 = vpop.f32.mrb[0].mxu0
        %v2351 = vadd.f32 %v2158, %v2350
        %2352 = vmatprep.mubr.bf16.mxu0 %v1310
        %2353 = vmatmul.mubr.bf16.gmra.mrb[0].mxu0 %v1309
        %v2354 = vpop.f32.mrb[0].mxu0
        %v2355 = vadd.f32 %v2162, %v2354
        %v2356 = vpop.f32.mrb[0].mxu0
        %v2357 = vadd.f32 %v2164, %v2356
        %v2358 = vpop.f32.mrb[0].mxu0
        %v2359 = vadd.f32 %v2166, %v2358
        %v2360 = vpop.f32.mrb[0].mxu0
        %v2361 = vadd.f32 %v2168, %v2360
        %2362 = vmatprep.mubr.bf16.mxu0 %v1317
        %2363 = vmatmul.mubr.bf16.gmra.mrb[0].mxu0 %v1316
        %v2364 = vpop.f32.mrb[0].mxu0
        %v2365 = vadd.f32 %v2172, %v2364
        %v2366 = vpop.f32.mrb[0].mxu0
        %v2367 = vadd.f32 %v2174, %v2366
        %v2368 = vpop.f32.mrb[0].mxu0
        %v2369 = vadd.f32 %v2176, %v2368
        %v2370 = vpop.f32.mrb[0].mxu0
        %v2371 = vadd.f32 %v2178, %v2370
        %2372 = vmatprep.mubr.bf16.mxu0 %v1324
        %2373 = vmatmul.mubr.bf16.gmra.mrb[0].mxu0 %v1323
        %v2374 = vpop.f32.mrb[0].mxu0
        %v2375 = vadd.f32 %v2182, %v2374
        %v2376 = vpop.f32.mrb[0].mxu0
        %v2377 = vadd.f32 %v2184, %v2376
        %v2378 = vpop.f32.mrb[0].mxu0
        %v2379 = vadd.f32 %v2186, %v2378
        %v2380 = vpop.f32.mrb[0].mxu0
        %v2381 = vadd.f32 %v2188, %v2380
        %2382 = vmatprep.mubr.bf16.mxu0 %v1331
        %2383 = vmatmul.mubr.bf16.gmra.mrb[0].mxu0 %v1330
        %v2384 = vpop.f32.mrb[0].mxu0
        %v2385 = vadd.f32 %v2192, %v2384
        %v2386 = vpop.f32.mrb[0].mxu0
        %v2387 = vadd.f32 %v2194, %v2386
        %v2388 = vpop.f32.mrb[0].mxu0
        %v2389 = vadd.f32 %v2196, %v2388
        %v2390 = vpop.f32.mrb[0].mxu0
        %v2391 = vadd.f32 %v2198, %v2390
        %2392 = vdwg.mxu0
        %2393 = vmatprep.subr.bf16.mxu0 %v1848
        %2394 = vmatpush1.bf16.msra.mxu0 %v1847
        %2395 = vmatprep.subr.bf16.mxu0 %v1850
        %2396 = vmatpush1.bf16.msra.mxu0 %v1849
        %2397 = vmatprep.subr.bf16.mxu0 %v1852
        %2398 = vmatpush1.bf16.msra.mxu0 %v1851
        %2399 = vmatprep.subr.bf16.mxu0 %v1854
        %2400 = vmatpush1.bf16.msra.mxu0 %v1853
        %2401 = vmatprep.subr.bf16.mxu0 %v1856
        %2402 = vmatpush1.bf16.msra.mxu0 %v1855
        %2403 = vmatprep.subr.bf16.mxu0 %v1858
        %2404 = vmatpush1.bf16.msra.mxu0 %v1857
        %2405 = vmatprep.subr.bf16.mxu0 %v1860
        %2406 = vmatpush1.bf16.msra.mxu0 %v1859
        %2407 = vmatprep.subr.bf16.mxu0 %v1862
        %2408 = vmatpush1.bf16.msra.mxu0 %v1861
        %2409 = vmatprep.subr.bf16.mxu0 %v1864
        %2410 = vmatpush1.bf16.msra.mxu0 %v1863
        %2411 = vmatprep.subr.bf16.mxu0 %v1866
        %2412 = vmatpush1.bf16.msra.mxu0 %v1865
        %2413 = vmatprep.subr.bf16.mxu0 %v1868
        %2414 = vmatpush1.bf16.msra.mxu0 %v1867
        %2415 = vmatprep.subr.bf16.mxu0 %v1870
        %2416 = vmatpush1.bf16.msra.mxu0 %v1869
        %2417 = vmatprep.subr.bf16.mxu0 %v1872
        %2418 = vmatpush1.bf16.msra.mxu0 %v1871
        %2419 = vmatprep.subr.bf16.mxu0 %v1874
        %2420 = vmatpush1.bf16.msra.mxu0 %v1873
        %2421 = vmatprep.subr.bf16.mxu0 %v1876
        %2422 = vmatpush1.bf16.msra.mxu0 %v1875
        %2423 = vmatprep.subr.bf16.mxu0 %v1878
        %2424 = vmatpush1.bf16.msra.mxu0 %v1877
        %2425 = vmatprep.mubr.bf16.mxu0 %v1228
        %2426 = vmatmul.mubr.bf16.gmra.mrb[0].mxu0 %v1227
        %v2427 = vpop.f32.mrb[0].mxu0
        %v2428 = vadd.f32 %v2235, %v2427
        %v2429 = vpop.f32.mrb[0].mxu0
        %v2430 = vadd.f32 %v2237, %v2429
        %v2431 = vpop.f32.mrb[0].mxu0
        %v2432 = vadd.f32 %v2239, %v2431
        %v2433 = vpop.f32.mrb[0].mxu0
        %v2434 = vadd.f32 %v2241, %v2433
        %2435 = vmatprep.mubr.bf16.mxu0 %v1235
        %2436 = vmatmul.mubr.bf16.gmra.mrb[0].mxu0 %v1234
        %v2437 = vpop.f32.mrb[0].mxu0
        %v2438 = vadd.f32 %v2245, %v2437
        %v2439 = vpop.f32.mrb[0].mxu0
        %v2440 = vadd.f32 %v2247, %v2439
        %v2441 = vpop.f32.mrb[0].mxu0
        %v2442 = vadd.f32 %v2249, %v2441
        %v2443 = vpop.f32.mrb[0].mxu0
        %v2444 = vadd.f32 %v2251, %v2443
        %2445 = vmatprep.mubr.bf16.mxu0 %v1242
        %2446 = vmatmul.mubr.bf16.gmra.mrb[0].mxu0 %v1241
        %v2447 = vpop.f32.mrb[0].mxu0
        %v2448 = vadd.f32 %v2255, %v2447
        %v2449 = vpop.f32.mrb[0].mxu0
        %v2450 = vadd.f32 %v2257, %v2449
        %v2451 = vpop.f32.mrb[0].mxu0
        %v2452 = vadd.f32 %v2259, %v2451
        %v2453 = vpop.f32.mrb[0].mxu0
        %v2454 = vadd.f32 %v2261, %v2453
        %2455 = vmatprep.mubr.bf16.mxu0 %v1249
        %2456 = vmatmul.mubr.bf16.gmra.mrb[0].mxu0 %v1248
        %v2457 = vpop.f32.mrb[0].mxu0
        %v2458 = vadd.f32 %v2265, %v2457
        %v2459 = vpop.f32.mrb[0].mxu0
        %v2460 = vadd.f32 %v2267, %v2459
        %v2461 = vpop.f32.mrb[0].mxu0
        %v2462 = vadd.f32 %v2269, %v2461
        %v2463 = vpop.f32.mrb[0].mxu0
        %v2464 = vadd.f32 %v2271, %v2463
        %2465 = vmatprep.mubr.bf16.mxu0 %v1256
        %2466 = vmatmul.mubr.bf16.gmra.mrb[0].mxu0 %v1255
        %v2467 = vpop.f32.mrb[0].mxu0
        %v2468 = vadd.f32 %v2275, %v2467
        %v2469 = vpop.f32.mrb[0].mxu0
        %v2470 = vadd.f32 %v2277, %v2469
        %v2471 = vpop.f32.mrb[0].mxu0
        %v2472 = vadd.f32 %v2279, %v2471
        %v2473 = vpop.f32.mrb[0].mxu0
        %v2474 = vadd.f32 %v2281, %v2473
        %2475 = vmatprep.mubr.bf16.mxu0 %v1263
        %2476 = vmatmul.mubr.bf16.gmra.mrb[0].mxu0 %v1262
        %v2477 = vpop.f32.mrb[0].mxu0
        %v2478 = vadd.f32 %v2285, %v2477
        %v2479 = vpop.f32.mrb[0].mxu0
        %v2480 = vadd.f32 %v2287, %v2479
        %v2481 = vpop.f32.mrb[0].mxu0
        %v2482 = vadd.f32 %v2289, %v2481
        %v2483 = vpop.f32.mrb[0].mxu0
        %v2484 = vadd.f32 %v2291, %v2483
        %2485 = vmatprep.mubr.bf16.mxu0 %v1270
        %2486 = vmatmul.mubr.bf16.gmra.mrb[0].mxu0 %v1269
        %v2487 = vpop.f32.mrb[0].mxu0
        %v2488 = vadd.f32 %v2295, %v2487
        %v2489 = vpop.f32.mrb[0].mxu0
        %v2490 = vadd.f32 %v2297, %v2489
        %v2491 = vpop.f32.mrb[0].mxu0
        %v2492 = vadd.f32 %v2299, %v2491
        %v2493 = vpop.f32.mrb[0].mxu0
        %v2494 = vadd.f32 %v2301, %v2493
        %2495 = vmatprep.mubr.bf16.mxu0 %v1277
        %2496 = vmatmul.mubr.bf16.gmra.mrb[0].mxu0 %v1276
        %v2497 = vpop.f32.mrb[0].mxu0
        %v2498 = vadd.f32 %v2305, %v2497
        %v2499 = vpop.f32.mrb[0].mxu0
        %v2500 = vadd.f32 %v2307, %v2499
        %v2501 = vpop.f32.mrb[0].mxu0
        %v2502 = vadd.f32 %v2309, %v2501
        %v2503 = vpop.f32.mrb[0].mxu0
        %v2504 = vadd.f32 %v2311, %v2503
        %2505 = vmatprep.mubr.bf16.mxu0 %v1284
        %2506 = vmatmul.mubr.bf16.gmra.mrb[0].mxu0 %v1283
        %v2507 = vpop.f32.mrb[0].mxu0
        %v2508 = vadd.f32 %v2315, %v2507
        %v2509 = vpop.f32.mrb[0].mxu0
        %v2510 = vadd.f32 %v2317, %v2509
        %v2511 = vpop.f32.mrb[0].mxu0
        %v2512 = vadd.f32 %v2319, %v2511
        %v2513 = vpop.f32.mrb[0].mxu0
        %v2514 = vadd.f32 %v2321, %v2513
        %2515 = vmatprep.mubr.bf16.mxu0 %v1291
        %2516 = vmatmul.mubr.bf16.gmra.mrb[0].mxu0 %v1290
        %v2517 = vpop.f32.mrb[0].mxu0
        %v2518 = vadd.f32 %v2325, %v2517
        %v2519 = vpop.f32.mrb[0].mxu0
        %v2520 = vadd.f32 %v2327, %v2519
        %v2521 = vpop.f32.mrb[0].mxu0
        %v2522 = vadd.f32 %v2329, %v2521
        %v2523 = vpop.f32.mrb[0].mxu0
        %v2524 = vadd.f32 %v2331, %v2523
        %2525 = vmatprep.mubr.bf16.mxu0 %v1298
        %2526 = vmatmul.mubr.bf16.gmra.mrb[0].mxu0 %v1297
        %v2527 = vpop.f32.mrb[0].mxu0
        %v2528 = vadd.f32 %v2335, %v2527
        %v2529 = vpop.f32.mrb[0].mxu0
        %v2530 = vadd.f32 %v2337, %v2529
        %v2531 = vpop.f32.mrb[0].mxu0
        %v2532 = vadd.f32 %v2339, %v2531
        %v2533 = vpop.f32.mrb[0].mxu0
        %v2534 = vadd.f32 %v2341, %v2533
        %2535 = vmatprep.mubr.bf16.mxu0 %v1305
        %2536 = vmatmul.mubr.bf16.gmra.mrb[0].mxu0 %v1304
        %v2537 = vpop.f32.mrb[0].mxu0
        %v2538 = vadd.f32 %v2345, %v2537
        %v2539 = vpop.f32.mrb[0].mxu0
        %v2540 = vadd.f32 %v2347, %v2539
        %v2541 = vpop.f32.mrb[0].mxu0
        %v2542 = vadd.f32 %v2349, %v2541
        %v2543 = vpop.f32.mrb[0].mxu0
        %v2544 = vadd.f32 %v2351, %v2543
        %2545 = vmatprep.mubr.bf16.mxu0 %v1312
        %2546 = vmatmul.mubr.bf16.gmra.mrb[0].mxu0 %v1311
        %v2547 = vpop.f32.mrb[0].mxu0
        %v2548 = vadd.f32 %v2355, %v2547
        %v2549 = vpop.f32.mrb[0].mxu0
        %v2550 = vadd.f32 %v2357, %v2549
        %v2551 = vpop.f32.mrb[0].mxu0
        %v2552 = vadd.f32 %v2359, %v2551
        %v2553 = vpop.f32.mrb[0].mxu0
        %v2554 = vadd.f32 %v2361, %v2553
        %2555 = vmatprep.mubr.bf16.mxu0 %v1319
        %2556 = vmatmul.mubr.bf16.gmra.mrb[0].mxu0 %v1318
        %v2557 = vpop.f32.mrb[0].mxu0
        %v2558 = vadd.f32 %v2365, %v2557
        %v2559 = vpop.f32.mrb[0].mxu0
        %v2560 = vadd.f32 %v2367, %v2559
        %v2561 = vpop.f32.mrb[0].mxu0
        %v2562 = vadd.f32 %v2369, %v2561
        %v2563 = vpop.f32.mrb[0].mxu0
        %v2564 = vadd.f32 %v2371, %v2563
        %2565 = vmatprep.mubr.bf16.mxu0 %v1326
        %2566 = vmatmul.mubr.bf16.gmra.mrb[0].mxu0 %v1325
        %v2567 = vpop.f32.mrb[0].mxu0
        %v2568 = vadd.f32 %v2375, %v2567
        %v2569 = vpop.f32.mrb[0].mxu0
        %v2570 = vadd.f32 %v2377, %v2569
        %v2571 = vpop.f32.mrb[0].mxu0
        %v2572 = vadd.f32 %v2379, %v2571
        %v2573 = vpop.f32.mrb[0].mxu0
        %v2574 = vadd.f32 %v2381, %v2573
        %2575 = vmatprep.mubr.bf16.mxu0 %v1333
        %2576 = vmatmul.mubr.bf16.gmra.mrb[0].mxu0 %v1332
        %v2577 = vpop.f32.mrb[0].mxu0
        %v2578 = vadd.f32 %v2385, %v2577
        %v2579 = vpop.f32.mrb[0].mxu0
        %v2580 = vadd.f32 %v2387, %v2579
        %v2581 = vpop.f32.mrb[0].mxu0
        %v2582 = vadd.f32 %v2389, %v2581
        %v2583 = vpop.f32.mrb[0].mxu0
        %v2584 = vadd.f32 %v2391, %v2583
        %2585 = vdwg.mxu0
        %2586 = vmatprep.subr.bf16.mxu0 %v1880
        %2587 = vmatpush1.bf16.msra.mxu0 %v1879
        %2588 = vmatprep.subr.bf16.mxu0 %v1882
        %2589 = vmatpush1.bf16.msra.mxu0 %v1881
        %2590 = vmatprep.subr.bf16.mxu0 %v1884
        %2591 = vmatpush1.bf16.msra.mxu0 %v1883
        %2592 = vmatprep.subr.bf16.mxu0 %v1886
        %2593 = vmatpush1.bf16.msra.mxu0 %v1885
        %2594 = vmatprep.subr.bf16.mxu0 %v1888
        %2595 = vmatpush1.bf16.msra.mxu0 %v1887
        %2596 = vmatprep.subr.bf16.mxu0 %v1890
        %2597 = vmatpush1.bf16.msra.mxu0 %v1889
        %2598 = vmatprep.subr.bf16.mxu0 %v1892
        %2599 = vmatpush1.bf16.msra.mxu0 %v1891
        %2600 = vmatprep.subr.bf16.mxu0 %v1894
        %2601 = vmatpush1.bf16.msra.mxu0 %v1893
        %2602 = vmatprep.subr.bf16.mxu0 0
        %2603 = vmatpush1.bf16.msra.mxu0 0
        %2604 = vmatprep.subr.bf16.mxu0 0
        %2605 = vmatpush1.bf16.msra.mxu0 0
        %2606 = vmatprep.subr.bf16.mxu0 0
        %2607 = vmatpush1.bf16.msra.mxu0 0
        %2608 = vmatprep.subr.bf16.mxu0 0
        %2609 = vmatpush1.bf16.msra.mxu0 0
        %2610 = vmatprep.subr.bf16.mxu0 0
        %2611 = vmatpush1.bf16.msra.mxu0 0
        %2612 = vmatprep.subr.bf16.mxu0 0
        %2613 = vmatpush1.bf16.msra.mxu0 0
        %2614 = vmatprep.subr.bf16.mxu0 0
        %2615 = vmatpush1.bf16.msra.mxu0 0
        %2616 = vmatprep.subr.bf16.mxu0 0
        %2617 = vmatpush1.bf16.msra.mxu0 0
        %2618 = vmatprep.mubr.bf16.mxu0 0
        %2619 = vmatmul.mubr.bf16.gmra.mrb[0].mxu0 %v1229
        %v2620 = vpop.f32.mrb[0].mxu0
        %v2621 = vadd.f32 %v2428, %v2620
        %v2622 = vpop.f32.mrb[0].mxu0
        %v2623 = vadd.f32 %v2430, %v2622
        %v2624 = vpop.f32.mrb[0].mxu0
        %v2625 = vadd.f32 %v2432, %v2624
        %v2626 = vpop.f32.mrb[0].mxu0
        %v2627 = vadd.f32 %v2434, %v2626
        %2628 = vmatprep.mubr.bf16.mxu0 0
        %2629 = vmatmul.mubr.bf16.gmra.mrb[0].mxu0 %v1236
        %v2630 = vpop.f32.mrb[0].mxu0
        %v2631 = vadd.f32 %v2438, %v2630
        %v2632 = vpop.f32.mrb[0].mxu0
        %v2633 = vadd.f32 %v2440, %v2632
        %v2634 = vpop.f32.mrb[0].mxu0
        %v2635 = vadd.f32 %v2442, %v2634
        %v2636 = vpop.f32.mrb[0].mxu0
        %v2637 = vadd.f32 %v2444, %v2636
        %2638 = vmatprep.mubr.bf16.mxu0 0
        %2639 = vmatmul.mubr.bf16.gmra.mrb[0].mxu0 %v1243
        %v2640 = vpop.f32.mrb[0].mxu0
        %v2641 = vadd.f32 %v2448, %v2640
        %v2642 = vpop.f32.mrb[0].mxu0
        %v2643 = vadd.f32 %v2450, %v2642
        %v2644 = vpop.f32.mrb[0].mxu0
        %v2645 = vadd.f32 %v2452, %v2644
        %v2646 = vpop.f32.mrb[0].mxu0
        %v2647 = vadd.f32 %v2454, %v2646
        %2648 = vmatprep.mubr.bf16.mxu0 0
        %2649 = vmatmul.mubr.bf16.gmra.mrb[0].mxu0 %v1250
        %v2650 = vpop.f32.mrb[0].mxu0
        %v2651 = vadd.f32 %v2458, %v2650
        %v2652 = vpop.f32.mrb[0].mxu0
        %v2653 = vadd.f32 %v2460, %v2652
        %v2654 = vpop.f32.mrb[0].mxu0
        %v2655 = vadd.f32 %v2462, %v2654
        %v2656 = vpop.f32.mrb[0].mxu0
        %v2657 = vadd.f32 %v2464, %v2656
        %2658 = vmatprep.mubr.bf16.mxu0 0
        %2659 = vmatmul.mubr.bf16.gmra.mrb[0].mxu0 %v1257
        %v2660 = vpop.f32.mrb[0].mxu0
        %v2661 = vadd.f32 %v2468, %v2660
        %v2662 = vpop.f32.mrb[0].mxu0
        %v2663 = vadd.f32 %v2470, %v2662
        %v2664 = vpop.f32.mrb[0].mxu0
        %v2665 = vadd.f32 %v2472, %v2664
        %v2666 = vpop.f32.mrb[0].mxu0
        %v2667 = vadd.f32 %v2474, %v2666
        %2668 = vmatprep.mubr.bf16.mxu0 0
        %2669 = vmatmul.mubr.bf16.gmra.mrb[0].mxu0 %v1264
        %v2670 = vpop.f32.mrb[0].mxu0
        %v2671 = vadd.f32 %v2478, %v2670
        %v2672 = vpop.f32.mrb[0].mxu0
        %v2673 = vadd.f32 %v2480, %v2672
        %v2674 = vpop.f32.mrb[0].mxu0
        %v2675 = vadd.f32 %v2482, %v2674
        %v2676 = vpop.f32.mrb[0].mxu0
        %v2677 = vadd.f32 %v2484, %v2676
        %2678 = vmatprep.mubr.bf16.mxu0 0
        %2679 = vmatmul.mubr.bf16.gmra.mrb[0].mxu0 %v1271
        %v2680 = vpop.f32.mrb[0].mxu0
        %v2681 = vadd.f32 %v2488, %v2680
        %v2682 = vpop.f32.mrb[0].mxu0
        %v2683 = vadd.f32 %v2490, %v2682
        %v2684 = vpop.f32.mrb[0].mxu0
        %v2685 = vadd.f32 %v2492, %v2684
        %v2686 = vpop.f32.mrb[0].mxu0
        %v2687 = vadd.f32 %v2494, %v2686
        %2688 = vmatprep.mubr.bf16.mxu0 0
        %2689 = vmatmul.mubr.bf16.gmra.mrb[0].mxu0 %v1278
        %v2690 = vpop.f32.mrb[0].mxu0
        %v2691 = vadd.f32 %v2498, %v2690
        %v2692 = vpop.f32.mrb[0].mxu0
        %v2693 = vadd.f32 %v2500, %v2692
        %v2694 = vpop.f32.mrb[0].mxu0
        %v2695 = vadd.f32 %v2502, %v2694
        %v2696 = vpop.f32.mrb[0].mxu0
        %v2697 = vadd.f32 %v2504, %v2696
        %2698 = vmatprep.mubr.bf16.mxu0 0
        %2699 = vmatmul.mubr.bf16.gmra.mrb[0].mxu0 %v1285
        %v2700 = vpop.f32.mrb[0].mxu0
        %v2701 = vadd.f32 %v2508, %v2700
        %v2702 = vpop.f32.mrb[0].mxu0
        %v2703 = vadd.f32 %v2510, %v2702
        %v2704 = vpop.f32.mrb[0].mxu0
        %v2705 = vadd.f32 %v2512, %v2704
        %v2706 = vpop.f32.mrb[0].mxu0
        %v2707 = vadd.f32 %v2514, %v2706
        %2708 = vmatprep.mubr.bf16.mxu0 0
        %2709 = vmatmul.mubr.bf16.gmra.mrb[0].mxu0 %v1292
        %v2710 = vpop.f32.mrb[0].mxu0
        %v2711 = vadd.f32 %v2518, %v2710
        %v2712 = vpop.f32.mrb[0].mxu0
        %v2713 = vadd.f32 %v2520, %v2712
        %v2714 = vpop.f32.mrb[0].mxu0
        %v2715 = vadd.f32 %v2522, %v2714
        %v2716 = vpop.f32.mrb[0].mxu0
        %v2717 = vadd.f32 %v2524, %v2716
        %2718 = vmatprep.mubr.bf16.mxu0 0
        %2719 = vmatmul.mubr.bf16.gmra.mrb[0].mxu0 %v1299
        %v2720 = vpop.f32.mrb[0].mxu0
        %v2721 = vadd.f32 %v2528, %v2720
        %v2722 = vpop.f32.mrb[0].mxu0
        %v2723 = vadd.f32 %v2530, %v2722
        %v2724 = vpop.f32.mrb[0].mxu0
        %v2725 = vadd.f32 %v2532, %v2724
        %v2726 = vpop.f32.mrb[0].mxu0
        %v2727 = vadd.f32 %v2534, %v2726
        %2728 = vmatprep.mubr.bf16.mxu0 0
        %2729 = vmatmul.mubr.bf16.gmra.mrb[0].mxu0 %v1306
        %v2730 = vpop.f32.mrb[0].mxu0
        %v2731 = vadd.f32 %v2538, %v2730
        %v2732 = vpop.f32.mrb[0].mxu0
        %v2733 = vadd.f32 %v2540, %v2732
        %v2734 = vpop.f32.mrb[0].mxu0
        %v2735 = vadd.f32 %v2542, %v2734
        %v2736 = vpop.f32.mrb[0].mxu0
        %v2737 = vadd.f32 %v2544, %v2736
        %2738 = vmatprep.mubr.bf16.mxu0 0
        %2739 = vmatmul.mubr.bf16.gmra.mrb[0].mxu0 %v1313
        %v2740 = vpop.f32.mrb[0].mxu0
        %v2741 = vadd.f32 %v2548, %v2740
        %v2742 = vpop.f32.mrb[0].mxu0
        %v2743 = vadd.f32 %v2550, %v2742
        %v2744 = vpop.f32.mrb[0].mxu0
        %v2745 = vadd.f32 %v2552, %v2744
        %v2746 = vpop.f32.mrb[0].mxu0
        %v2747 = vadd.f32 %v2554, %v2746
        %2748 = vmatprep.mubr.bf16.mxu0 0
        %2749 = vmatmul.mubr.bf16.gmra.mrb[0].mxu0 %v1320
        %v2750 = vpop.f32.mrb[0].mxu0
        %v2751 = vadd.f32 %v2558, %v2750
        %v2752 = vpop.f32.mrb[0].mxu0
        %v2753 = vadd.f32 %v2560, %v2752
        %v2754 = vpop.f32.mrb[0].mxu0
        %v2755 = vadd.f32 %v2562, %v2754
        %v2756 = vpop.f32.mrb[0].mxu0
        %v2757 = vadd.f32 %v2564, %v2756
        %2758 = vmatprep.mubr.bf16.mxu0 0
        %2759 = vmatmul.mubr.bf16.gmra.mrb[0].mxu0 %v1327
        %v2760 = vpop.f32.mrb[0].mxu0
        %v2761 = vadd.f32 %v2568, %v2760
        %v2762 = vpop.f32.mrb[0].mxu0
        %v2763 = vadd.f32 %v2570, %v2762
        %v2764 = vpop.f32.mrb[0].mxu0
        %v2765 = vadd.f32 %v2572, %v2764
        %v2766 = vpop.f32.mrb[0].mxu0
        %v2767 = vadd.f32 %v2574, %v2766
        %2768 = vmatprep.mubr.bf16.mxu0 0
        %2769 = vmatmul.mubr.bf16.gmra.mrb[0].mxu0 %v1334
        %v2770 = vpop.f32.mrb[0].mxu0
        %v2771 = vadd.f32 %v2578, %v2770
        %v2772 = vpop.f32.mrb[0].mxu0
        %v2773 = vadd.f32 %v2580, %v2772
        %v2774 = vpop.f32.mrb[0].mxu0
        %v2775 = vadd.f32 %v2582, %v2774
        %v2776 = vpop.f32.mrb[0].mxu0
        %v2777 = vadd.f32 %v2584, %v2776
        %2778 = vdwg.mxu0
        %v2779 = vmax.f32 %v2621, 0.0
        %v2780 = vmax.f32 %v2623, 0.0
        %v2781 = vmax.f32 %v2625, 0.0
        %v2782 = vmax.f32 %v2627, 0.0
        %v2783 = vmax.f32 %v2631, 0.0
        %v2784 = vmax.f32 %v2633, 0.0
        %v2785 = vmax.f32 %v2635, 0.0
        %v2786 = vmax.f32 %v2637, 0.0
        %v2787 = vmax.f32 %v2641, 0.0
        %v2788 = vmax.f32 %v2643, 0.0
        %v2789 = vmax.f32 %v2645, 0.0
        %v2790 = vmax.f32 %v2647, 0.0
        %v2791 = vmax.f32 %v2651, 0.0
        %v2792 = vmax.f32 %v2653, 0.0
        %v2793 = vmax.f32 %v2655, 0.0
        %v2794 = vmax.f32 %v2657, 0.0
        %v2795 = vmax.f32 %v2661, 0.0
        %v2796 = vmax.f32 %v2663, 0.0
        %v2797 = vmax.f32 %v2665, 0.0
        %v2798 = vmax.f32 %v2667, 0.0
        %v2799 = vmax.f32 %v2671, 0.0
        %v2800 = vmax.f32 %v2673, 0.0
        %v2801 = vmax.f32 %v2675, 0.0
        %v2802 = vmax.f32 %v2677, 0.0
        %v2803 = vmax.f32 %v2681, 0.0
        %v2804 = vmax.f32 %v2683, 0.0
        %v2805 = vmax.f32 %v2685, 0.0
        %v2806 = vmax.f32 %v2687, 0.0
        %v2807 = vmax.f32 %v2691, 0.0
        %v2808 = vmax.f32 %v2693, 0.0
        %v2809 = vmax.f32 %v2695, 0.0
        %v2810 = vmax.f32 %v2697, 0.0
        %v2811 = vmax.f32 %v2701, 0.0
        %v2812 = vmax.f32 %v2703, 0.0
        %v2813 = vmax.f32 %v2705, 0.0
        %v2814 = vmax.f32 %v2707, 0.0
        %v2815 = vmax.f32 %v2711, 0.0
        %v2816 = vmax.f32 %v2713, 0.0
        %v2817 = vmax.f32 %v2715, 0.0
        %v2818 = vmax.f32 %v2717, 0.0
        %v2819 = vmax.f32 %v2721, 0.0
        %v2820 = vmax.f32 %v2723, 0.0
        %v2821 = vmax.f32 %v2725, 0.0
        %v2822 = vmax.f32 %v2727, 0.0
        %v2823 = vmax.f32 %v2731, 0.0
        %v2824 = vmax.f32 %v2733, 0.0
        %v2825 = vmax.f32 %v2735, 0.0
        %v2826 = vmax.f32 %v2737, 0.0
        %v2827 = vmax.f32 %v2741, 0.0
        %v2828 = vmax.f32 %v2743, 0.0
        %v2829 = vmax.f32 %v2745, 0.0
        %v2830 = vmax.f32 %v2747, 0.0
        %v2831 = vmax.f32 %v2751, 0.0
        %v2832 = vmax.f32 %v2753, 0.0
        %v2833 = vmax.f32 %v2755, 0.0
        %v2834 = vmax.f32 %v2757, 0.0
        %v2835 = vmax.f32 %v2761, 0.0
        %v2836 = vmax.f32 %v2763, 0.0
        %v2837 = vmax.f32 %v2765, 0.0
        %v2838 = vmax.f32 %v2767, 0.0
        %v2839 = vmax.f32 %v2771, 0.0
        %v2840 = vmax.f32 %v2773, 0.0
        %v2841 = vmax.f32 %v2775, 0.0
        %v2842 = vmax.f32 %v2777, 0.0
        %v2843 = vpack.c.bf16 %v2781, %v2779
        %v2844 = vpack.c.bf16 %v2782, %v2780
        %v2845 = vpack.c.bf16 %v2785, %v2783
        %v2846 = vpack.c.bf16 %v2786, %v2784
        %v2847 = vpack.c.bf16 %v2789, %v2787
        %v2848 = vpack.c.bf16 %v2790, %v2788
        %v2849 = vpack.c.bf16 %v2793, %v2791
        %v2850 = vpack.c.bf16 %v2794, %v2792
        %v2851 = vpack.c.bf16 %v2797, %v2795
        %v2852 = vpack.c.bf16 %v2798, %v2796
        %v2853 = vpack.c.bf16 %v2801, %v2799
        %v2854 = vpack.c.bf16 %v2802, %v2800
        %v2855 = vpack.c.bf16 %v2805, %v2803
        %v2856 = vpack.c.bf16 %v2806, %v2804
        %v2857 = vpack.c.bf16 %v2809, %v2807
        %v2858 = vpack.c.bf16 %v2810, %v2808
        %v2859 = vpack.c.bf16 %v2813, %v2811
        %v2860 = vpack.c.bf16 %v2814, %v2812
        %v2861 = vpack.c.bf16 %v2817, %v2815
        %v2862 = vpack.c.bf16 %v2818, %v2816
        %v2863 = vpack.c.bf16 %v2821, %v2819
        %v2864 = vpack.c.bf16 %v2822, %v2820
        %v2865 = vpack.c.bf16 %v2825, %v2823
        %v2866 = vpack.c.bf16 %v2826, %v2824
        %v2867 = vpack.c.bf16 %v2829, %v2827
        %v2868 = vpack.c.bf16 %v2830, %v2828
        %v2869 = vpack.c.bf16 %v2833, %v2831
        %v2870 = vpack.c.bf16 %v2834, %v2832
        %v2871 = vpack.c.bf16 %v2837, %v2835
        %v2872 = vpack.c.bf16 %v2838, %v2836
        %v2873 = vpack.c.bf16 %v2841, %v2839
        %v2874 = vpack.c.bf16 %v2842, %v2840
        %v2875 = vld [vmem:[#allocation7] sm:$0xff]
        %v2876 = vld [vmem:[#allocation7 + $0x8] sm:$0xff]
        %v2877 = vld [vmem:[#allocation7 + $0x10] sm:$0xff]
        %v2878 = vld [vmem:[#allocation7 + $0x18] sm:$0xff]
        %v2879 = vld [vmem:[#allocation7 + $0x20] sm:$0xff]
        %v2880 = vld [vmem:[#allocation7 + $0x28] sm:$0xff]
        %v2881 = vld [vmem:[#allocation7 + $0x30] sm:$0xff]
        %v2882 = vld [vmem:[#allocation7 + $0x38] sm:$0xff]
        %v2883 = vld [vmem:[#allocation7 + $0x40] sm:$0xff]
        %v2884 = vld [vmem:[#allocation7 + $0x48] sm:$0xff]
        %v2885 = vld [vmem:[#allocation7 + $0x50] sm:$0xff]
        %v2886 = vld [vmem:[#allocation7 + $0x58] sm:$0xff]
        %v2887 = vld [vmem:[#allocation7 + $0x60] sm:$0xff]
        %v2888 = vld [vmem:[#allocation7 + $0x68] sm:$0xff]
        %v2889 = vld [vmem:[#allocation7 + $0x70] sm:$0xff]
        %v2890 = vld [vmem:[#allocation7 + $0x78] sm:$0xff]
        %v2891 = vld [vmem:[#allocation7 + $0x80] sm:$0xff]
        %v2892 = vld [vmem:[#allocation7 + $0x88] sm:$0xff]
        %v2893 = vld [vmem:[#allocation7 + $0x90] sm:$0xff]
        %v2894 = vld [vmem:[#allocation7 + $0x98] sm:$0xff]
        %v2895 = vld [vmem:[#allocation7 + $0xa0] sm:$0xff]
        %v2896 = vld [vmem:[#allocation7 + $0xa8] sm:$0xff]
        %v2897 = vld [vmem:[#allocation7 + $0xb0] sm:$0xff]
        %v2898 = vld [vmem:[#allocation7 + $0xb8] sm:$0xff]
        %v2899 = vld [vmem:[#allocation7 + $0xc0] sm:$0xff]
        %v2900 = vld [vmem:[#allocation7 + $0xc8] sm:$0xff]
        %v2901 = vld [vmem:[#allocation7 + $0xd0] sm:$0xff]
        %v2902 = vld [vmem:[#allocation7 + $0xd8] sm:$0xff]
        %v2903 = vld [vmem:[#allocation7 + $0xe0] sm:$0xff]
        %v2904 = vld [vmem:[#allocation7 + $0xe8] sm:$0xff]
        %v2905 = vld [vmem:[#allocation7 + $0xf0] sm:$0xff]
        %v2906 = vld [vmem:[#allocation7 + $0xf8] sm:$0xff]
        %v2907 = vld [vmem:[%s4] sm:$0x3]
        %v2909 = vlaneseq
        %v2910 = vshrl.u32 %v2909, 7
        %v2911 = vsub.s32 0, %v2910
        %v2912 = vrot.slane %v2907, %v2911
        %v2913 = vlaneseq
        %v2914 = vshrl.u32 %v2913, 7
        %v2915 = vsub.s32 1, %v2914
        %v2916 = vrot.slane %v2907, %v2915
        %v2951 = vunpack.c.l.b16 %v2875
        %v2952 = vunpack.c.h.b16 %v2875
        %v2953 = vunpack.c.l.b16 %v2876
        %v2954 = vunpack.c.h.b16 %v2876
        %v2955 = vunpack.c.l.b16 %v2877
        %v2956 = vunpack.c.h.b16 %v2877
        %v2957 = vunpack.c.l.b16 %v2878
        %v2958 = vunpack.c.h.b16 %v2878
        %v2959 = vunpack.c.l.b16 %v2879
        %v2960 = vunpack.c.h.b16 %v2879
        %v2961 = vunpack.c.l.b16 %v2880
        %v2962 = vunpack.c.h.b16 %v2880
        %v2963 = vunpack.c.l.b16 %v2881
        %v2964 = vunpack.c.h.b16 %v2881
        %v2965 = vunpack.c.l.b16 %v2882
        %v2966 = vunpack.c.h.b16 %v2882
        %v2967 = vunpack.c.l.b16 %v2883
        %v2968 = vunpack.c.h.b16 %v2883
        %v2969 = vunpack.c.l.b16 %v2884
        %v2970 = vunpack.c.h.b16 %v2884
        %v2971 = vunpack.c.l.b16 %v2885
        %v2972 = vunpack.c.h.b16 %v2885
        %v2973 = vunpack.c.l.b16 %v2886
        %v2974 = vunpack.c.h.b16 %v2886
        %v2975 = vunpack.c.l.b16 %v2887
        %v2976 = vunpack.c.h.b16 %v2887
        %v2977 = vunpack.c.l.b16 %v2888
        %v2978 = vunpack.c.h.b16 %v2888
        %v2979 = vunpack.c.l.b16 %v2889
        %v2980 = vunpack.c.h.b16 %v2889
        %v2981 = vunpack.c.l.b16 %v2890
        %v2982 = vunpack.c.h.b16 %v2890
        %v2983 = vunpack.c.l.b16 %v2891
        %v2984 = vunpack.c.h.b16 %v2891
        %v2985 = vunpack.c.l.b16 %v2892
        %v2986 = vunpack.c.h.b16 %v2892
        %v2987 = vunpack.c.l.b16 %v2893
        %v2988 = vunpack.c.h.b16 %v2893
        %v2989 = vunpack.c.l.b16 %v2894
        %v2990 = vunpack.c.h.b16 %v2894
        %v2991 = vunpack.c.l.b16 %v2895
        %v2992 = vunpack.c.h.b16 %v2895
        %v2993 = vunpack.c.l.b16 %v2896
        %v2994 = vunpack.c.h.b16 %v2896
        %v2995 = vunpack.c.l.b16 %v2897
        %v2996 = vunpack.c.h.b16 %v2897
        %v2997 = vunpack.c.l.b16 %v2898
        %v2998 = vunpack.c.h.b16 %v2898
        %v2999 = vunpack.c.l.b16 %v2899
        %v3000 = vunpack.c.h.b16 %v2899
        %v3001 = vunpack.c.l.b16 %v2900
        %v3002 = vunpack.c.h.b16 %v2900
        %v3003 = vunpack.c.l.b16 %v2901
        %v3004 = vunpack.c.h.b16 %v2901
        %v3005 = vunpack.c.l.b16 %v2902
        %v3006 = vunpack.c.h.b16 %v2902
        %v3007 = vunpack.c.l.b16 %v2903
        %v3008 = vunpack.c.h.b16 %v2903
        %v3009 = vunpack.c.l.b16 %v2904
        %v3010 = vunpack.c.h.b16 %v2904
        %v3011 = vunpack.c.l.b16 %v2905
        %v3012 = vunpack.c.h.b16 %v2905
        %v3013 = vunpack.c.l.b16 %v2906
        %v3014 = vunpack.c.h.b16 %v2906
        %v3015 = vpack.c.b16 %v2953, %v2951
        %v3016 = vpack.c.b16 %v2954, %v2952
        %v3017 = vpack.c.b16 %v2957, %v2955
        %v3018 = vpack.c.b16 %v2958, %v2956
        %v3019 = vpack.c.b16 %v2961, %v2959
        %v3020 = vpack.c.b16 %v2962, %v2960
        %v3021 = vpack.c.b16 %v2965, %v2963
        %v3022 = vpack.c.b16 %v2966, %v2964
        %v3023 = vpack.c.b16 %v2969, %v2967
        %v3024 = vpack.c.b16 %v2970, %v2968
        %v3025 = vpack.c.b16 %v2973, %v2971
        %v3026 = vpack.c.b16 %v2974, %v2972
        %v3027 = vpack.c.b16 %v2977, %v2975
        %v3028 = vpack.c.b16 %v2978, %v2976
        %v3029 = vpack.c.b16 %v2981, %v2979
        %v3030 = vpack.c.b16 %v2982, %v2980
        %v3031 = vpack.c.b16 %v2985, %v2983
        %v3032 = vpack.c.b16 %v2986, %v2984
        %v3033 = vpack.c.b16 %v2989, %v2987
        %v3034 = vpack.c.b16 %v2990, %v2988
        %v3035 = vpack.c.b16 %v2993, %v2991
        %v3036 = vpack.c.b16 %v2994, %v2992
        %v3037 = vpack.c.b16 %v2997, %v2995
        %v3038 = vpack.c.b16 %v2998, %v2996
        %v3039 = vpack.c.b16 %v3001, %v2999
        %v3040 = vpack.c.b16 %v3002, %v3000
        %v3041 = vpack.c.b16 %v3005, %v3003
        %v3042 = vpack.c.b16 %v3006, %v3004
        %v3043 = vpack.c.b16 %v3009, %v3007
        %v3044 = vpack.c.b16 %v3010, %v3008
        %v3045 = vpack.c.b16 %v3013, %v3011
        %v3046 = vpack.c.b16 %v3014, %v3012
        %3079 = vmatprep.subr.bf16.mxu0 %v3016
        %3080 = vmatpush1.bf16.msra.mxu0 %v3015
        %3081 = vmatprep.subr.bf16.mxu0 %v3018
        %3082 = vmatpush1.bf16.msra.mxu0 %v3017
        %3083 = vmatprep.subr.bf16.mxu0 %v3020
        %3084 = vmatpush1.bf16.msra.mxu0 %v3019
        %3085 = vmatprep.subr.bf16.mxu0 %v3022
        %3086 = vmatpush1.bf16.msra.mxu0 %v3021
        %3087 = vmatprep.subr.bf16.mxu0 %v3024
        %3088 = vmatpush1.bf16.msra.mxu0 %v3023
        %3089 = vmatprep.subr.bf16.mxu0 %v3026
        %3090 = vmatpush1.bf16.msra.mxu0 %v3025
        %3091 = vmatprep.subr.bf16.mxu0 %v3028
        %3092 = vmatpush1.bf16.msra.mxu0 %v3027
        %3093 = vmatprep.subr.bf16.mxu0 %v3030
        %3094 = vmatpush1.bf16.msra.mxu0 %v3029
        %3095 = vmatprep.subr.bf16.mxu0 %v3032
        %3096 = vmatpush1.bf16.msra.mxu0 %v3031
        %3097 = vmatprep.subr.bf16.mxu0 %v3034
        %3098 = vmatpush1.bf16.msra.mxu0 %v3033
        %3099 = vmatprep.subr.bf16.mxu0 %v3036
        %3100 = vmatpush1.bf16.msra.mxu0 %v3035
        %3101 = vmatprep.subr.bf16.mxu0 %v3038
        %3102 = vmatpush1.bf16.msra.mxu0 %v3037
        %3103 = vmatprep.subr.bf16.mxu0 %v3040
        %3104 = vmatpush1.bf16.msra.mxu0 %v3039
        %3105 = vmatprep.subr.bf16.mxu0 %v3042
        %3106 = vmatpush1.bf16.msra.mxu0 %v3041
        %3107 = vmatprep.subr.bf16.mxu0 %v3044
        %3108 = vmatpush1.bf16.msra.mxu0 %v3043
        %3109 = vmatprep.subr.bf16.mxu0 %v3046
        %3110 = vmatpush1.bf16.msra.mxu0 %v3045
        %3111 = vmatprep.mubr.bf16.mxu0 %v2844
        %3112 = vmatmul.mubr.bf16.gmra.mrb[0].mxu0 %v2843
        %v3113 = vpop.f32.mrb[0].mxu0
        %v3114 = vadd.f32 %v2912, %v3113
        %v3115 = vpop.f32.mrb[0].mxu0
        %v3116 = vadd.f32 %v2916, %v3115
        %v3117 = vpop.f32.mrb[0].mxu0
        %v3118 = vadd.f32 %v2912, %v3117
        %v3119 = vpop.f32.mrb[0].mxu0
        %v3120 = vadd.f32 %v2916, %v3119
        %3121 = vmatprep.mubr.bf16.mxu0 %v2846
        %3122 = vmatmul.mubr.bf16.gmra.mrb[0].mxu0 %v2845
        %v3123 = vpop.f32.mrb[0].mxu0
        %v3124 = vadd.f32 %v2912, %v3123
        %v3125 = vpop.f32.mrb[0].mxu0
        %v3126 = vadd.f32 %v2916, %v3125
        %v3127 = vpop.f32.mrb[0].mxu0
        %v3128 = vadd.f32 %v2912, %v3127
        %v3129 = vpop.f32.mrb[0].mxu0
        %v3130 = vadd.f32 %v2916, %v3129
        %3131 = vmatprep.mubr.bf16.mxu0 %v2848
        %3132 = vmatmul.mubr.bf16.gmra.mrb[0].mxu0 %v2847
        %v3133 = vpop.f32.mrb[0].mxu0
        %v3134 = vadd.f32 %v2912, %v3133
        %v3135 = vpop.f32.mrb[0].mxu0
        %v3136 = vadd.f32 %v2916, %v3135
        %v3137 = vpop.f32.mrb[0].mxu0
        %v3138 = vadd.f32 %v2912, %v3137
        %v3139 = vpop.f32.mrb[0].mxu0
        %v3140 = vadd.f32 %v2916, %v3139
        %3141 = vmatprep.mubr.bf16.mxu0 %v2850
        %3142 = vmatmul.mubr.bf16.gmra.mrb[0].mxu0 %v2849
        %v3143 = vpop.f32.mrb[0].mxu0
        %v3144 = vadd.f32 %v2912, %v3143
        %v3145 = vpop.f32.mrb[0].mxu0
        %v3146 = vadd.f32 %v2916, %v3145
        %v3147 = vpop.f32.mrb[0].mxu0
        %v3148 = vadd.f32 %v2912, %v3147
        %v3149 = vpop.f32.mrb[0].mxu0
        %v3150 = vadd.f32 %v2916, %v3149
        %3151 = vmatprep.mubr.bf16.mxu0 %v2852
        %3152 = vmatmul.mubr.bf16.gmra.mrb[0].mxu0 %v2851
        %v3153 = vpop.f32.mrb[0].mxu0
        %v3154 = vadd.f32 %v2912, %v3153
        %v3155 = vpop.f32.mrb[0].mxu0
        %v3156 = vadd.f32 %v2916, %v3155
        %v3157 = vpop.f32.mrb[0].mxu0
        %v3158 = vadd.f32 %v2912, %v3157
        %v3159 = vpop.f32.mrb[0].mxu0
        %v3160 = vadd.f32 %v2916, %v3159
        %3161 = vmatprep.mubr.bf16.mxu0 %v2854
        %3162 = vmatmul.mubr.bf16.gmra.mrb[0].mxu0 %v2853
        %v3163 = vpop.f32.mrb[0].mxu0
        %v3164 = vadd.f32 %v2912, %v3163
        %v3165 = vpop.f32.mrb[0].mxu0
        %v3166 = vadd.f32 %v2916, %v3165
        %v3167 = vpop.f32.mrb[0].mxu0
        %v3168 = vadd.f32 %v2912, %v3167
        %v3169 = vpop.f32.mrb[0].mxu0
        %v3170 = vadd.f32 %v2916, %v3169
        %3171 = vmatprep.mubr.bf16.mxu0 %v2856
        %3172 = vmatmul.mubr.bf16.gmra.mrb[0].mxu0 %v2855
        %v3173 = vpop.f32.mrb[0].mxu0
        %v3174 = vadd.f32 %v2912, %v3173
        %v3175 = vpop.f32.mrb[0].mxu0
        %v3176 = vadd.f32 %v2916, %v3175
        %v3177 = vpop.f32.mrb[0].mxu0
        %v3178 = vadd.f32 %v2912, %v3177
        %v3179 = vpop.f32.mrb[0].mxu0
        %v3180 = vadd.f32 %v2916, %v3179
        %3181 = vmatprep.mubr.bf16.mxu0 %v2858
        %3182 = vmatmul.mubr.bf16.gmra.mrb[0].mxu0 %v2857
        %v3183 = vpop.f32.mrb[0].mxu0
        %v3184 = vadd.f32 %v2912, %v3183
        %v3185 = vpop.f32.mrb[0].mxu0
        %v3186 = vadd.f32 %v2916, %v3185
        %v3187 = vpop.f32.mrb[0].mxu0
        %v3188 = vadd.f32 %v2912, %v3187
        %v3189 = vpop.f32.mrb[0].mxu0
        %v3190 = vadd.f32 %v2916, %v3189
        %3191 = vmatprep.mubr.bf16.mxu0 %v2860
        %3192 = vmatmul.mubr.bf16.gmra.mrb[0].mxu0 %v2859
        %v3193 = vpop.f32.mrb[0].mxu0
        %v3194 = vadd.f32 %v2912, %v3193
        %v3195 = vpop.f32.mrb[0].mxu0
        %v3196 = vadd.f32 %v2916, %v3195
        %v3197 = vpop.f32.mrb[0].mxu0
        %v3198 = vadd.f32 %v2912, %v3197
        %v3199 = vpop.f32.mrb[0].mxu0
        %v3200 = vadd.f32 %v2916, %v3199
        %3201 = vmatprep.mubr.bf16.mxu0 %v2862
        %3202 = vmatmul.mubr.bf16.gmra.mrb[0].mxu0 %v2861
        %v3203 = vpop.f32.mrb[0].mxu0
        %v3204 = vadd.f32 %v2912, %v3203
        %v3205 = vpop.f32.mrb[0].mxu0
        %v3206 = vadd.f32 %v2916, %v3205
        %v3207 = vpop.f32.mrb[0].mxu0
        %v3208 = vadd.f32 %v2912, %v3207
        %v3209 = vpop.f32.mrb[0].mxu0
        %v3210 = vadd.f32 %v2916, %v3209
        %3211 = vmatprep.mubr.bf16.mxu0 %v2864
        %3212 = vmatmul.mubr.bf16.gmra.mrb[0].mxu0 %v2863
        %v3213 = vpop.f32.mrb[0].mxu0
        %v3214 = vadd.f32 %v2912, %v3213
        %v3215 = vpop.f32.mrb[0].mxu0
        %v3216 = vadd.f32 %v2916, %v3215
        %v3217 = vpop.f32.mrb[0].mxu0
        %v3218 = vadd.f32 %v2912, %v3217
        %v3219 = vpop.f32.mrb[0].mxu0
        %v3220 = vadd.f32 %v2916, %v3219
        %3221 = vmatprep.mubr.bf16.mxu0 %v2866
        %3222 = vmatmul.mubr.bf16.gmra.mrb[0].mxu0 %v2865
        %v3223 = vpop.f32.mrb[0].mxu0
        %v3224 = vadd.f32 %v2912, %v3223
        %v3225 = vpop.f32.mrb[0].mxu0
        %v3226 = vadd.f32 %v2916, %v3225
        %v3227 = vpop.f32.mrb[0].mxu0
        %v3228 = vadd.f32 %v2912, %v3227
        %v3229 = vpop.f32.mrb[0].mxu0
        %v3230 = vadd.f32 %v2916, %v3229
        %3231 = vmatprep.mubr.bf16.mxu0 %v2868
        %3232 = vmatmul.mubr.bf16.gmra.mrb[0].mxu0 %v2867
        %v3233 = vpop.f32.mrb[0].mxu0
        %v3234 = vadd.f32 %v2912, %v3233
        %v3235 = vpop.f32.mrb[0].mxu0
        %v3236 = vadd.f32 %v2916, %v3235
        %v3237 = vpop.f32.mrb[0].mxu0
        %v3238 = vadd.f32 %v2912, %v3237
        %v3239 = vpop.f32.mrb[0].mxu0
        %v3240 = vadd.f32 %v2916, %v3239
        %3241 = vmatprep.mubr.bf16.mxu0 %v2870
        %3242 = vmatmul.mubr.bf16.gmra.mrb[0].mxu0 %v2869
        %v3243 = vpop.f32.mrb[0].mxu0
        %v3244 = vadd.f32 %v2912, %v3243
        %v3245 = vpop.f32.mrb[0].mxu0
        %v3246 = vadd.f32 %v2916, %v3245
        %v3247 = vpop.f32.mrb[0].mxu0
        %v3248 = vadd.f32 %v2912, %v3247
        %v3249 = vpop.f32.mrb[0].mxu0
        %v3250 = vadd.f32 %v2916, %v3249
        %3251 = vmatprep.mubr.bf16.mxu0 %v2872
        %3252 = vmatmul.mubr.bf16.gmra.mrb[0].mxu0 %v2871
        %v3253 = vpop.f32.mrb[0].mxu0
        %v3254 = vadd.f32 %v2912, %v3253
        %v3255 = vpop.f32.mrb[0].mxu0
        %v3256 = vadd.f32 %v2916, %v3255
        %v3257 = vpop.f32.mrb[0].mxu0
        %v3258 = vadd.f32 %v2912, %v3257
        %v3259 = vpop.f32.mrb[0].mxu0
        %v3260 = vadd.f32 %v2916, %v3259
        %3261 = vmatprep.mubr.bf16.mxu0 %v2874
        %3262 = vmatmul.mubr.bf16.gmra.mrb[0].mxu0 %v2873
        %v3263 = vpop.f32.mrb[0].mxu0
        %v3264 = vadd.f32 %v2912, %v3263
        %v3265 = vpop.f32.mrb[0].mxu0
        %v3266 = vadd.f32 %v2916, %v3265
        %v3267 = vpop.f32.mrb[0].mxu0
        %v3268 = vadd.f32 %v2912, %v3267
        %v3269 = vpop.f32.mrb[0].mxu0
        %v3270 = vadd.f32 %v2916, %v3269
        %3271 = vdwg.mxu0
        %v3272 = vmax.f32 %v3114, 0.0
        %v3273 = vmax.f32 %v3116, 0.0
        %v3274 = vmax.f32 %v3118, 0.0
        %v3275 = vmax.f32 %v3120, 0.0
        %v3276 = vmax.f32 %v3124, 0.0
        %v3277 = vmax.f32 %v3126, 0.0
        %v3278 = vmax.f32 %v3128, 0.0
        %v3279 = vmax.f32 %v3130, 0.0
        %v3280 = vmax.f32 %v3134, 0.0
        %v3281 = vmax.f32 %v3136, 0.0
        %v3282 = vmax.f32 %v3138, 0.0
        %v3283 = vmax.f32 %v3140, 0.0
        %v3284 = vmax.f32 %v3144, 0.0
        %v3285 = vmax.f32 %v3146, 0.0
        %v3286 = vmax.f32 %v3148, 0.0
        %v3287 = vmax.f32 %v3150, 0.0
        %v3288 = vmax.f32 %v3154, 0.0
        %v3289 = vmax.f32 %v3156, 0.0
        %v3290 = vmax.f32 %v3158, 0.0
        %v3291 = vmax.f32 %v3160, 0.0
        %v3292 = vmax.f32 %v3164, 0.0
        %v3293 = vmax.f32 %v3166, 0.0
        %v3294 = vmax.f32 %v3168, 0.0
        %v3295 = vmax.f32 %v3170, 0.0
        %v3296 = vmax.f32 %v3174, 0.0
        %v3297 = vmax.f32 %v3176, 0.0
        %v3298 = vmax.f32 %v3178, 0.0
        %v3299 = vmax.f32 %v3180, 0.0
        %v3300 = vmax.f32 %v3184, 0.0
        %v3301 = vmax.f32 %v3186, 0.0
        %v3302 = vmax.f32 %v3188, 0.0
        %v3303 = vmax.f32 %v3190, 0.0
        %v3304 = vmax.f32 %v3194, 0.0
        %v3305 = vmax.f32 %v3196, 0.0
        %v3306 = vmax.f32 %v3198, 0.0
        %v3307 = vmax.f32 %v3200, 0.0
        %v3308 = vmax.f32 %v3204, 0.0
        %v3309 = vmax.f32 %v3206, 0.0
        %v3310 = vmax.f32 %v3208, 0.0
        %v3311 = vmax.f32 %v3210, 0.0
        %v3312 = vmax.f32 %v3214, 0.0
        %v3313 = vmax.f32 %v3216, 0.0
        %v3314 = vmax.f32 %v3218, 0.0
        %v3315 = vmax.f32 %v3220, 0.0
        %v3316 = vmax.f32 %v3224, 0.0
        %v3317 = vmax.f32 %v3226, 0.0
        %v3318 = vmax.f32 %v3228, 0.0
        %v3319 = vmax.f32 %v3230, 0.0
        %v3320 = vmax.f32 %v3234, 0.0
        %v3321 = vmax.f32 %v3236, 0.0
        %v3322 = vmax.f32 %v3238, 0.0
        %v3323 = vmax.f32 %v3240, 0.0
        %v3324 = vmax.f32 %v3244, 0.0
        %v3325 = vmax.f32 %v3246, 0.0
        %v3326 = vmax.f32 %v3248, 0.0
        %v3327 = vmax.f32 %v3250, 0.0
        %v3328 = vmax.f32 %v3254, 0.0
        %v3329 = vmax.f32 %v3256, 0.0
        %v3330 = vmax.f32 %v3258, 0.0
        %v3331 = vmax.f32 %v3260, 0.0
        %v3332 = vmax.f32 %v3264, 0.0
        %v3333 = vmax.f32 %v3266, 0.0
        %v3334 = vmax.f32 %v3268, 0.0
        %v3335 = vmax.f32 %v3270, 0.0
        %v3336 = vpack.c.bf16 %v3274, %v3272
        %v3337 = vpack.c.bf16 %v3275, %v3273
        %v3338 = vpack.c.bf16 %v3278, %v3276
        %v3339 = vpack.c.bf16 %v3279, %v3277
        %v3340 = vpack.c.bf16 %v3282, %v3280
        %v3341 = vpack.c.bf16 %v3283, %v3281
        %v3342 = vpack.c.bf16 %v3286, %v3284
        %v3343 = vpack.c.bf16 %v3287, %v3285
        %v3344 = vpack.c.bf16 %v3290, %v3288
        %v3345 = vpack.c.bf16 %v3291, %v3289
        %v3346 = vpack.c.bf16 %v3294, %v3292
        %v3347 = vpack.c.bf16 %v3295, %v3293
        %v3348 = vpack.c.bf16 %v3298, %v3296
        %v3349 = vpack.c.bf16 %v3299, %v3297
        %v3350 = vpack.c.bf16 %v3302, %v3300
        %v3351 = vpack.c.bf16 %v3303, %v3301
        %v3352 = vpack.c.bf16 %v3306, %v3304
        %v3353 = vpack.c.bf16 %v3307, %v3305
        %v3354 = vpack.c.bf16 %v3310, %v3308
        %v3355 = vpack.c.bf16 %v3311, %v3309
        %v3356 = vpack.c.bf16 %v3314, %v3312
        %v3357 = vpack.c.bf16 %v3315, %v3313
        %v3358 = vpack.c.bf16 %v3318, %v3316
        %v3359 = vpack.c.bf16 %v3319, %v3317
        %v3360 = vpack.c.bf16 %v3322, %v3320
        %v3361 = vpack.c.bf16 %v3323, %v3321
        %v3362 = vpack.c.bf16 %v3326, %v3324
        %v3363 = vpack.c.bf16 %v3327, %v3325
        %v3364 = vpack.c.bf16 %v3330, %v3328
        %v3365 = vpack.c.bf16 %v3331, %v3329
        %v3366 = vpack.c.bf16 %v3334, %v3332
        %v3367 = vpack.c.bf16 %v3335, %v3333
        %v3368 = vld [vmem:[#allocation8] sm:$0xff]
        %v3369 = vld [vmem:[#allocation8 + $0x8] sm:$0xff]
        %v3370 = vld [vmem:[#allocation8 + $0x10] sm:$0xff]
        %v3371 = vld [vmem:[#allocation8 + $0x18] sm:$0xff]
        %v3372 = vld [vmem:[#allocation8 + $0x20] sm:$0xff]
        %v3373 = vld [vmem:[#allocation8 + $0x28] sm:$0xff]
        %v3374 = vld [vmem:[#allocation8 + $0x30] sm:$0xff]
        %v3375 = vld [vmem:[#allocation8 + $0x38] sm:$0xff]
        %v3376 = vld [vmem:[#allocation8 + $0x40] sm:$0xff]
        %v3377 = vld [vmem:[#allocation8 + $0x48] sm:$0xff]
        %v3378 = vld [vmem:[#allocation8 + $0x50] sm:$0xff]
        %v3379 = vld [vmem:[#allocation8 + $0x58] sm:$0xff]
        %v3380 = vld [vmem:[#allocation8 + $0x60] sm:$0xff]
        %v3381 = vld [vmem:[#allocation8 + $0x68] sm:$0xff]
        %v3382 = vld [vmem:[#allocation8 + $0x70] sm:$0xff]
        %v3383 = vld [vmem:[#allocation8 + $0x78] sm:$0xff]
        %v3384 = vld [vmem:[#allocation8 + $0x80] sm:$0xff]
        %v3385 = vld [vmem:[#allocation8 + $0x88] sm:$0xff]
        %v3386 = vld [vmem:[#allocation8 + $0x90] sm:$0xff]
        %v3387 = vld [vmem:[#allocation8 + $0x98] sm:$0xff]
        %v3388 = vld [vmem:[#allocation8 + $0xa0] sm:$0xff]
        %v3389 = vld [vmem:[#allocation8 + $0xa8] sm:$0xff]
        %v3390 = vld [vmem:[#allocation8 + $0xb0] sm:$0xff]
        %v3391 = vld [vmem:[#allocation8 + $0xb8] sm:$0xff]
        %v3392 = vld [vmem:[#allocation8 + $0xc0] sm:$0xff]
        %v3393 = vld [vmem:[#allocation8 + $0xc8] sm:$0xff]
        %v3394 = vld [vmem:[#allocation8 + $0xd0] sm:$0xff]
        %v3395 = vld [vmem:[#allocation8 + $0xd8] sm:$0xff]
        %v3396 = vld [vmem:[#allocation8 + $0xe0] sm:$0xff]
        %v3397 = vld [vmem:[#allocation8 + $0xe8] sm:$0xff]
        %v3398 = vld [vmem:[#allocation8 + $0xf0] sm:$0xff]
        %v3399 = vld [vmem:[#allocation8 + $0xf8] sm:$0xff]
        %v3400 = vld [vmem:[%s6] sm:$0x3]
        %v3402 = vlaneseq
        %v3403 = vshrl.u32 %v3402, 7
        %v3404 = vsub.s32 0, %v3403
        %v3405 = vrot.slane %v3400, %v3404
        %v3406 = vlaneseq
        %v3407 = vshrl.u32 %v3406, 7
        %v3408 = vsub.s32 1, %v3407
        %v3409 = vrot.slane %v3400, %v3408
        %v3444 = vunpack.c.l.b16 %v3368
        %v3445 = vunpack.c.h.b16 %v3368
        %v3446 = vunpack.c.l.b16 %v3369
        %v3447 = vunpack.c.h.b16 %v3369
        %v3448 = vunpack.c.l.b16 %v3370
        %v3449 = vunpack.c.h.b16 %v3370
        %v3450 = vunpack.c.l.b16 %v3371
        %v3451 = vunpack.c.h.b16 %v3371
        %v3452 = vunpack.c.l.b16 %v3372
        %v3453 = vunpack.c.h.b16 %v3372
        %v3454 = vunpack.c.l.b16 %v3373
        %v3455 = vunpack.c.h.b16 %v3373
        %v3456 = vunpack.c.l.b16 %v3374
        %v3457 = vunpack.c.h.b16 %v3374
        %v3458 = vunpack.c.l.b16 %v3375
        %v3459 = vunpack.c.h.b16 %v3375
        %v3460 = vunpack.c.l.b16 %v3376
        %v3461 = vunpack.c.h.b16 %v3376
        %v3462 = vunpack.c.l.b16 %v3377
        %v3463 = vunpack.c.h.b16 %v3377
        %v3464 = vunpack.c.l.b16 %v3378
        %v3465 = vunpack.c.h.b16 %v3378
        %v3466 = vunpack.c.l.b16 %v3379
        %v3467 = vunpack.c.h.b16 %v3379
        %v3468 = vunpack.c.l.b16 %v3380
        %v3469 = vunpack.c.h.b16 %v3380
        %v3470 = vunpack.c.l.b16 %v3381
        %v3471 = vunpack.c.h.b16 %v3381
        %v3472 = vunpack.c.l.b16 %v3382
        %v3473 = vunpack.c.h.b16 %v3382
        %v3474 = vunpack.c.l.b16 %v3383
        %v3475 = vunpack.c.h.b16 %v3383
        %v3476 = vunpack.c.l.b16 %v3384
        %v3477 = vunpack.c.h.b16 %v3384
        %v3478 = vunpack.c.l.b16 %v3385
        %v3479 = vunpack.c.h.b16 %v3385
        %v3480 = vunpack.c.l.b16 %v3386
        %v3481 = vunpack.c.h.b16 %v3386
        %v3482 = vunpack.c.l.b16 %v3387
        %v3483 = vunpack.c.h.b16 %v3387
        %v3484 = vunpack.c.l.b16 %v3388
        %v3485 = vunpack.c.h.b16 %v3388
        %v3486 = vunpack.c.l.b16 %v3389
        %v3487 = vunpack.c.h.b16 %v3389
        %v3488 = vunpack.c.l.b16 %v3390
        %v3489 = vunpack.c.h.b16 %v3390
        %v3490 = vunpack.c.l.b16 %v3391
        %v3491 = vunpack.c.h.b16 %v3391
        %v3492 = vunpack.c.l.b16 %v3392
        %v3493 = vunpack.c.h.b16 %v3392
        %v3494 = vunpack.c.l.b16 %v3393
        %v3495 = vunpack.c.h.b16 %v3393
        %v3496 = vunpack.c.l.b16 %v3394
        %v3497 = vunpack.c.h.b16 %v3394
        %v3498 = vunpack.c.l.b16 %v3395
        %v3499 = vunpack.c.h.b16 %v3395
        %v3500 = vunpack.c.l.b16 %v3396
        %v3501 = vunpack.c.h.b16 %v3396
        %v3502 = vunpack.c.l.b16 %v3397
        %v3503 = vunpack.c.h.b16 %v3397
        %v3504 = vunpack.c.l.b16 %v3398
        %v3505 = vunpack.c.h.b16 %v3398
        %v3506 = vunpack.c.l.b16 %v3399
        %v3507 = vunpack.c.h.b16 %v3399
        %v3508 = vpack.c.b16 %v3446, %v3444
        %v3509 = vpack.c.b16 %v3447, %v3445
        %v3510 = vpack.c.b16 %v3450, %v3448
        %v3511 = vpack.c.b16 %v3451, %v3449
        %v3512 = vpack.c.b16 %v3454, %v3452
        %v3513 = vpack.c.b16 %v3455, %v3453
        %v3514 = vpack.c.b16 %v3458, %v3456
        %v3515 = vpack.c.b16 %v3459, %v3457
        %v3516 = vpack.c.b16 %v3462, %v3460
        %v3517 = vpack.c.b16 %v3463, %v3461
        %v3518 = vpack.c.b16 %v3466, %v3464
        %v3519 = vpack.c.b16 %v3467, %v3465
        %v3520 = vpack.c.b16 %v3470, %v3468
        %v3521 = vpack.c.b16 %v3471, %v3469
        %v3522 = vpack.c.b16 %v3474, %v3472
        %v3523 = vpack.c.b16 %v3475, %v3473
        %v3524 = vpack.c.b16 %v3478, %v3476
        %v3525 = vpack.c.b16 %v3479, %v3477
        %v3526 = vpack.c.b16 %v3482, %v3480
        %v3527 = vpack.c.b16 %v3483, %v3481
        %v3528 = vpack.c.b16 %v3486, %v3484
        %v3529 = vpack.c.b16 %v3487, %v3485
        %v3530 = vpack.c.b16 %v3490, %v3488
        %v3531 = vpack.c.b16 %v3491, %v3489
        %v3532 = vpack.c.b16 %v3494, %v3492
        %v3533 = vpack.c.b16 %v3495, %v3493
        %v3534 = vpack.c.b16 %v3498, %v3496
        %v3535 = vpack.c.b16 %v3499, %v3497
        %v3536 = vpack.c.b16 %v3502, %v3500
        %v3537 = vpack.c.b16 %v3503, %v3501
        %v3538 = vpack.c.b16 %v3506, %v3504
        %v3539 = vpack.c.b16 %v3507, %v3505
        %3572 = vmatprep.subr.bf16.mxu0 %v3509
        %3573 = vmatpush1.bf16.msra.mxu0 %v3508
        %3574 = vmatprep.subr.bf16.mxu0 %v3511
        %3575 = vmatpush1.bf16.msra.mxu0 %v3510
        %3576 = vmatprep.subr.bf16.mxu0 %v3513
        %3577 = vmatpush1.bf16.msra.mxu0 %v3512
        %3578 = vmatprep.subr.bf16.mxu0 %v3515
        %3579 = vmatpush1.bf16.msra.mxu0 %v3514
        %3580 = vmatprep.subr.bf16.mxu0 %v3517
        %3581 = vmatpush1.bf16.msra.mxu0 %v3516
        %3582 = vmatprep.subr.bf16.mxu0 %v3519
        %3583 = vmatpush1.bf16.msra.mxu0 %v3518
        %3584 = vmatprep.subr.bf16.mxu0 %v3521
        %3585 = vmatpush1.bf16.msra.mxu0 %v3520
        %3586 = vmatprep.subr.bf16.mxu0 %v3523
        %3587 = vmatpush1.bf16.msra.mxu0 %v3522
        %3588 = vmatprep.subr.bf16.mxu0 %v3525
        %3589 = vmatpush1.bf16.msra.mxu0 %v3524
        %3590 = vmatprep.subr.bf16.mxu0 %v3527
        %3591 = vmatpush1.bf16.msra.mxu0 %v3526
        %3592 = vmatprep.subr.bf16.mxu0 %v3529
        %3593 = vmatpush1.bf16.msra.mxu0 %v3528
        %3594 = vmatprep.subr.bf16.mxu0 %v3531
        %3595 = vmatpush1.bf16.msra.mxu0 %v3530
        %3596 = vmatprep.subr.bf16.mxu0 %v3533
        %3597 = vmatpush1.bf16.msra.mxu0 %v3532
        %3598 = vmatprep.subr.bf16.mxu0 %v3535
        %3599 = vmatpush1.bf16.msra.mxu0 %v3534
        %3600 = vmatprep.subr.bf16.mxu0 %v3537
        %3601 = vmatpush1.bf16.msra.mxu0 %v3536
        %3602 = vmatprep.subr.bf16.mxu0 %v3539
        %3603 = vmatpush1.bf16.msra.mxu0 %v3538
        %3604 = vmatprep.mubr.bf16.mxu0 %v3337
        %3605 = vmatmul.mubr.bf16.gmra.mrb[0].mxu0 %v3336
        %v3606 = vpop.f32.mrb[0].mxu0
        %v3607 = vadd.f32 %v3405, %v3606
        %v3608 = vpop.f32.mrb[0].mxu0
        %v3609 = vadd.f32 %v3409, %v3608
        %v3610 = vpop.f32.mrb[0].mxu0
        %v3611 = vadd.f32 %v3405, %v3610
        %v3612 = vpop.f32.mrb[0].mxu0
        %v3613 = vadd.f32 %v3409, %v3612
        %3614 = vmatprep.mubr.bf16.mxu0 %v3339
        %3615 = vmatmul.mubr.bf16.gmra.mrb[0].mxu0 %v3338
        %v3616 = vpop.f32.mrb[0].mxu0
        %v3617 = vadd.f32 %v3405, %v3616
        %v3618 = vpop.f32.mrb[0].mxu0
        %v3619 = vadd.f32 %v3409, %v3618
        %v3620 = vpop.f32.mrb[0].mxu0
        %v3621 = vadd.f32 %v3405, %v3620
        %v3622 = vpop.f32.mrb[0].mxu0
        %v3623 = vadd.f32 %v3409, %v3622
        %3624 = vmatprep.mubr.bf16.mxu0 %v3341
        %3625 = vmatmul.mubr.bf16.gmra.mrb[0].mxu0 %v3340
        %v3626 = vpop.f32.mrb[0].mxu0
        %v3627 = vadd.f32 %v3405, %v3626
        %v3628 = vpop.f32.mrb[0].mxu0
        %v3629 = vadd.f32 %v3409, %v3628
        %v3630 = vpop.f32.mrb[0].mxu0
        %v3631 = vadd.f32 %v3405, %v3630
        %v3632 = vpop.f32.mrb[0].mxu0
        %v3633 = vadd.f32 %v3409, %v3632
        %3634 = vmatprep.mubr.bf16.mxu0 %v3343
        %3635 = vmatmul.mubr.bf16.gmra.mrb[0].mxu0 %v3342
        %v3636 = vpop.f32.mrb[0].mxu0
        %v3637 = vadd.f32 %v3405, %v3636
        %v3638 = vpop.f32.mrb[0].mxu0
        %v3639 = vadd.f32 %v3409, %v3638
        %v3640 = vpop.f32.mrb[0].mxu0
        %v3641 = vadd.f32 %v3405, %v3640
        %v3642 = vpop.f32.mrb[0].mxu0
        %v3643 = vadd.f32 %v3409, %v3642
        %3644 = vmatprep.mubr.bf16.mxu0 %v3345
        %3645 = vmatmul.mubr.bf16.gmra.mrb[0].mxu0 %v3344
        %v3646 = vpop.f32.mrb[0].mxu0
        %v3647 = vadd.f32 %v3405, %v3646
        %v3648 = vpop.f32.mrb[0].mxu0
        %v3649 = vadd.f32 %v3409, %v3648
        %v3650 = vpop.f32.mrb[0].mxu0
        %v3651 = vadd.f32 %v3405, %v3650
        %v3652 = vpop.f32.mrb[0].mxu0
        %v3653 = vadd.f32 %v3409, %v3652
        %3654 = vmatprep.mubr.bf16.mxu0 %v3347
        %3655 = vmatmul.mubr.bf16.gmra.mrb[0].mxu0 %v3346
        %v3656 = vpop.f32.mrb[0].mxu0
        %v3657 = vadd.f32 %v3405, %v3656
        %v3658 = vpop.f32.mrb[0].mxu0
        %v3659 = vadd.f32 %v3409, %v3658
        %v3660 = vpop.f32.mrb[0].mxu0
        %v3661 = vadd.f32 %v3405, %v3660
        %v3662 = vpop.f32.mrb[0].mxu0
        %v3663 = vadd.f32 %v3409, %v3662
        %3664 = vmatprep.mubr.bf16.mxu0 %v3349
        %3665 = vmatmul.mubr.bf16.gmra.mrb[0].mxu0 %v3348
        %v3666 = vpop.f32.mrb[0].mxu0
        %v3667 = vadd.f32 %v3405, %v3666
        %v3668 = vpop.f32.mrb[0].mxu0
        %v3669 = vadd.f32 %v3409, %v3668
        %v3670 = vpop.f32.mrb[0].mxu0
        %v3671 = vadd.f32 %v3405, %v3670
        %v3672 = vpop.f32.mrb[0].mxu0
        %v3673 = vadd.f32 %v3409, %v3672
        %3674 = vmatprep.mubr.bf16.mxu0 %v3351
        %3675 = vmatmul.mubr.bf16.gmra.mrb[0].mxu0 %v3350
        %v3676 = vpop.f32.mrb[0].mxu0
        %v3677 = vadd.f32 %v3405, %v3676
        %v3678 = vpop.f32.mrb[0].mxu0
        %v3679 = vadd.f32 %v3409, %v3678
        %v3680 = vpop.f32.mrb[0].mxu0
        %v3681 = vadd.f32 %v3405, %v3680
        %v3682 = vpop.f32.mrb[0].mxu0
        %v3683 = vadd.f32 %v3409, %v3682
        %3684 = vmatprep.mubr.bf16.mxu0 %v3353
        %3685 = vmatmul.mubr.bf16.gmra.mrb[0].mxu0 %v3352
        %v3686 = vpop.f32.mrb[0].mxu0
        %v3687 = vadd.f32 %v3405, %v3686
        %v3688 = vpop.f32.mrb[0].mxu0
        %v3689 = vadd.f32 %v3409, %v3688
        %v3690 = vpop.f32.mrb[0].mxu0
        %v3691 = vadd.f32 %v3405, %v3690
        %v3692 = vpop.f32.mrb[0].mxu0
        %v3693 = vadd.f32 %v3409, %v3692
        %3694 = vmatprep.mubr.bf16.mxu0 %v3355
        %3695 = vmatmul.mubr.bf16.gmra.mrb[0].mxu0 %v3354
        %v3696 = vpop.f32.mrb[0].mxu0
        %v3697 = vadd.f32 %v3405, %v3696
        %v3698 = vpop.f32.mrb[0].mxu0
        %v3699 = vadd.f32 %v3409, %v3698
        %v3700 = vpop.f32.mrb[0].mxu0
        %v3701 = vadd.f32 %v3405, %v3700
        %v3702 = vpop.f32.mrb[0].mxu0
        %v3703 = vadd.f32 %v3409, %v3702
        %3704 = vmatprep.mubr.bf16.mxu0 %v3357
        %3705 = vmatmul.mubr.bf16.gmra.mrb[0].mxu0 %v3356
        %v3706 = vpop.f32.mrb[0].mxu0
        %v3707 = vadd.f32 %v3405, %v3706
        %v3708 = vpop.f32.mrb[0].mxu0
        %v3709 = vadd.f32 %v3409, %v3708
        %v3710 = vpop.f32.mrb[0].mxu0
        %v3711 = vadd.f32 %v3405, %v3710
        %v3712 = vpop.f32.mrb[0].mxu0
        %v3713 = vadd.f32 %v3409, %v3712
        %3714 = vmatprep.mubr.bf16.mxu0 %v3359
        %3715 = vmatmul.mubr.bf16.gmra.mrb[0].mxu0 %v3358
        %v3716 = vpop.f32.mrb[0].mxu0
        %v3717 = vadd.f32 %v3405, %v3716
        %v3718 = vpop.f32.mrb[0].mxu0
        %v3719 = vadd.f32 %v3409, %v3718
        %v3720 = vpop.f32.mrb[0].mxu0
        %v3721 = vadd.f32 %v3405, %v3720
        %v3722 = vpop.f32.mrb[0].mxu0
        %v3723 = vadd.f32 %v3409, %v3722
        %3724 = vmatprep.mubr.bf16.mxu0 %v3361
        %3725 = vmatmul.mubr.bf16.gmra.mrb[0].mxu0 %v3360
        %v3726 = vpop.f32.mrb[0].mxu0
        %v3727 = vadd.f32 %v3405, %v3726
        %v3728 = vpop.f32.mrb[0].mxu0
        %v3729 = vadd.f32 %v3409, %v3728
        %v3730 = vpop.f32.mrb[0].mxu0
        %v3731 = vadd.f32 %v3405, %v3730
        %v3732 = vpop.f32.mrb[0].mxu0
        %v3733 = vadd.f32 %v3409, %v3732
        %3734 = vmatprep.mubr.bf16.mxu0 %v3363
        %3735 = vmatmul.mubr.bf16.gmra.mrb[0].mxu0 %v3362
        %v3736 = vpop.f32.mrb[0].mxu0
        %v3737 = vadd.f32 %v3405, %v3736
        %v3738 = vpop.f32.mrb[0].mxu0
        %v3739 = vadd.f32 %v3409, %v3738
        %v3740 = vpop.f32.mrb[0].mxu0
        %v3741 = vadd.f32 %v3405, %v3740
        %v3742 = vpop.f32.mrb[0].mxu0
        %v3743 = vadd.f32 %v3409, %v3742
        %3744 = vmatprep.mubr.bf16.mxu0 %v3365
        %3745 = vmatmul.mubr.bf16.gmra.mrb[0].mxu0 %v3364
        %v3746 = vpop.f32.mrb[0].mxu0
        %v3747 = vadd.f32 %v3405, %v3746
        %v3748 = vpop.f32.mrb[0].mxu0
        %v3749 = vadd.f32 %v3409, %v3748
        %v3750 = vpop.f32.mrb[0].mxu0
        %v3751 = vadd.f32 %v3405, %v3750
        %v3752 = vpop.f32.mrb[0].mxu0
        %v3753 = vadd.f32 %v3409, %v3752
        %3754 = vmatprep.mubr.bf16.mxu0 %v3367
        %3755 = vmatmul.mubr.bf16.gmra.mrb[0].mxu0 %v3366
        %v3756 = vpop.f32.mrb[0].mxu0
        %v3757 = vadd.f32 %v3405, %v3756
        %v3758 = vpop.f32.mrb[0].mxu0
        %v3759 = vadd.f32 %v3409, %v3758
        %v3760 = vpop.f32.mrb[0].mxu0
        %v3761 = vadd.f32 %v3405, %v3760
        %v3762 = vpop.f32.mrb[0].mxu0
        %v3763 = vadd.f32 %v3409, %v3762
        %3764 = vdwg.mxu0
        %v3765 = vmax.f32 %v3607, 0.0
        %v3766 = vmax.f32 %v3609, 0.0
        %v3767 = vmax.f32 %v3611, 0.0
        %v3768 = vmax.f32 %v3613, 0.0
        %v3769 = vmax.f32 %v3617, 0.0
        %v3770 = vmax.f32 %v3619, 0.0
        %v3771 = vmax.f32 %v3621, 0.0
        %v3772 = vmax.f32 %v3623, 0.0
        %v3773 = vmax.f32 %v3627, 0.0
        %v3774 = vmax.f32 %v3629, 0.0
        %v3775 = vmax.f32 %v3631, 0.0
        %v3776 = vmax.f32 %v3633, 0.0
        %v3777 = vmax.f32 %v3637, 0.0
        %v3778 = vmax.f32 %v3639, 0.0
        %v3779 = vmax.f32 %v3641, 0.0
        %v3780 = vmax.f32 %v3643, 0.0
        %v3781 = vmax.f32 %v3647, 0.0
        %v3782 = vmax.f32 %v3649, 0.0
        %v3783 = vmax.f32 %v3651, 0.0
        %v3784 = vmax.f32 %v3653, 0.0
        %v3785 = vmax.f32 %v3657, 0.0
        %v3786 = vmax.f32 %v3659, 0.0
        %v3787 = vmax.f32 %v3661, 0.0
        %v3788 = vmax.f32 %v3663, 0.0
        %v3789 = vmax.f32 %v3667, 0.0
        %v3790 = vmax.f32 %v3669, 0.0
        %v3791 = vmax.f32 %v3671, 0.0
        %v3792 = vmax.f32 %v3673, 0.0
        %v3793 = vmax.f32 %v3677, 0.0
        %v3794 = vmax.f32 %v3679, 0.0
        %v3795 = vmax.f32 %v3681, 0.0
        %v3796 = vmax.f32 %v3683, 0.0
        %v3797 = vmax.f32 %v3687, 0.0
        %v3798 = vmax.f32 %v3689, 0.0
        %v3799 = vmax.f32 %v3691, 0.0
        %v3800 = vmax.f32 %v3693, 0.0
        %v3801 = vmax.f32 %v3697, 0.0
        %v3802 = vmax.f32 %v3699, 0.0
        %v3803 = vmax.f32 %v3701, 0.0
        %v3804 = vmax.f32 %v3703, 0.0
        %v3805 = vmax.f32 %v3707, 0.0
        %v3806 = vmax.f32 %v3709, 0.0
        %v3807 = vmax.f32 %v3711, 0.0
        %v3808 = vmax.f32 %v3713, 0.0
        %v3809 = vmax.f32 %v3717, 0.0
        %v3810 = vmax.f32 %v3719, 0.0
        %v3811 = vmax.f32 %v3721, 0.0
        %v3812 = vmax.f32 %v3723, 0.0
        %v3813 = vmax.f32 %v3727, 0.0
        %v3814 = vmax.f32 %v3729, 0.0
        %v3815 = vmax.f32 %v3731, 0.0
        %v3816 = vmax.f32 %v3733, 0.0
        %v3817 = vmax.f32 %v3737, 0.0
        %v3818 = vmax.f32 %v3739, 0.0
        %v3819 = vmax.f32 %v3741, 0.0
        %v3820 = vmax.f32 %v3743, 0.0
        %v3821 = vmax.f32 %v3747, 0.0
        %v3822 = vmax.f32 %v3749, 0.0
        %v3823 = vmax.f32 %v3751, 0.0
        %v3824 = vmax.f32 %v3753, 0.0
        %v3825 = vmax.f32 %v3757, 0.0
        %v3826 = vmax.f32 %v3759, 0.0
        %v3827 = vmax.f32 %v3761, 0.0
        %v3828 = vmax.f32 %v3763, 0.0
        %v3829 = vpack.c.bf16 %v3767, %v3765
        %v3830 = vpack.c.bf16 %v3768, %v3766
        %v3831 = vpack.c.bf16 %v3771, %v3769
        %v3832 = vpack.c.bf16 %v3772, %v3770
        %v3833 = vpack.c.bf16 %v3775, %v3773
        %v3834 = vpack.c.bf16 %v3776, %v3774
        %v3835 = vpack.c.bf16 %v3779, %v3777
        %v3836 = vpack.c.bf16 %v3780, %v3778
        %v3837 = vpack.c.bf16 %v3783, %v3781
        %v3838 = vpack.c.bf16 %v3784, %v3782
        %v3839 = vpack.c.bf16 %v3787, %v3785
        %v3840 = vpack.c.bf16 %v3788, %v3786
        %v3841 = vpack.c.bf16 %v3791, %v3789
        %v3842 = vpack.c.bf16 %v3792, %v3790
        %v3843 = vpack.c.bf16 %v3795, %v3793
        %v3844 = vpack.c.bf16 %v3796, %v3794
        %v3845 = vpack.c.bf16 %v3799, %v3797
        %v3846 = vpack.c.bf16 %v3800, %v3798
        %v3847 = vpack.c.bf16 %v3803, %v3801
        %v3848 = vpack.c.bf16 %v3804, %v3802
        %v3849 = vpack.c.bf16 %v3807, %v3805
        %v3850 = vpack.c.bf16 %v3808, %v3806
        %v3851 = vpack.c.bf16 %v3811, %v3809
        %v3852 = vpack.c.bf16 %v3812, %v3810
        %v3853 = vpack.c.bf16 %v3815, %v3813
        %v3854 = vpack.c.bf16 %v3816, %v3814
        %v3855 = vpack.c.bf16 %v3819, %v3817
        %v3856 = vpack.c.bf16 %v3820, %v3818
        %v3857 = vpack.c.bf16 %v3823, %v3821
        %v3858 = vpack.c.bf16 %v3824, %v3822
        %v3859 = vpack.c.bf16 %v3827, %v3825
        %v3860 = vpack.c.bf16 %v3828, %v3826
        %v3861 = vld [vmem:[#allocation10] sm:$0xff]
        %v3862 = vld [vmem:[#allocation10 + $0x8] sm:$0xff]
        %v3863 = vld [vmem:[#allocation10 + $0x10] sm:$0xff]
        %v3864 = vld [vmem:[#allocation10 + $0x18] sm:$0xff]
        %v3865 = vld [vmem:[#allocation10 + $0x20] sm:$0xff]
        %v3866 = vld [vmem:[#allocation10 + $0x28] sm:$0xff]
        %v3867 = vld [vmem:[#allocation10 + $0x30] sm:$0xff]
        %v3868 = vld [vmem:[#allocation10 + $0x38] sm:$0xff]
        %v3869 = vld [vmem:[#allocation10 + $0x40] sm:$0xff]
        %v3870 = vld [vmem:[#allocation10 + $0x48] sm:$0xff]
        %v3871 = vld [vmem:[#allocation10 + $0x50] sm:$0xff]
        %v3872 = vld [vmem:[#allocation10 + $0x58] sm:$0xff]
        %v3873 = vld [vmem:[#allocation10 + $0x60] sm:$0xff]
        %v3874 = vld [vmem:[#allocation10 + $0x68] sm:$0xff]
        %v3875 = vld [vmem:[#allocation10 + $0x70] sm:$0xff]
        %v3876 = vld [vmem:[#allocation10 + $0x78] sm:$0xff]
        %v3877 = vld [vmem:[#allocation10 + $0x80] sm:$0xff]
        %v3878 = vld [vmem:[#allocation10 + $0x88] sm:$0xff]
        %v3879 = vld [vmem:[#allocation10 + $0x90] sm:$0xff]
        %v3880 = vld [vmem:[#allocation10 + $0x98] sm:$0xff]
        %v3881 = vld [vmem:[#allocation10 + $0xa0] sm:$0xff]
        %v3882 = vld [vmem:[#allocation10 + $0xa8] sm:$0xff]
        %v3883 = vld [vmem:[#allocation10 + $0xb0] sm:$0xff]
        %v3884 = vld [vmem:[#allocation10 + $0xb8] sm:$0xff]
        %v3885 = vld [vmem:[#allocation10 + $0xc0] sm:$0xff]
        %v3886 = vld [vmem:[#allocation10 + $0xc8] sm:$0xff]
        %v3887 = vld [vmem:[#allocation10 + $0xd0] sm:$0xff]
        %v3888 = vld [vmem:[#allocation10 + $0xd8] sm:$0xff]
        %v3889 = vld [vmem:[#allocation10 + $0xe0] sm:$0xff]
        %v3890 = vld [vmem:[#allocation10 + $0xe8] sm:$0xff]
        %v3891 = vld [vmem:[#allocation10 + $0xf0] sm:$0xff]
        %v3892 = vld [vmem:[#allocation10 + $0xf8] sm:$0xff]
        %v3893 = vld [vmem:[%s8] sm:$0x3]
        %v3895 = vlaneseq
        %v3896 = vshrl.u32 %v3895, 7
        %v3897 = vsub.s32 0, %v3896
        %v3898 = vrot.slane %v3893, %v3897
        %v3899 = vlaneseq
        %v3900 = vshrl.u32 %v3899, 7
        %v3901 = vsub.s32 1, %v3900
        %v3902 = vrot.slane %v3893, %v3901
        %v3937 = vunpack.c.l.b16 %v3861
        %v3938 = vunpack.c.h.b16 %v3861
        %v3939 = vunpack.c.l.b16 %v3862
        %v3940 = vunpack.c.h.b16 %v3862
        %v3941 = vunpack.c.l.b16 %v3863
        %v3942 = vunpack.c.h.b16 %v3863
        %v3943 = vunpack.c.l.b16 %v3864
        %v3944 = vunpack.c.h.b16 %v3864
        %v3945 = vunpack.c.l.b16 %v3865
        %v3946 = vunpack.c.h.b16 %v3865
        %v3947 = vunpack.c.l.b16 %v3866
        %v3948 = vunpack.c.h.b16 %v3866
        %v3949 = vunpack.c.l.b16 %v3867
        %v3950 = vunpack.c.h.b16 %v3867
        %v3951 = vunpack.c.l.b16 %v3868
        %v3952 = vunpack.c.h.b16 %v3868
        %v3953 = vunpack.c.l.b16 %v3869
        %v3954 = vunpack.c.h.b16 %v3869
        %v3955 = vunpack.c.l.b16 %v3870
        %v3956 = vunpack.c.h.b16 %v3870
        %v3957 = vunpack.c.l.b16 %v3871
        %v3958 = vunpack.c.h.b16 %v3871
        %v3959 = vunpack.c.l.b16 %v3872
        %v3960 = vunpack.c.h.b16 %v3872
        %v3961 = vunpack.c.l.b16 %v3873
        %v3962 = vunpack.c.h.b16 %v3873
        %v3963 = vunpack.c.l.b16 %v3874
        %v3964 = vunpack.c.h.b16 %v3874
        %v3965 = vunpack.c.l.b16 %v3875
        %v3966 = vunpack.c.h.b16 %v3875
        %v3967 = vunpack.c.l.b16 %v3876
        %v3968 = vunpack.c.h.b16 %v3876
        %v3969 = vunpack.c.l.b16 %v3877
        %v3970 = vunpack.c.h.b16 %v3877
        %v3971 = vunpack.c.l.b16 %v3878
        %v3972 = vunpack.c.h.b16 %v3878
        %v3973 = vunpack.c.l.b16 %v3879
        %v3974 = vunpack.c.h.b16 %v3879
        %v3975 = vunpack.c.l.b16 %v3880
        %v3976 = vunpack.c.h.b16 %v3880
        %v3977 = vunpack.c.l.b16 %v3881
        %v3978 = vunpack.c.h.b16 %v3881
        %v3979 = vunpack.c.l.b16 %v3882
        %v3980 = vunpack.c.h.b16 %v3882
        %v3981 = vunpack.c.l.b16 %v3883
        %v3982 = vunpack.c.h.b16 %v3883
        %v3983 = vunpack.c.l.b16 %v3884
        %v3984 = vunpack.c.h.b16 %v3884
        %v3985 = vunpack.c.l.b16 %v3885
        %v3986 = vunpack.c.h.b16 %v3885
        %v3987 = vunpack.c.l.b16 %v3886
        %v3988 = vunpack.c.h.b16 %v3886
        %v3989 = vunpack.c.l.b16 %v3887
        %v3990 = vunpack.c.h.b16 %v3887
        %v3991 = vunpack.c.l.b16 %v3888
        %v3992 = vunpack.c.h.b16 %v3888
        %v3993 = vunpack.c.l.b16 %v3889
        %v3994 = vunpack.c.h.b16 %v3889
        %v3995 = vunpack.c.l.b16 %v3890
        %v3996 = vunpack.c.h.b16 %v3890
        %v3997 = vunpack.c.l.b16 %v3891
        %v3998 = vunpack.c.h.b16 %v3891
        %v3999 = vunpack.c.l.b16 %v3892
        %v4000 = vunpack.c.h.b16 %v3892
        %v4001 = vpack.c.b16 %v3939, %v3937
        %v4002 = vpack.c.b16 %v3940, %v3938
        %v4003 = vpack.c.b16 %v3943, %v3941
        %v4004 = vpack.c.b16 %v3944, %v3942
        %v4005 = vpack.c.b16 %v3947, %v3945
        %v4006 = vpack.c.b16 %v3948, %v3946
        %v4007 = vpack.c.b16 %v3951, %v3949
        %v4008 = vpack.c.b16 %v3952, %v3950
        %v4009 = vpack.c.b16 %v3955, %v3953
        %v4010 = vpack.c.b16 %v3956, %v3954
        %v4011 = vpack.c.b16 %v3959, %v3957
        %v4012 = vpack.c.b16 %v3960, %v3958
        %v4013 = vpack.c.b16 %v3963, %v3961
        %v4014 = vpack.c.b16 %v3964, %v3962
        %v4015 = vpack.c.b16 %v3967, %v3965
        %v4016 = vpack.c.b16 %v3968, %v3966
        %v4017 = vpack.c.b16 %v3971, %v3969
        %v4018 = vpack.c.b16 %v3972, %v3970
        %v4019 = vpack.c.b16 %v3975, %v3973
        %v4020 = vpack.c.b16 %v3976, %v3974
        %v4021 = vpack.c.b16 %v3979, %v3977
        %v4022 = vpack.c.b16 %v3980, %v3978
        %v4023 = vpack.c.b16 %v3983, %v3981
        %v4024 = vpack.c.b16 %v3984, %v3982
        %v4025 = vpack.c.b16 %v3987, %v3985
        %v4026 = vpack.c.b16 %v3988, %v3986
        %v4027 = vpack.c.b16 %v3991, %v3989
        %v4028 = vpack.c.b16 %v3992, %v3990
        %v4029 = vpack.c.b16 %v3995, %v3993
        %v4030 = vpack.c.b16 %v3996, %v3994
        %v4031 = vpack.c.b16 %v3999, %v3997
        %v4032 = vpack.c.b16 %v4000, %v3998
        %4065 = vmatprep.subr.bf16.mxu0 %v4002
        %4066 = vmatpush1.bf16.msra.mxu0 %v4001
        %4067 = vmatprep.subr.bf16.mxu0 %v4004
        %4068 = vmatpush1.bf16.msra.mxu0 %v4003
        %4069 = vmatprep.subr.bf16.mxu0 %v4006
        %4070 = vmatpush1.bf16.msra.mxu0 %v4005
        %4071 = vmatprep.subr.bf16.mxu0 %v4008
        %4072 = vmatpush1.bf16.msra.mxu0 %v4007
        %4073 = vmatprep.subr.bf16.mxu0 %v4010
        %4074 = vmatpush1.bf16.msra.mxu0 %v4009
        %4075 = vmatprep.subr.bf16.mxu0 %v4012
        %4076 = vmatpush1.bf16.msra.mxu0 %v4011
        %4077 = vmatprep.subr.bf16.mxu0 %v4014
        %4078 = vmatpush1.bf16.msra.mxu0 %v4013
        %4079 = vmatprep.subr.bf16.mxu0 %v4016
        %4080 = vmatpush1.bf16.msra.mxu0 %v4015
        %4081 = vmatprep.subr.bf16.mxu0 %v4018
        %4082 = vmatpush1.bf16.msra.mxu0 %v4017
        %4083 = vmatprep.subr.bf16.mxu0 %v4020
        %4084 = vmatpush1.bf16.msra.mxu0 %v4019
        %4085 = vmatprep.subr.bf16.mxu0 %v4022
        %4086 = vmatpush1.bf16.msra.mxu0 %v4021
        %4087 = vmatprep.subr.bf16.mxu0 %v4024
        %4088 = vmatpush1.bf16.msra.mxu0 %v4023
        %4089 = vmatprep.subr.bf16.mxu0 %v4026
        %4090 = vmatpush1.bf16.msra.mxu0 %v4025
        %4091 = vmatprep.subr.bf16.mxu0 %v4028
        %4092 = vmatpush1.bf16.msra.mxu0 %v4027
        %4093 = vmatprep.subr.bf16.mxu0 %v4030
        %4094 = vmatpush1.bf16.msra.mxu0 %v4029
        %4095 = vmatprep.subr.bf16.mxu0 %v4032
        %4096 = vmatpush1.bf16.msra.mxu0 %v4031
        %4097 = vmatprep.mubr.bf16.mxu0 %v3830
        %4098 = vmatmul.mubr.bf16.gmra.mrb[0].mxu0 %v3829
        %v4099 = vpop.f32.mrb[0].mxu0
        %v4100 = vadd.f32 %v3898, %v4099
        %v4101 = vpop.f32.mrb[0].mxu0
        %v4102 = vadd.f32 %v3902, %v4101
        %v4103 = vpop.f32.mrb[0].mxu0
        %v4104 = vadd.f32 %v3898, %v4103
        %v4105 = vpop.f32.mrb[0].mxu0
        %v4106 = vadd.f32 %v3902, %v4105
        %4107 = vmatprep.mubr.bf16.mxu0 %v3832
        %4108 = vmatmul.mubr.bf16.gmra.mrb[0].mxu0 %v3831
        %v4109 = vpop.f32.mrb[0].mxu0
        %v4110 = vadd.f32 %v3898, %v4109
        %v4111 = vpop.f32.mrb[0].mxu0
        %v4112 = vadd.f32 %v3902, %v4111
        %v4113 = vpop.f32.mrb[0].mxu0
        %v4114 = vadd.f32 %v3898, %v4113
        %v4115 = vpop.f32.mrb[0].mxu0
        %v4116 = vadd.f32 %v3902, %v4115
        %4117 = vmatprep.mubr.bf16.mxu0 %v3834
        %4118 = vmatmul.mubr.bf16.gmra.mrb[0].mxu0 %v3833
        %v4119 = vpop.f32.mrb[0].mxu0
        %v4120 = vadd.f32 %v3898, %v4119
        %v4121 = vpop.f32.mrb[0].mxu0
        %v4122 = vadd.f32 %v3902, %v4121
        %v4123 = vpop.f32.mrb[0].mxu0
        %v4124 = vadd.f32 %v3898, %v4123
        %v4125 = vpop.f32.mrb[0].mxu0
        %v4126 = vadd.f32 %v3902, %v4125
        %4127 = vmatprep.mubr.bf16.mxu0 %v3836
        %4128 = vmatmul.mubr.bf16.gmra.mrb[0].mxu0 %v3835
        %v4129 = vpop.f32.mrb[0].mxu0
        %v4130 = vadd.f32 %v3898, %v4129
        %v4131 = vpop.f32.mrb[0].mxu0
        %v4132 = vadd.f32 %v3902, %v4131
        %v4133 = vpop.f32.mrb[0].mxu0
        %v4134 = vadd.f32 %v3898, %v4133
        %v4135 = vpop.f32.mrb[0].mxu0
        %v4136 = vadd.f32 %v3902, %v4135
        %4137 = vmatprep.mubr.bf16.mxu0 %v3838
        %4138 = vmatmul.mubr.bf16.gmra.mrb[0].mxu0 %v3837
        %v4139 = vpop.f32.mrb[0].mxu0
        %v4140 = vadd.f32 %v3898, %v4139
        %v4141 = vpop.f32.mrb[0].mxu0
        %v4142 = vadd.f32 %v3902, %v4141
        %v4143 = vpop.f32.mrb[0].mxu0
        %v4144 = vadd.f32 %v3898, %v4143
        %v4145 = vpop.f32.mrb[0].mxu0
        %v4146 = vadd.f32 %v3902, %v4145
        %4147 = vmatprep.mubr.bf16.mxu0 %v3840
        %4148 = vmatmul.mubr.bf16.gmra.mrb[0].mxu0 %v3839
        %v4149 = vpop.f32.mrb[0].mxu0
        %v4150 = vadd.f32 %v3898, %v4149
        %v4151 = vpop.f32.mrb[0].mxu0
        %v4152 = vadd.f32 %v3902, %v4151
        %v4153 = vpop.f32.mrb[0].mxu0
        %v4154 = vadd.f32 %v3898, %v4153
        %v4155 = vpop.f32.mrb[0].mxu0
        %v4156 = vadd.f32 %v3902, %v4155
        %4157 = vmatprep.mubr.bf16.mxu0 %v3842
        %4158 = vmatmul.mubr.bf16.gmra.mrb[0].mxu0 %v3841
        %v4159 = vpop.f32.mrb[0].mxu0
        %v4160 = vadd.f32 %v3898, %v4159
        %v4161 = vpop.f32.mrb[0].mxu0
        %v4162 = vadd.f32 %v3902, %v4161
        %v4163 = vpop.f32.mrb[0].mxu0
        %v4164 = vadd.f32 %v3898, %v4163
        %v4165 = vpop.f32.mrb[0].mxu0
        %v4166 = vadd.f32 %v3902, %v4165
        %4167 = vmatprep.mubr.bf16.mxu0 %v3844
        %4168 = vmatmul.mubr.bf16.gmra.mrb[0].mxu0 %v3843
        %v4169 = vpop.f32.mrb[0].mxu0
        %v4170 = vadd.f32 %v3898, %v4169
        %v4171 = vpop.f32.mrb[0].mxu0
        %v4172 = vadd.f32 %v3902, %v4171
        %v4173 = vpop.f32.mrb[0].mxu0
        %v4174 = vadd.f32 %v3898, %v4173
        %v4175 = vpop.f32.mrb[0].mxu0
        %v4176 = vadd.f32 %v3902, %v4175
        %4177 = vmatprep.mubr.bf16.mxu0 %v3846
        %4178 = vmatmul.mubr.bf16.gmra.mrb[0].mxu0 %v3845
        %v4179 = vpop.f32.mrb[0].mxu0
        %v4180 = vadd.f32 %v3898, %v4179
        %v4181 = vpop.f32.mrb[0].mxu0
        %v4182 = vadd.f32 %v3902, %v4181
        %v4183 = vpop.f32.mrb[0].mxu0
        %v4184 = vadd.f32 %v3898, %v4183
        %v4185 = vpop.f32.mrb[0].mxu0
        %v4186 = vadd.f32 %v3902, %v4185
        %4187 = vmatprep.mubr.bf16.mxu0 %v3848
        %4188 = vmatmul.mubr.bf16.gmra.mrb[0].mxu0 %v3847
        %v4189 = vpop.f32.mrb[0].mxu0
        %v4190 = vadd.f32 %v3898, %v4189
        %v4191 = vpop.f32.mrb[0].mxu0
        %v4192 = vadd.f32 %v3902, %v4191
        %v4193 = vpop.f32.mrb[0].mxu0
        %v4194 = vadd.f32 %v3898, %v4193
        %v4195 = vpop.f32.mrb[0].mxu0
        %v4196 = vadd.f32 %v3902, %v4195
        %4197 = vmatprep.mubr.bf16.mxu0 %v3850
        %4198 = vmatmul.mubr.bf16.gmra.mrb[0].mxu0 %v3849
        %v4199 = vpop.f32.mrb[0].mxu0
        %v4200 = vadd.f32 %v3898, %v4199
        %v4201 = vpop.f32.mrb[0].mxu0
        %v4202 = vadd.f32 %v3902, %v4201
        %v4203 = vpop.f32.mrb[0].mxu0
        %v4204 = vadd.f32 %v3898, %v4203
        %v4205 = vpop.f32.mrb[0].mxu0
        %v4206 = vadd.f32 %v3902, %v4205
        %4207 = vmatprep.mubr.bf16.mxu0 %v3852
        %4208 = vmatmul.mubr.bf16.gmra.mrb[0].mxu0 %v3851
        %v4209 = vpop.f32.mrb[0].mxu0
        %v4210 = vadd.f32 %v3898, %v4209
        %v4211 = vpop.f32.mrb[0].mxu0
        %v4212 = vadd.f32 %v3902, %v4211
        %v4213 = vpop.f32.mrb[0].mxu0
        %v4214 = vadd.f32 %v3898, %v4213
        %v4215 = vpop.f32.mrb[0].mxu0
        %v4216 = vadd.f32 %v3902, %v4215
        %4217 = vmatprep.mubr.bf16.mxu0 %v3854
        %4218 = vmatmul.mubr.bf16.gmra.mrb[0].mxu0 %v3853
        %v4219 = vpop.f32.mrb[0].mxu0
        %v4220 = vadd.f32 %v3898, %v4219
        %v4221 = vpop.f32.mrb[0].mxu0
        %v4222 = vadd.f32 %v3902, %v4221
        %v4223 = vpop.f32.mrb[0].mxu0
        %v4224 = vadd.f32 %v3898, %v4223
        %v4225 = vpop.f32.mrb[0].mxu0
        %v4226 = vadd.f32 %v3902, %v4225
        %4227 = vmatprep.mubr.bf16.mxu0 %v3856
        %4228 = vmatmul.mubr.bf16.gmra.mrb[0].mxu0 %v3855
        %v4229 = vpop.f32.mrb[0].mxu0
        %v4230 = vadd.f32 %v3898, %v4229
        %v4231 = vpop.f32.mrb[0].mxu0
        %v4232 = vadd.f32 %v3902, %v4231
        %v4233 = vpop.f32.mrb[0].mxu0
        %v4234 = vadd.f32 %v3898, %v4233
        %v4235 = vpop.f32.mrb[0].mxu0
        %v4236 = vadd.f32 %v3902, %v4235
        %4237 = vmatprep.mubr.bf16.mxu0 %v3858
        %4238 = vmatmul.mubr.bf16.gmra.mrb[0].mxu0 %v3857
        %v4239 = vpop.f32.mrb[0].mxu0
        %v4240 = vadd.f32 %v3898, %v4239
        %v4241 = vpop.f32.mrb[0].mxu0
        %v4242 = vadd.f32 %v3902, %v4241
        %v4243 = vpop.f32.mrb[0].mxu0
        %v4244 = vadd.f32 %v3898, %v4243
        %v4245 = vpop.f32.mrb[0].mxu0
        %v4246 = vadd.f32 %v3902, %v4245
        %4247 = vmatprep.mubr.bf16.mxu0 %v3860
        %4248 = vmatmul.mubr.bf16.gmra.mrb[0].mxu0 %v3859
        %v4249 = vpop.f32.mrb[0].mxu0
        %v4250 = vadd.f32 %v3898, %v4249
        %v4251 = vpop.f32.mrb[0].mxu0
        %v4252 = vadd.f32 %v3902, %v4251
        %v4253 = vpop.f32.mrb[0].mxu0
        %v4254 = vadd.f32 %v3898, %v4253
        %v4255 = vpop.f32.mrb[0].mxu0
        %v4256 = vadd.f32 %v3902, %v4255
        %4257 = vdwg.mxu0
        %v4258 = vmax.f32 %v4100, 0.0
        %v4259 = vmax.f32 %v4102, 0.0
        %v4260 = vmax.f32 %v4104, 0.0
        %v4261 = vmax.f32 %v4106, 0.0
        %v4262 = vmax.f32 %v4110, 0.0
        %v4263 = vmax.f32 %v4112, 0.0
        %v4264 = vmax.f32 %v4114, 0.0
        %v4265 = vmax.f32 %v4116, 0.0
        %v4266 = vmax.f32 %v4120, 0.0
        %v4267 = vmax.f32 %v4122, 0.0
        %v4268 = vmax.f32 %v4124, 0.0
        %v4269 = vmax.f32 %v4126, 0.0
        %v4270 = vmax.f32 %v4130, 0.0
        %v4271 = vmax.f32 %v4132, 0.0
        %v4272 = vmax.f32 %v4134, 0.0
        %v4273 = vmax.f32 %v4136, 0.0
        %v4274 = vmax.f32 %v4140, 0.0
        %v4275 = vmax.f32 %v4142, 0.0
        %v4276 = vmax.f32 %v4144, 0.0
        %v4277 = vmax.f32 %v4146, 0.0
        %v4278 = vmax.f32 %v4150, 0.0
        %v4279 = vmax.f32 %v4152, 0.0
        %v4280 = vmax.f32 %v4154, 0.0
        %v4281 = vmax.f32 %v4156, 0.0
        %v4282 = vmax.f32 %v4160, 0.0
        %v4283 = vmax.f32 %v4162, 0.0
        %v4284 = vmax.f32 %v4164, 0.0
        %v4285 = vmax.f32 %v4166, 0.0
        %v4286 = vmax.f32 %v4170, 0.0
        %v4287 = vmax.f32 %v4172, 0.0
        %v4288 = vmax.f32 %v4174, 0.0
        %v4289 = vmax.f32 %v4176, 0.0
        %v4290 = vmax.f32 %v4180, 0.0
        %v4291 = vmax.f32 %v4182, 0.0
        %v4292 = vmax.f32 %v4184, 0.0
        %v4293 = vmax.f32 %v4186, 0.0
        %v4294 = vmax.f32 %v4190, 0.0
        %v4295 = vmax.f32 %v4192, 0.0
        %v4296 = vmax.f32 %v4194, 0.0
        %v4297 = vmax.f32 %v4196, 0.0
        %v4298 = vmax.f32 %v4200, 0.0
        %v4299 = vmax.f32 %v4202, 0.0
        %v4300 = vmax.f32 %v4204, 0.0
        %v4301 = vmax.f32 %v4206, 0.0
        %v4302 = vmax.f32 %v4210, 0.0
        %v4303 = vmax.f32 %v4212, 0.0
        %v4304 = vmax.f32 %v4214, 0.0
        %v4305 = vmax.f32 %v4216, 0.0
        %v4306 = vmax.f32 %v4220, 0.0
        %v4307 = vmax.f32 %v4222, 0.0
        %v4308 = vmax.f32 %v4224, 0.0
        %v4309 = vmax.f32 %v4226, 0.0
        %v4310 = vmax.f32 %v4230, 0.0
        %v4311 = vmax.f32 %v4232, 0.0
        %v4312 = vmax.f32 %v4234, 0.0
        %v4313 = vmax.f32 %v4236, 0.0
        %v4314 = vmax.f32 %v4240, 0.0
        %v4315 = vmax.f32 %v4242, 0.0
        %v4316 = vmax.f32 %v4244, 0.0
        %v4317 = vmax.f32 %v4246, 0.0
        %v4318 = vmax.f32 %v4250, 0.0
        %v4319 = vmax.f32 %v4252, 0.0
        %v4320 = vmax.f32 %v4254, 0.0
        %v4321 = vmax.f32 %v4256, 0.0
        %v4322 = vpack.c.bf16 %v4260, %v4258
        %v4323 = vpack.c.bf16 %v4261, %v4259
        %v4324 = vpack.c.bf16 %v4264, %v4262
        %v4325 = vpack.c.bf16 %v4265, %v4263
        %v4326 = vpack.c.bf16 %v4268, %v4266
        %v4327 = vpack.c.bf16 %v4269, %v4267
        %v4328 = vpack.c.bf16 %v4272, %v4270
        %v4329 = vpack.c.bf16 %v4273, %v4271
        %v4330 = vpack.c.bf16 %v4276, %v4274
        %v4331 = vpack.c.bf16 %v4277, %v4275
        %v4332 = vpack.c.bf16 %v4280, %v4278
        %v4333 = vpack.c.bf16 %v4281, %v4279
        %v4334 = vpack.c.bf16 %v4284, %v4282
        %v4335 = vpack.c.bf16 %v4285, %v4283
        %v4336 = vpack.c.bf16 %v4288, %v4286
        %v4337 = vpack.c.bf16 %v4289, %v4287
        %v4338 = vpack.c.bf16 %v4292, %v4290
        %v4339 = vpack.c.bf16 %v4293, %v4291
        %v4340 = vpack.c.bf16 %v4296, %v4294
        %v4341 = vpack.c.bf16 %v4297, %v4295
        %v4342 = vpack.c.bf16 %v4300, %v4298
        %v4343 = vpack.c.bf16 %v4301, %v4299
        %v4344 = vpack.c.bf16 %v4304, %v4302
        %v4345 = vpack.c.bf16 %v4305, %v4303
        %v4346 = vpack.c.bf16 %v4308, %v4306
        %v4347 = vpack.c.bf16 %v4309, %v4307
        %v4348 = vpack.c.bf16 %v4312, %v4310
        %v4349 = vpack.c.bf16 %v4313, %v4311
        %v4350 = vpack.c.bf16 %v4316, %v4314
        %v4351 = vpack.c.bf16 %v4317, %v4315
        %v4352 = vpack.c.bf16 %v4320, %v4318
        %v4353 = vpack.c.bf16 %v4321, %v4319
        %v4354 = vld [vmem:[#allocation11] sm:$0xff]
        %v4355 = vld [vmem:[#allocation11 + $0x8] sm:$0xff]
        %v4356 = vld [vmem:[#allocation11 + $0x10] sm:$0xff]
        %v4357 = vld [vmem:[#allocation11 + $0x18] sm:$0xff]
        %v4358 = vld [vmem:[#allocation11 + $0x20] sm:$0xff]
        %v4359 = vld [vmem:[#allocation11 + $0x28] sm:$0xff]
        %v4360 = vld [vmem:[#allocation11 + $0x30] sm:$0xff]
        %v4361 = vld [vmem:[#allocation11 + $0x38] sm:$0xff]
        %v4362 = vld [vmem:[#allocation11 + $0x40] sm:$0xff]
        %v4363 = vld [vmem:[#allocation11 + $0x48] sm:$0xff]
        %v4364 = vld [vmem:[#allocation11 + $0x50] sm:$0xff]
        %v4365 = vld [vmem:[#allocation11 + $0x58] sm:$0xff]
        %v4366 = vld [vmem:[#allocation11 + $0x60] sm:$0xff]
        %v4367 = vld [vmem:[#allocation11 + $0x68] sm:$0xff]
        %v4368 = vld [vmem:[#allocation11 + $0x70] sm:$0xff]
        %v4369 = vld [vmem:[#allocation11 + $0x78] sm:$0xff]
        %v4370 = vld [vmem:[#allocation11 + $0x80] sm:$0xff]
        %v4371 = vld [vmem:[#allocation11 + $0x88] sm:$0xff]
        %v4372 = vld [vmem:[#allocation11 + $0x90] sm:$0xff]
        %v4373 = vld [vmem:[#allocation11 + $0x98] sm:$0xff]
        %v4374 = vld [vmem:[#allocation11 + $0xa0] sm:$0xff]
        %v4375 = vld [vmem:[#allocation11 + $0xa8] sm:$0xff]
        %v4376 = vld [vmem:[#allocation11 + $0xb0] sm:$0xff]
        %v4377 = vld [vmem:[#allocation11 + $0xb8] sm:$0xff]
        %v4378 = vld [vmem:[#allocation11 + $0xc0] sm:$0xff]
        %v4379 = vld [vmem:[#allocation11 + $0xc8] sm:$0xff]
        %v4380 = vld [vmem:[#allocation11 + $0xd0] sm:$0xff]
        %v4381 = vld [vmem:[#allocation11 + $0xd8] sm:$0xff]
        %v4382 = vld [vmem:[#allocation11 + $0xe0] sm:$0xff]
        %v4383 = vld [vmem:[#allocation11 + $0xe8] sm:$0xff]
        %v4384 = vld [vmem:[#allocation11 + $0xf0] sm:$0xff]
        %v4385 = vld [vmem:[#allocation11 + $0xf8] sm:$0xff]
        %v4386 = vld [vmem:[%s10] sm:$0x3]
        %v4388 = vlaneseq
        %v4389 = vshrl.u32 %v4388, 7
        %v4390 = vsub.s32 0, %v4389
        %v4391 = vrot.slane %v4386, %v4390
        %v4392 = vlaneseq
        %v4393 = vshrl.u32 %v4392, 7
        %v4394 = vsub.s32 1, %v4393
        %v4395 = vrot.slane %v4386, %v4394
        %v4430 = vunpack.c.l.b16 %v4354
        %v4431 = vunpack.c.h.b16 %v4354
        %v4432 = vunpack.c.l.b16 %v4355
        %v4433 = vunpack.c.h.b16 %v4355
        %v4434 = vunpack.c.l.b16 %v4356
        %v4435 = vunpack.c.h.b16 %v4356
        %v4436 = vunpack.c.l.b16 %v4357
        %v4437 = vunpack.c.h.b16 %v4357
        %v4438 = vunpack.c.l.b16 %v4358
        %v4439 = vunpack.c.h.b16 %v4358
        %v4440 = vunpack.c.l.b16 %v4359
        %v4441 = vunpack.c.h.b16 %v4359
        %v4442 = vunpack.c.l.b16 %v4360
        %v4443 = vunpack.c.h.b16 %v4360
        %v4444 = vunpack.c.l.b16 %v4361
        %v4445 = vunpack.c.h.b16 %v4361
        %v4446 = vunpack.c.l.b16 %v4362
        %v4447 = vunpack.c.h.b16 %v4362
        %v4448 = vunpack.c.l.b16 %v4363
        %v4449 = vunpack.c.h.b16 %v4363
        %v4450 = vunpack.c.l.b16 %v4364
        %v4451 = vunpack.c.h.b16 %v4364
        %v4452 = vunpack.c.l.b16 %v4365
        %v4453 = vunpack.c.h.b16 %v4365
        %v4454 = vunpack.c.l.b16 %v4366
        %v4455 = vunpack.c.h.b16 %v4366
        %v4456 = vunpack.c.l.b16 %v4367
        %v4457 = vunpack.c.h.b16 %v4367
        %v4458 = vunpack.c.l.b16 %v4368
        %v4459 = vunpack.c.h.b16 %v4368
        %v4460 = vunpack.c.l.b16 %v4369
        %v4461 = vunpack.c.h.b16 %v4369
        %v4462 = vunpack.c.l.b16 %v4370
        %v4463 = vunpack.c.h.b16 %v4370
        %v4464 = vunpack.c.l.b16 %v4371
        %v4465 = vunpack.c.h.b16 %v4371
        %v4466 = vunpack.c.l.b16 %v4372
        %v4467 = vunpack.c.h.b16 %v4372
        %v4468 = vunpack.c.l.b16 %v4373
        %v4469 = vunpack.c.h.b16 %v4373
        %v4470 = vunpack.c.l.b16 %v4374
        %v4471 = vunpack.c.h.b16 %v4374
        %v4472 = vunpack.c.l.b16 %v4375
        %v4473 = vunpack.c.h.b16 %v4375
        %v4474 = vunpack.c.l.b16 %v4376
        %v4475 = vunpack.c.h.b16 %v4376
        %v4476 = vunpack.c.l.b16 %v4377
        %v4477 = vunpack.c.h.b16 %v4377
        %v4478 = vunpack.c.l.b16 %v4378
        %v4479 = vunpack.c.h.b16 %v4378
        %v4480 = vunpack.c.l.b16 %v4379
        %v4481 = vunpack.c.h.b16 %v4379
        %v4482 = vunpack.c.l.b16 %v4380
        %v4483 = vunpack.c.h.b16 %v4380
        %v4484 = vunpack.c.l.b16 %v4381
        %v4485 = vunpack.c.h.b16 %v4381
        %v4486 = vunpack.c.l.b16 %v4382
        %v4487 = vunpack.c.h.b16 %v4382
        %v4488 = vunpack.c.l.b16 %v4383
        %v4489 = vunpack.c.h.b16 %v4383
        %v4490 = vunpack.c.l.b16 %v4384
        %v4491 = vunpack.c.h.b16 %v4384
        %v4492 = vunpack.c.l.b16 %v4385
        %v4493 = vunpack.c.h.b16 %v4385
        %v4494 = vpack.c.b16 %v4432, %v4430
        %v4495 = vpack.c.b16 %v4433, %v4431
        %v4496 = vpack.c.b16 %v4436, %v4434
        %v4497 = vpack.c.b16 %v4437, %v4435
        %v4498 = vpack.c.b16 %v4440, %v4438
        %v4499 = vpack.c.b16 %v4441, %v4439
        %v4500 = vpack.c.b16 %v4444, %v4442
        %v4501 = vpack.c.b16 %v4445, %v4443
        %v4502 = vpack.c.b16 %v4448, %v4446
        %v4503 = vpack.c.b16 %v4449, %v4447
        %v4504 = vpack.c.b16 %v4452, %v4450
        %v4505 = vpack.c.b16 %v4453, %v4451
        %v4506 = vpack.c.b16 %v4456, %v4454
        %v4507 = vpack.c.b16 %v4457, %v4455
        %v4508 = vpack.c.b16 %v4460, %v4458
        %v4509 = vpack.c.b16 %v4461, %v4459
        %v4510 = vpack.c.b16 %v4464, %v4462
        %v4511 = vpack.c.b16 %v4465, %v4463
        %v4512 = vpack.c.b16 %v4468, %v4466
        %v4513 = vpack.c.b16 %v4469, %v4467
        %v4514 = vpack.c.b16 %v4472, %v4470
        %v4515 = vpack.c.b16 %v4473, %v4471
        %v4516 = vpack.c.b16 %v4476, %v4474
        %v4517 = vpack.c.b16 %v4477, %v4475
        %v4518 = vpack.c.b16 %v4480, %v4478
        %v4519 = vpack.c.b16 %v4481, %v4479
        %v4520 = vpack.c.b16 %v4484, %v4482
        %v4521 = vpack.c.b16 %v4485, %v4483
        %v4522 = vpack.c.b16 %v4488, %v4486
        %v4523 = vpack.c.b16 %v4489, %v4487
        %v4524 = vpack.c.b16 %v4492, %v4490
        %v4525 = vpack.c.b16 %v4493, %v4491
        %4558 = vmatprep.subr.bf16.mxu0 %v4495
        %4559 = vmatpush1.bf16.msra.mxu0 %v4494
        %4560 = vmatprep.subr.bf16.mxu0 %v4497
        %4561 = vmatpush1.bf16.msra.mxu0 %v4496
        %4562 = vmatprep.subr.bf16.mxu0 %v4499
        %4563 = vmatpush1.bf16.msra.mxu0 %v4498
        %4564 = vmatprep.subr.bf16.mxu0 %v4501
        %4565 = vmatpush1.bf16.msra.mxu0 %v4500
        %4566 = vmatprep.subr.bf16.mxu0 %v4503
        %4567 = vmatpush1.bf16.msra.mxu0 %v4502
        %4568 = vmatprep.subr.bf16.mxu0 %v4505
        %4569 = vmatpush1.bf16.msra.mxu0 %v4504
        %4570 = vmatprep.subr.bf16.mxu0 %v4507
        %4571 = vmatpush1.bf16.msra.mxu0 %v4506
        %4572 = vmatprep.subr.bf16.mxu0 %v4509
        %4573 = vmatpush1.bf16.msra.mxu0 %v4508
        %4574 = vmatprep.subr.bf16.mxu0 %v4511
        %4575 = vmatpush1.bf16.msra.mxu0 %v4510
        %4576 = vmatprep.subr.bf16.mxu0 %v4513
        %4577 = vmatpush1.bf16.msra.mxu0 %v4512
        %4578 = vmatprep.subr.bf16.mxu0 %v4515
        %4579 = vmatpush1.bf16.msra.mxu0 %v4514
        %4580 = vmatprep.subr.bf16.mxu0 %v4517
        %4581 = vmatpush1.bf16.msra.mxu0 %v4516
        %4582 = vmatprep.subr.bf16.mxu0 %v4519
        %4583 = vmatpush1.bf16.msra.mxu0 %v4518
        %4584 = vmatprep.subr.bf16.mxu0 %v4521
        %4585 = vmatpush1.bf16.msra.mxu0 %v4520
        %4586 = vmatprep.subr.bf16.mxu0 %v4523
        %4587 = vmatpush1.bf16.msra.mxu0 %v4522
        %4588 = vmatprep.subr.bf16.mxu0 %v4525
        %4589 = vmatpush1.bf16.msra.mxu0 %v4524
        %4590 = vmatprep.mubr.bf16.mxu0 %v4323
        %4591 = vmatmul.mubr.bf16.gmra.mrb[0].mxu0 %v4322
        %v4592 = vpop.f32.mrb[0].mxu0
        %v4593 = vadd.f32 %v4391, %v4592
        %v4594 = vpop.f32.mrb[0].mxu0
        %v4595 = vadd.f32 %v4395, %v4594
        %v4596 = vpop.f32.mrb[0].mxu0
        %v4597 = vadd.f32 %v4391, %v4596
        %v4598 = vpop.f32.mrb[0].mxu0
        %v4599 = vadd.f32 %v4395, %v4598
        %4600 = vmatprep.mubr.bf16.mxu0 %v4325
        %4601 = vmatmul.mubr.bf16.gmra.mrb[0].mxu0 %v4324
        %v4602 = vpop.f32.mrb[0].mxu0
        %v4603 = vadd.f32 %v4391, %v4602
        %v4604 = vpop.f32.mrb[0].mxu0
        %v4605 = vadd.f32 %v4395, %v4604
        %v4606 = vpop.f32.mrb[0].mxu0
        %v4607 = vadd.f32 %v4391, %v4606
        %v4608 = vpop.f32.mrb[0].mxu0
        %v4609 = vadd.f32 %v4395, %v4608
        %4610 = vmatprep.mubr.bf16.mxu0 %v4327
        %4611 = vmatmul.mubr.bf16.gmra.mrb[0].mxu0 %v4326
        %v4612 = vpop.f32.mrb[0].mxu0
        %v4613 = vadd.f32 %v4391, %v4612
        %v4614 = vpop.f32.mrb[0].mxu0
        %v4615 = vadd.f32 %v4395, %v4614
        %v4616 = vpop.f32.mrb[0].mxu0
        %v4617 = vadd.f32 %v4391, %v4616
        %v4618 = vpop.f32.mrb[0].mxu0
        %v4619 = vadd.f32 %v4395, %v4618
        %4620 = vmatprep.mubr.bf16.mxu0 %v4329
        %4621 = vmatmul.mubr.bf16.gmra.mrb[0].mxu0 %v4328
        %v4622 = vpop.f32.mrb[0].mxu0
        %v4623 = vadd.f32 %v4391, %v4622
        %v4624 = vpop.f32.mrb[0].mxu0
        %v4625 = vadd.f32 %v4395, %v4624
        %v4626 = vpop.f32.mrb[0].mxu0
        %v4627 = vadd.f32 %v4391, %v4626
        %v4628 = vpop.f32.mrb[0].mxu0
        %v4629 = vadd.f32 %v4395, %v4628
        %4630 = vmatprep.mubr.bf16.mxu0 %v4331
        %4631 = vmatmul.mubr.bf16.gmra.mrb[0].mxu0 %v4330
        %v4632 = vpop.f32.mrb[0].mxu0
        %v4633 = vadd.f32 %v4391, %v4632
        %v4634 = vpop.f32.mrb[0].mxu0
        %v4635 = vadd.f32 %v4395, %v4634
        %v4636 = vpop.f32.mrb[0].mxu0
        %v4637 = vadd.f32 %v4391, %v4636
        %v4638 = vpop.f32.mrb[0].mxu0
        %v4639 = vadd.f32 %v4395, %v4638
        %4640 = vmatprep.mubr.bf16.mxu0 %v4333
        %4641 = vmatmul.mubr.bf16.gmra.mrb[0].mxu0 %v4332
        %v4642 = vpop.f32.mrb[0].mxu0
        %v4643 = vadd.f32 %v4391, %v4642
        %v4644 = vpop.f32.mrb[0].mxu0
        %v4645 = vadd.f32 %v4395, %v4644
        %v4646 = vpop.f32.mrb[0].mxu0
        %v4647 = vadd.f32 %v4391, %v4646
        %v4648 = vpop.f32.mrb[0].mxu0
        %v4649 = vadd.f32 %v4395, %v4648
        %4650 = vmatprep.mubr.bf16.mxu0 %v4335
        %4651 = vmatmul.mubr.bf16.gmra.mrb[0].mxu0 %v4334
        %v4652 = vpop.f32.mrb[0].mxu0
        %v4653 = vadd.f32 %v4391, %v4652
        %v4654 = vpop.f32.mrb[0].mxu0
        %v4655 = vadd.f32 %v4395, %v4654
        %v4656 = vpop.f32.mrb[0].mxu0
        %v4657 = vadd.f32 %v4391, %v4656
        %v4658 = vpop.f32.mrb[0].mxu0
        %v4659 = vadd.f32 %v4395, %v4658
        %4660 = vmatprep.mubr.bf16.mxu0 %v4337
        %4661 = vmatmul.mubr.bf16.gmra.mrb[0].mxu0 %v4336
        %v4662 = vpop.f32.mrb[0].mxu0
        %v4663 = vadd.f32 %v4391, %v4662
        %v4664 = vpop.f32.mrb[0].mxu0
        %v4665 = vadd.f32 %v4395, %v4664
        %v4666 = vpop.f32.mrb[0].mxu0
        %v4667 = vadd.f32 %v4391, %v4666
        %v4668 = vpop.f32.mrb[0].mxu0
        %v4669 = vadd.f32 %v4395, %v4668
        %4670 = vmatprep.mubr.bf16.mxu0 %v4339
        %4671 = vmatmul.mubr.bf16.gmra.mrb[0].mxu0 %v4338
        %v4672 = vpop.f32.mrb[0].mxu0
        %v4673 = vadd.f32 %v4391, %v4672
        %v4674 = vpop.f32.mrb[0].mxu0
        %v4675 = vadd.f32 %v4395, %v4674
        %v4676 = vpop.f32.mrb[0].mxu0
        %v4677 = vadd.f32 %v4391, %v4676
        %v4678 = vpop.f32.mrb[0].mxu0
        %v4679 = vadd.f32 %v4395, %v4678
        %4680 = vmatprep.mubr.bf16.mxu0 %v4341
        %4681 = vmatmul.mubr.bf16.gmra.mrb[0].mxu0 %v4340
        %v4682 = vpop.f32.mrb[0].mxu0
        %v4683 = vadd.f32 %v4391, %v4682
        %v4684 = vpop.f32.mrb[0].mxu0
        %v4685 = vadd.f32 %v4395, %v4684
        %v4686 = vpop.f32.mrb[0].mxu0
        %v4687 = vadd.f32 %v4391, %v4686
        %v4688 = vpop.f32.mrb[0].mxu0
        %v4689 = vadd.f32 %v4395, %v4688
        %4690 = vmatprep.mubr.bf16.mxu0 %v4343
        %4691 = vmatmul.mubr.bf16.gmra.mrb[0].mxu0 %v4342
        %v4692 = vpop.f32.mrb[0].mxu0
        %v4693 = vadd.f32 %v4391, %v4692
        %v4694 = vpop.f32.mrb[0].mxu0
        %v4695 = vadd.f32 %v4395, %v4694
        %v4696 = vpop.f32.mrb[0].mxu0
        %v4697 = vadd.f32 %v4391, %v4696
        %v4698 = vpop.f32.mrb[0].mxu0
        %v4699 = vadd.f32 %v4395, %v4698
        %4700 = vmatprep.mubr.bf16.mxu0 %v4345
        %4701 = vmatmul.mubr.bf16.gmra.mrb[0].mxu0 %v4344
        %v4702 = vpop.f32.mrb[0].mxu0
        %v4703 = vadd.f32 %v4391, %v4702
        %v4704 = vpop.f32.mrb[0].mxu0
        %v4705 = vadd.f32 %v4395, %v4704
        %v4706 = vpop.f32.mrb[0].mxu0
        %v4707 = vadd.f32 %v4391, %v4706
        %v4708 = vpop.f32.mrb[0].mxu0
        %v4709 = vadd.f32 %v4395, %v4708
        %4710 = vmatprep.mubr.bf16.mxu0 %v4347
        %4711 = vmatmul.mubr.bf16.gmra.mrb[0].mxu0 %v4346
        %v4712 = vpop.f32.mrb[0].mxu0
        %v4713 = vadd.f32 %v4391, %v4712
        %v4714 = vpop.f32.mrb[0].mxu0
        %v4715 = vadd.f32 %v4395, %v4714
        %v4716 = vpop.f32.mrb[0].mxu0
        %v4717 = vadd.f32 %v4391, %v4716
        %v4718 = vpop.f32.mrb[0].mxu0
        %v4719 = vadd.f32 %v4395, %v4718
        %4720 = vmatprep.mubr.bf16.mxu0 %v4349
        %4721 = vmatmul.mubr.bf16.gmra.mrb[0].mxu0 %v4348
        %v4722 = vpop.f32.mrb[0].mxu0
        %v4723 = vadd.f32 %v4391, %v4722
        %v4724 = vpop.f32.mrb[0].mxu0
        %v4725 = vadd.f32 %v4395, %v4724
        %v4726 = vpop.f32.mrb[0].mxu0
        %v4727 = vadd.f32 %v4391, %v4726
        %v4728 = vpop.f32.mrb[0].mxu0
        %v4729 = vadd.f32 %v4395, %v4728
        %4730 = vmatprep.mubr.bf16.mxu0 %v4351
        %4731 = vmatmul.mubr.bf16.gmra.mrb[0].mxu0 %v4350
        %v4732 = vpop.f32.mrb[0].mxu0
        %v4733 = vadd.f32 %v4391, %v4732
        %v4734 = vpop.f32.mrb[0].mxu0
        %v4735 = vadd.f32 %v4395, %v4734
        %v4736 = vpop.f32.mrb[0].mxu0
        %v4737 = vadd.f32 %v4391, %v4736
        %v4738 = vpop.f32.mrb[0].mxu0
        %v4739 = vadd.f32 %v4395, %v4738
        %4740 = vmatprep.mubr.bf16.mxu0 %v4353
        %4741 = vmatmul.mubr.bf16.gmra.mrb[0].mxu0 %v4352
        %v4742 = vpop.f32.mrb[0].mxu0
        %v4743 = vadd.f32 %v4391, %v4742
        %v4744 = vpop.f32.mrb[0].mxu0
        %v4745 = vadd.f32 %v4395, %v4744
        %v4746 = vpop.f32.mrb[0].mxu0
        %v4747 = vadd.f32 %v4391, %v4746
        %v4748 = vpop.f32.mrb[0].mxu0
        %v4749 = vadd.f32 %v4395, %v4748
        %4750 = vdwg.mxu0
        %v4751 = vmax.f32 %v4593, 0.0
        %v4752 = vmax.f32 %v4595, 0.0
        %v4753 = vmax.f32 %v4597, 0.0
        %v4754 = vmax.f32 %v4599, 0.0
        %v4755 = vmax.f32 %v4603, 0.0
        %v4756 = vmax.f32 %v4605, 0.0
        %v4757 = vmax.f32 %v4607, 0.0
        %v4758 = vmax.f32 %v4609, 0.0
        %v4759 = vmax.f32 %v4613, 0.0
        %v4760 = vmax.f32 %v4615, 0.0
        %v4761 = vmax.f32 %v4617, 0.0
        %v4762 = vmax.f32 %v4619, 0.0
        %v4763 = vmax.f32 %v4623, 0.0
        %v4764 = vmax.f32 %v4625, 0.0
        %v4765 = vmax.f32 %v4627, 0.0
        %v4766 = vmax.f32 %v4629, 0.0
        %v4767 = vmax.f32 %v4633, 0.0
        %v4768 = vmax.f32 %v4635, 0.0
        %v4769 = vmax.f32 %v4637, 0.0
        %v4770 = vmax.f32 %v4639, 0.0
        %v4771 = vmax.f32 %v4643, 0.0
        %v4772 = vmax.f32 %v4645, 0.0
        %v4773 = vmax.f32 %v4647, 0.0
        %v4774 = vmax.f32 %v4649, 0.0
        %v4775 = vmax.f32 %v4653, 0.0
        %v4776 = vmax.f32 %v4655, 0.0
        %v4777 = vmax.f32 %v4657, 0.0
        %v4778 = vmax.f32 %v4659, 0.0
        %v4779 = vmax.f32 %v4663, 0.0
        %v4780 = vmax.f32 %v4665, 0.0
        %v4781 = vmax.f32 %v4667, 0.0
        %v4782 = vmax.f32 %v4669, 0.0
        %v4783 = vmax.f32 %v4673, 0.0
        %v4784 = vmax.f32 %v4675, 0.0
        %v4785 = vmax.f32 %v4677, 0.0
        %v4786 = vmax.f32 %v4679, 0.0
        %v4787 = vmax.f32 %v4683, 0.0
        %v4788 = vmax.f32 %v4685, 0.0
        %v4789 = vmax.f32 %v4687, 0.0
        %v4790 = vmax.f32 %v4689, 0.0
        %v4791 = vmax.f32 %v4693, 0.0
        %v4792 = vmax.f32 %v4695, 0.0
        %v4793 = vmax.f32 %v4697, 0.0
        %v4794 = vmax.f32 %v4699, 0.0
        %v4795 = vmax.f32 %v4703, 0.0
        %v4796 = vmax.f32 %v4705, 0.0
        %v4797 = vmax.f32 %v4707, 0.0
        %v4798 = vmax.f32 %v4709, 0.0
        %v4799 = vmax.f32 %v4713, 0.0
        %v4800 = vmax.f32 %v4715, 0.0
        %v4801 = vmax.f32 %v4717, 0.0
        %v4802 = vmax.f32 %v4719, 0.0
        %v4803 = vmax.f32 %v4723, 0.0
        %v4804 = vmax.f32 %v4725, 0.0
        %v4805 = vmax.f32 %v4727, 0.0
        %v4806 = vmax.f32 %v4729, 0.0
        %v4807 = vmax.f32 %v4733, 0.0
        %v4808 = vmax.f32 %v4735, 0.0
        %v4809 = vmax.f32 %v4737, 0.0
        %v4810 = vmax.f32 %v4739, 0.0
        %v4811 = vmax.f32 %v4743, 0.0
        %v4812 = vmax.f32 %v4745, 0.0
        %v4813 = vmax.f32 %v4747, 0.0
        %v4814 = vmax.f32 %v4749, 0.0
        %v4815 = vpack.c.bf16 %v4753, %v4751
        %v4816 = vpack.c.bf16 %v4754, %v4752
        %v4817 = vpack.c.bf16 %v4757, %v4755
        %v4818 = vpack.c.bf16 %v4758, %v4756
        %v4819 = vpack.c.bf16 %v4761, %v4759
        %v4820 = vpack.c.bf16 %v4762, %v4760
        %v4821 = vpack.c.bf16 %v4765, %v4763
        %v4822 = vpack.c.bf16 %v4766, %v4764
        %v4823 = vpack.c.bf16 %v4769, %v4767
        %v4824 = vpack.c.bf16 %v4770, %v4768
        %v4825 = vpack.c.bf16 %v4773, %v4771
        %v4826 = vpack.c.bf16 %v4774, %v4772
        %v4827 = vpack.c.bf16 %v4777, %v4775
        %v4828 = vpack.c.bf16 %v4778, %v4776
        %v4829 = vpack.c.bf16 %v4781, %v4779
        %v4830 = vpack.c.bf16 %v4782, %v4780
        %v4831 = vpack.c.bf16 %v4785, %v4783
        %v4832 = vpack.c.bf16 %v4786, %v4784
        %v4833 = vpack.c.bf16 %v4789, %v4787
        %v4834 = vpack.c.bf16 %v4790, %v4788
        %v4835 = vpack.c.bf16 %v4793, %v4791
        %v4836 = vpack.c.bf16 %v4794, %v4792
        %v4837 = vpack.c.bf16 %v4797, %v4795
        %v4838 = vpack.c.bf16 %v4798, %v4796
        %v4839 = vpack.c.bf16 %v4801, %v4799
        %v4840 = vpack.c.bf16 %v4802, %v4800
        %v4841 = vpack.c.bf16 %v4805, %v4803
        %v4842 = vpack.c.bf16 %v4806, %v4804
        %v4843 = vpack.c.bf16 %v4809, %v4807
        %v4844 = vpack.c.bf16 %v4810, %v4808
        %v4845 = vpack.c.bf16 %v4813, %v4811
        %v4846 = vpack.c.bf16 %v4814, %v4812
        %v4847 = vld [vmem:[#allocation13] sm:$0xff]
        %v4848 = vld [vmem:[#allocation13 + $0x8] sm:$0xff]
        %v4849 = vld [vmem:[#allocation13 + $0x10] sm:$0xff]
        %v4850 = vld [vmem:[#allocation13 + $0x18] sm:$0xff]
        %v4851 = vld [vmem:[#allocation13 + $0x20] sm:$0xff]
        %v4852 = vld [vmem:[#allocation13 + $0x28] sm:$0xff]
        %v4853 = vld [vmem:[#allocation13 + $0x30] sm:$0xff]
        %v4854 = vld [vmem:[#allocation13 + $0x38] sm:$0xff]
        %v4855 = vld [vmem:[#allocation13 + $0x40] sm:$0xff]
        %v4856 = vld [vmem:[#allocation13 + $0x48] sm:$0xff]
        %v4857 = vld [vmem:[#allocation13 + $0x50] sm:$0xff]
        %v4858 = vld [vmem:[#allocation13 + $0x58] sm:$0xff]
        %v4859 = vld [vmem:[#allocation13 + $0x60] sm:$0xff]
        %v4860 = vld [vmem:[#allocation13 + $0x68] sm:$0xff]
        %v4861 = vld [vmem:[#allocation13 + $0x70] sm:$0xff]
        %v4862 = vld [vmem:[#allocation13 + $0x78] sm:$0xff]
        %v4863 = vld [vmem:[#allocation13 + $0x80] sm:$0xff]
        %v4864 = vld [vmem:[#allocation13 + $0x88] sm:$0xff]
        %v4865 = vld [vmem:[#allocation13 + $0x90] sm:$0xff]
        %v4866 = vld [vmem:[#allocation13 + $0x98] sm:$0xff]
        %v4867 = vld [vmem:[#allocation13 + $0xa0] sm:$0xff]
        %v4868 = vld [vmem:[#allocation13 + $0xa8] sm:$0xff]
        %v4869 = vld [vmem:[#allocation13 + $0xb0] sm:$0xff]
        %v4870 = vld [vmem:[#allocation13 + $0xb8] sm:$0xff]
        %v4871 = vld [vmem:[#allocation13 + $0xc0] sm:$0xff]
        %v4872 = vld [vmem:[#allocation13 + $0xc8] sm:$0xff]
        %v4873 = vld [vmem:[#allocation13 + $0xd0] sm:$0xff]
        %v4874 = vld [vmem:[#allocation13 + $0xd8] sm:$0xff]
        %v4875 = vld [vmem:[#allocation13 + $0xe0] sm:$0xff]
        %v4876 = vld [vmem:[#allocation13 + $0xe8] sm:$0xff]
        %v4877 = vld [vmem:[#allocation13 + $0xf0] sm:$0xff]
        %v4878 = vld [vmem:[#allocation13 + $0xf8] sm:$0xff]
        %v4879 = vld [vmem:[%s12] sm:$0x3]
        %v4881 = vlaneseq
        %v4882 = vshrl.u32 %v4881, 7
        %v4883 = vsub.s32 0, %v4882
        %v4884 = vrot.slane %v4879, %v4883
        %v4885 = vlaneseq
        %v4886 = vshrl.u32 %v4885, 7
        %v4887 = vsub.s32 1, %v4886
        %v4888 = vrot.slane %v4879, %v4887
        %v4923 = vunpack.c.l.b16 %v4847
        %v4924 = vunpack.c.h.b16 %v4847
        %v4925 = vunpack.c.l.b16 %v4848
        %v4926 = vunpack.c.h.b16 %v4848
        %v4927 = vunpack.c.l.b16 %v4849
        %v4928 = vunpack.c.h.b16 %v4849
        %v4929 = vunpack.c.l.b16 %v4850
        %v4930 = vunpack.c.h.b16 %v4850
        %v4931 = vunpack.c.l.b16 %v4851
        %v4932 = vunpack.c.h.b16 %v4851
        %v4933 = vunpack.c.l.b16 %v4852
        %v4934 = vunpack.c.h.b16 %v4852
        %v4935 = vunpack.c.l.b16 %v4853
        %v4936 = vunpack.c.h.b16 %v4853
        %v4937 = vunpack.c.l.b16 %v4854
        %v4938 = vunpack.c.h.b16 %v4854
        %v4939 = vunpack.c.l.b16 %v4855
        %v4940 = vunpack.c.h.b16 %v4855
        %v4941 = vunpack.c.l.b16 %v4856
        %v4942 = vunpack.c.h.b16 %v4856
        %v4943 = vunpack.c.l.b16 %v4857
        %v4944 = vunpack.c.h.b16 %v4857
        %v4945 = vunpack.c.l.b16 %v4858
        %v4946 = vunpack.c.h.b16 %v4858
        %v4947 = vunpack.c.l.b16 %v4859
        %v4948 = vunpack.c.h.b16 %v4859
        %v4949 = vunpack.c.l.b16 %v4860
        %v4950 = vunpack.c.h.b16 %v4860
        %v4951 = vunpack.c.l.b16 %v4861
        %v4952 = vunpack.c.h.b16 %v4861
        %v4953 = vunpack.c.l.b16 %v4862
        %v4954 = vunpack.c.h.b16 %v4862
        %v4955 = vunpack.c.l.b16 %v4863
        %v4956 = vunpack.c.h.b16 %v4863
        %v4957 = vunpack.c.l.b16 %v4864
        %v4958 = vunpack.c.h.b16 %v4864
        %v4959 = vunpack.c.l.b16 %v4865
        %v4960 = vunpack.c.h.b16 %v4865
        %v4961 = vunpack.c.l.b16 %v4866
        %v4962 = vunpack.c.h.b16 %v4866
        %v4963 = vunpack.c.l.b16 %v4867
        %v4964 = vunpack.c.h.b16 %v4867
        %v4965 = vunpack.c.l.b16 %v4868
        %v4966 = vunpack.c.h.b16 %v4868
        %v4967 = vunpack.c.l.b16 %v4869
        %v4968 = vunpack.c.h.b16 %v4869
        %v4969 = vunpack.c.l.b16 %v4870
        %v4970 = vunpack.c.h.b16 %v4870
        %v4971 = vunpack.c.l.b16 %v4871
        %v4972 = vunpack.c.h.b16 %v4871
        %v4973 = vunpack.c.l.b16 %v4872
        %v4974 = vunpack.c.h.b16 %v4872
        %v4975 = vunpack.c.l.b16 %v4873
        %v4976 = vunpack.c.h.b16 %v4873
        %v4977 = vunpack.c.l.b16 %v4874
        %v4978 = vunpack.c.h.b16 %v4874
        %v4979 = vunpack.c.l.b16 %v4875
        %v4980 = vunpack.c.h.b16 %v4875
        %v4981 = vunpack.c.l.b16 %v4876
        %v4982 = vunpack.c.h.b16 %v4876
        %v4983 = vunpack.c.l.b16 %v4877
        %v4984 = vunpack.c.h.b16 %v4877
        %v4985 = vunpack.c.l.b16 %v4878
        %v4986 = vunpack.c.h.b16 %v4878
        %v4987 = vpack.c.b16 %v4925, %v4923
        %v4988 = vpack.c.b16 %v4926, %v4924
        %v4989 = vpack.c.b16 %v4929, %v4927
        %v4990 = vpack.c.b16 %v4930, %v4928
        %v4991 = vpack.c.b16 %v4933, %v4931
        %v4992 = vpack.c.b16 %v4934, %v4932
        %v4993 = vpack.c.b16 %v4937, %v4935
        %v4994 = vpack.c.b16 %v4938, %v4936
        %v4995 = vpack.c.b16 %v4941, %v4939
        %v4996 = vpack.c.b16 %v4942, %v4940
        %v4997 = vpack.c.b16 %v4945, %v4943
        %v4998 = vpack.c.b16 %v4946, %v4944
        %v4999 = vpack.c.b16 %v4949, %v4947
        %v5000 = vpack.c.b16 %v4950, %v4948
        %v5001 = vpack.c.b16 %v4953, %v4951
        %v5002 = vpack.c.b16 %v4954, %v4952
        %v5003 = vpack.c.b16 %v4957, %v4955
        %v5004 = vpack.c.b16 %v4958, %v4956
        %v5005 = vpack.c.b16 %v4961, %v4959
        %v5006 = vpack.c.b16 %v4962, %v4960
        %v5007 = vpack.c.b16 %v4965, %v4963
        %v5008 = vpack.c.b16 %v4966, %v4964
        %v5009 = vpack.c.b16 %v4969, %v4967
        %v5010 = vpack.c.b16 %v4970, %v4968
        %v5011 = vpack.c.b16 %v4973, %v4971
        %v5012 = vpack.c.b16 %v4974, %v4972
        %v5013 = vpack.c.b16 %v4977, %v4975
        %v5014 = vpack.c.b16 %v4978, %v4976
        %v5015 = vpack.c.b16 %v4981, %v4979
        %v5016 = vpack.c.b16 %v4982, %v4980
        %v5017 = vpack.c.b16 %v4985, %v4983
        %v5018 = vpack.c.b16 %v4986, %v4984
        %5051 = vmatprep.subr.bf16.mxu0 %v4988
        %5052 = vmatpush1.bf16.msra.mxu0 %v4987
        %5053 = vmatprep.subr.bf16.mxu0 %v4990
        %5054 = vmatpush1.bf16.msra.mxu0 %v4989
        %5055 = vmatprep.subr.bf16.mxu0 %v4992
        %5056 = vmatpush1.bf16.msra.mxu0 %v4991
        %5057 = vmatprep.subr.bf16.mxu0 %v4994
        %5058 = vmatpush1.bf16.msra.mxu0 %v4993
        %5059 = vmatprep.subr.bf16.mxu0 %v4996
        %5060 = vmatpush1.bf16.msra.mxu0 %v4995
        %5061 = vmatprep.subr.bf16.mxu0 %v4998
        %5062 = vmatpush1.bf16.msra.mxu0 %v4997
        %5063 = vmatprep.subr.bf16.mxu0 %v5000
        %5064 = vmatpush1.bf16.msra.mxu0 %v4999
        %5065 = vmatprep.subr.bf16.mxu0 %v5002
        %5066 = vmatpush1.bf16.msra.mxu0 %v5001
        %5067 = vmatprep.subr.bf16.mxu0 %v5004
        %5068 = vmatpush1.bf16.msra.mxu0 %v5003
        %5069 = vmatprep.subr.bf16.mxu0 %v5006
        %5070 = vmatpush1.bf16.msra.mxu0 %v5005
        %5071 = vmatprep.subr.bf16.mxu0 %v5008
        %5072 = vmatpush1.bf16.msra.mxu0 %v5007
        %5073 = vmatprep.subr.bf16.mxu0 %v5010
        %5074 = vmatpush1.bf16.msra.mxu0 %v5009
        %5075 = vmatprep.subr.bf16.mxu0 %v5012
        %5076 = vmatpush1.bf16.msra.mxu0 %v5011
        %5077 = vmatprep.subr.bf16.mxu0 %v5014
        %5078 = vmatpush1.bf16.msra.mxu0 %v5013
        %5079 = vmatprep.subr.bf16.mxu0 %v5016
        %5080 = vmatpush1.bf16.msra.mxu0 %v5015
        %5081 = vmatprep.subr.bf16.mxu0 %v5018
        %5082 = vmatpush1.bf16.msra.mxu0 %v5017
        %5083 = vmatprep.mubr.bf16.mxu0 %v4816
        %5084 = vmatmul.mubr.bf16.gmra.mrb[0].mxu0 %v4815
        %v5085 = vpop.f32.mrb[0].mxu0
        %v5086 = vadd.f32 %v4884, %v5085
        %v5087 = vpop.f32.mrb[0].mxu0
        %v5088 = vadd.f32 %v4888, %v5087
        %v5089 = vpop.f32.mrb[0].mxu0
        %v5090 = vadd.f32 %v4884, %v5089
        %v5091 = vpop.f32.mrb[0].mxu0
        %v5092 = vadd.f32 %v4888, %v5091
        %5093 = vmatprep.mubr.bf16.mxu0 %v4818
        %5094 = vmatmul.mubr.bf16.gmra.mrb[0].mxu0 %v4817
        %v5095 = vpop.f32.mrb[0].mxu0
        %v5096 = vadd.f32 %v4884, %v5095
        %v5097 = vpop.f32.mrb[0].mxu0
        %v5098 = vadd.f32 %v4888, %v5097
        %v5099 = vpop.f32.mrb[0].mxu0
        %v5100 = vadd.f32 %v4884, %v5099
        %v5101 = vpop.f32.mrb[0].mxu0
        %v5102 = vadd.f32 %v4888, %v5101
        %5103 = vmatprep.mubr.bf16.mxu0 %v4820
        %5104 = vmatmul.mubr.bf16.gmra.mrb[0].mxu0 %v4819
        %v5105 = vpop.f32.mrb[0].mxu0
        %v5106 = vadd.f32 %v4884, %v5105
        %v5107 = vpop.f32.mrb[0].mxu0
        %v5108 = vadd.f32 %v4888, %v5107
        %v5109 = vpop.f32.mrb[0].mxu0
        %v5110 = vadd.f32 %v4884, %v5109
        %v5111 = vpop.f32.mrb[0].mxu0
        %v5112 = vadd.f32 %v4888, %v5111
        %5113 = vmatprep.mubr.bf16.mxu0 %v4822
        %5114 = vmatmul.mubr.bf16.gmra.mrb[0].mxu0 %v4821
        %v5115 = vpop.f32.mrb[0].mxu0
        %v5116 = vadd.f32 %v4884, %v5115
        %v5117 = vpop.f32.mrb[0].mxu0
        %v5118 = vadd.f32 %v4888, %v5117
        %v5119 = vpop.f32.mrb[0].mxu0
        %v5120 = vadd.f32 %v4884, %v5119
        %v5121 = vpop.f32.mrb[0].mxu0
        %v5122 = vadd.f32 %v4888, %v5121
        %5123 = vmatprep.mubr.bf16.mxu0 %v4824
        %5124 = vmatmul.mubr.bf16.gmra.mrb[0].mxu0 %v4823
        %v5125 = vpop.f32.mrb[0].mxu0
        %v5126 = vadd.f32 %v4884, %v5125
        %v5127 = vpop.f32.mrb[0].mxu0
        %v5128 = vadd.f32 %v4888, %v5127
        %v5129 = vpop.f32.mrb[0].mxu0
        %v5130 = vadd.f32 %v4884, %v5129
        %v5131 = vpop.f32.mrb[0].mxu0
        %v5132 = vadd.f32 %v4888, %v5131
        %5133 = vmatprep.mubr.bf16.mxu0 %v4826
        %5134 = vmatmul.mubr.bf16.gmra.mrb[0].mxu0 %v4825
        %v5135 = vpop.f32.mrb[0].mxu0
        %v5136 = vadd.f32 %v4884, %v5135
        %v5137 = vpop.f32.mrb[0].mxu0
        %v5138 = vadd.f32 %v4888, %v5137
        %v5139 = vpop.f32.mrb[0].mxu0
        %v5140 = vadd.f32 %v4884, %v5139
        %v5141 = vpop.f32.mrb[0].mxu0
        %v5142 = vadd.f32 %v4888, %v5141
        %5143 = vmatprep.mubr.bf16.mxu0 %v4828
        %5144 = vmatmul.mubr.bf16.gmra.mrb[0].mxu0 %v4827
        %v5145 = vpop.f32.mrb[0].mxu0
        %v5146 = vadd.f32 %v4884, %v5145
        %v5147 = vpop.f32.mrb[0].mxu0
        %v5148 = vadd.f32 %v4888, %v5147
        %v5149 = vpop.f32.mrb[0].mxu0
        %v5150 = vadd.f32 %v4884, %v5149
        %v5151 = vpop.f32.mrb[0].mxu0
        %v5152 = vadd.f32 %v4888, %v5151
        %5153 = vmatprep.mubr.bf16.mxu0 %v4830
        %5154 = vmatmul.mubr.bf16.gmra.mrb[0].mxu0 %v4829
        %v5155 = vpop.f32.mrb[0].mxu0
        %v5156 = vadd.f32 %v4884, %v5155
        %v5157 = vpop.f32.mrb[0].mxu0
        %v5158 = vadd.f32 %v4888, %v5157
        %v5159 = vpop.f32.mrb[0].mxu0
        %v5160 = vadd.f32 %v4884, %v5159
        %v5161 = vpop.f32.mrb[0].mxu0
        %v5162 = vadd.f32 %v4888, %v5161
        %5163 = vmatprep.mubr.bf16.mxu0 %v4832
        %5164 = vmatmul.mubr.bf16.gmra.mrb[0].mxu0 %v4831
        %v5165 = vpop.f32.mrb[0].mxu0
        %v5166 = vadd.f32 %v4884, %v5165
        %v5167 = vpop.f32.mrb[0].mxu0
        %v5168 = vadd.f32 %v4888, %v5167
        %v5169 = vpop.f32.mrb[0].mxu0
        %v5170 = vadd.f32 %v4884, %v5169
        %v5171 = vpop.f32.mrb[0].mxu0
        %v5172 = vadd.f32 %v4888, %v5171
        %5173 = vmatprep.mubr.bf16.mxu0 %v4834
        %5174 = vmatmul.mubr.bf16.gmra.mrb[0].mxu0 %v4833
        %v5175 = vpop.f32.mrb[0].mxu0
        %v5176 = vadd.f32 %v4884, %v5175
        %v5177 = vpop.f32.mrb[0].mxu0
        %v5178 = vadd.f32 %v4888, %v5177
        %v5179 = vpop.f32.mrb[0].mxu0
        %v5180 = vadd.f32 %v4884, %v5179
        %v5181 = vpop.f32.mrb[0].mxu0
        %v5182 = vadd.f32 %v4888, %v5181
        %5183 = vmatprep.mubr.bf16.mxu0 %v4836
        %5184 = vmatmul.mubr.bf16.gmra.mrb[0].mxu0 %v4835
        %v5185 = vpop.f32.mrb[0].mxu0
        %v5186 = vadd.f32 %v4884, %v5185
        %v5187 = vpop.f32.mrb[0].mxu0
        %v5188 = vadd.f32 %v4888, %v5187
        %v5189 = vpop.f32.mrb[0].mxu0
        %v5190 = vadd.f32 %v4884, %v5189
        %v5191 = vpop.f32.mrb[0].mxu0
        %v5192 = vadd.f32 %v4888, %v5191
        %5193 = vmatprep.mubr.bf16.mxu0 %v4838
        %5194 = vmatmul.mubr.bf16.gmra.mrb[0].mxu0 %v4837
        %v5195 = vpop.f32.mrb[0].mxu0
        %v5196 = vadd.f32 %v4884, %v5195
        %v5197 = vpop.f32.mrb[0].mxu0
        %v5198 = vadd.f32 %v4888, %v5197
        %v5199 = vpop.f32.mrb[0].mxu0
        %v5200 = vadd.f32 %v4884, %v5199
        %v5201 = vpop.f32.mrb[0].mxu0
        %v5202 = vadd.f32 %v4888, %v5201
        %5203 = vmatprep.mubr.bf16.mxu0 %v4840
        %5204 = vmatmul.mubr.bf16.gmra.mrb[0].mxu0 %v4839
        %v5205 = vpop.f32.mrb[0].mxu0
        %v5206 = vadd.f32 %v4884, %v5205
        %v5207 = vpop.f32.mrb[0].mxu0
        %v5208 = vadd.f32 %v4888, %v5207
        %v5209 = vpop.f32.mrb[0].mxu0
        %v5210 = vadd.f32 %v4884, %v5209
        %v5211 = vpop.f32.mrb[0].mxu0
        %v5212 = vadd.f32 %v4888, %v5211
        %5213 = vmatprep.mubr.bf16.mxu0 %v4842
        %5214 = vmatmul.mubr.bf16.gmra.mrb[0].mxu0 %v4841
        %v5215 = vpop.f32.mrb[0].mxu0
        %v5216 = vadd.f32 %v4884, %v5215
        %v5217 = vpop.f32.mrb[0].mxu0
        %v5218 = vadd.f32 %v4888, %v5217
        %v5219 = vpop.f32.mrb[0].mxu0
        %v5220 = vadd.f32 %v4884, %v5219
        %v5221 = vpop.f32.mrb[0].mxu0
        %v5222 = vadd.f32 %v4888, %v5221
        %5223 = vmatprep.mubr.bf16.mxu0 %v4844
        %5224 = vmatmul.mubr.bf16.gmra.mrb[0].mxu0 %v4843
        %v5225 = vpop.f32.mrb[0].mxu0
        %v5226 = vadd.f32 %v4884, %v5225
        %v5227 = vpop.f32.mrb[0].mxu0
        %v5228 = vadd.f32 %v4888, %v5227
        %v5229 = vpop.f32.mrb[0].mxu0
        %v5230 = vadd.f32 %v4884, %v5229
        %v5231 = vpop.f32.mrb[0].mxu0
        %v5232 = vadd.f32 %v4888, %v5231
        %5233 = vmatprep.mubr.bf16.mxu0 %v4846
        %5234 = vmatmul.mubr.bf16.gmra.mrb[0].mxu0 %v4845
        %v5235 = vpop.f32.mrb[0].mxu0
        %v5236 = vadd.f32 %v4884, %v5235
        %v5237 = vpop.f32.mrb[0].mxu0
        %v5238 = vadd.f32 %v4888, %v5237
        %v5239 = vpop.f32.mrb[0].mxu0
        %v5240 = vadd.f32 %v4884, %v5239
        %v5241 = vpop.f32.mrb[0].mxu0
        %v5242 = vadd.f32 %v4888, %v5241
        %5243 = vdwg.mxu0
        %v5244 = vmul.f32 %v5086, %v5086
        %v5245 = vmul.f32 %v5088, %v5088
        %v5246 = vmul.f32 %v5090, %v5090
        %v5247 = vmul.f32 %v5092, %v5092
        %v5248 = vmul.f32 %v5096, %v5096
        %v5249 = vmul.f32 %v5098, %v5098
        %v5250 = vmul.f32 %v5100, %v5100
        %v5251 = vmul.f32 %v5102, %v5102
        %v5252 = vmul.f32 %v5106, %v5106
        %v5253 = vmul.f32 %v5108, %v5108
        %v5254 = vmul.f32 %v5110, %v5110
        %v5255 = vmul.f32 %v5112, %v5112
        %v5256 = vmul.f32 %v5116, %v5116
        %v5257 = vmul.f32 %v5118, %v5118
        %v5258 = vmul.f32 %v5120, %v5120
        %v5259 = vmul.f32 %v5122, %v5122
        %v5260 = vmul.f32 %v5126, %v5126
        %v5261 = vmul.f32 %v5128, %v5128
        %v5262 = vmul.f32 %v5130, %v5130
        %v5263 = vmul.f32 %v5132, %v5132
        %v5264 = vmul.f32 %v5136, %v5136
        %v5265 = vmul.f32 %v5138, %v5138
        %v5266 = vmul.f32 %v5140, %v5140
        %v5267 = vmul.f32 %v5142, %v5142
        %v5268 = vmul.f32 %v5146, %v5146
        %v5269 = vmul.f32 %v5148, %v5148
        %v5270 = vmul.f32 %v5150, %v5150
        %v5271 = vmul.f32 %v5152, %v5152
        %v5272 = vmul.f32 %v5156, %v5156
        %v5273 = vmul.f32 %v5158, %v5158
        %v5274 = vmul.f32 %v5160, %v5160
        %v5275 = vmul.f32 %v5162, %v5162
        %v5276 = vmul.f32 %v5166, %v5166
        %v5277 = vmul.f32 %v5168, %v5168
        %v5278 = vmul.f32 %v5170, %v5170
        %v5279 = vmul.f32 %v5172, %v5172
        %v5280 = vmul.f32 %v5176, %v5176
        %v5281 = vmul.f32 %v5178, %v5178
        %v5282 = vmul.f32 %v5180, %v5180
        %v5283 = vmul.f32 %v5182, %v5182
        %v5284 = vmul.f32 %v5186, %v5186
        %v5285 = vmul.f32 %v5188, %v5188
        %v5286 = vmul.f32 %v5190, %v5190
        %v5287 = vmul.f32 %v5192, %v5192
        %v5288 = vmul.f32 %v5196, %v5196
        %v5289 = vmul.f32 %v5198, %v5198
        %v5290 = vmul.f32 %v5200, %v5200
        %v5291 = vmul.f32 %v5202, %v5202
        %v5292 = vmul.f32 %v5206, %v5206
        %v5293 = vmul.f32 %v5208, %v5208
        %v5294 = vmul.f32 %v5210, %v5210
        %v5295 = vmul.f32 %v5212, %v5212
        %v5296 = vmul.f32 %v5216, %v5216
        %v5297 = vmul.f32 %v5218, %v5218
        %v5298 = vmul.f32 %v5220, %v5220
        %v5299 = vmul.f32 %v5222, %v5222
        %v5300 = vmul.f32 %v5226, %v5226
        %v5301 = vmul.f32 %v5228, %v5228
        %v5302 = vmul.f32 %v5230, %v5230
        %v5303 = vmul.f32 %v5232, %v5232
        %v5304 = vmul.f32 %v5236, %v5236
        %v5305 = vmul.f32 %v5238, %v5238
        %v5306 = vmul.f32 %v5240, %v5240
        %v5307 = vmul.f32 %v5242, %v5242
        %v5308 = vadd.f32 %v5244, %v5245
        %5309 = vadd.xlane.f32.xlu0 %v5308
        %v5310 = vpop.xlane.xlu0 %5309
        %v5311 = vadd.f32 %v5246, %v5247
        %5312 = vadd.xlane.f32.xlu0 %v5311
        %v5313 = vpop.xlane.xlu0 %5312
        %v5314 = vadd.f32 %v5248, %v5249
        %5315 = vadd.xlane.f32.xlu0 %v5314
        %v5316 = vpop.xlane.xlu0 %5315
        %v5317 = vadd.f32 %v5250, %v5251
        %5318 = vadd.xlane.f32.xlu0 %v5317
        %v5319 = vpop.xlane.xlu0 %5318
        %v5320 = vadd.f32 %v5252, %v5253
        %5321 = vadd.xlane.f32.xlu0 %v5320
        %v5322 = vpop.xlane.xlu0 %5321
        %v5323 = vadd.f32 %v5254, %v5255
        %5324 = vadd.xlane.f32.xlu0 %v5323
        %v5325 = vpop.xlane.xlu0 %5324
        %v5326 = vadd.f32 %v5256, %v5257
        %5327 = vadd.xlane.f32.xlu0 %v5326
        %v5328 = vpop.xlane.xlu0 %5327
        %v5329 = vadd.f32 %v5258, %v5259
        %5330 = vadd.xlane.f32.xlu0 %v5329
        %v5331 = vpop.xlane.xlu0 %5330
        %v5332 = vadd.f32 %v5260, %v5261
        %5333 = vadd.xlane.f32.xlu0 %v5332
        %v5334 = vpop.xlane.xlu0 %5333
        %v5335 = vadd.f32 %v5262, %v5263
        %5336 = vadd.xlane.f32.xlu0 %v5335
        %v5337 = vpop.xlane.xlu0 %5336
        %v5338 = vadd.f32 %v5264, %v5265
        %5339 = vadd.xlane.f32.xlu0 %v5338
        %v5340 = vpop.xlane.xlu0 %5339
        %v5341 = vadd.f32 %v5266, %v5267
        %5342 = vadd.xlane.f32.xlu0 %v5341
        %v5343 = vpop.xlane.xlu0 %5342
        %v5344 = vadd.f32 %v5268, %v5269
        %5345 = vadd.xlane.f32.xlu0 %v5344
        %v5346 = vpop.xlane.xlu0 %5345
        %v5347 = vadd.f32 %v5270, %v5271
        %5348 = vadd.xlane.f32.xlu0 %v5347
        %v5349 = vpop.xlane.xlu0 %5348
        %v5350 = vadd.f32 %v5272, %v5273
        %5351 = vadd.xlane.f32.xlu0 %v5350
        %v5352 = vpop.xlane.xlu0 %5351
        %v5353 = vadd.f32 %v5274, %v5275
        %5354 = vadd.xlane.f32.xlu0 %v5353
        %v5355 = vpop.xlane.xlu0 %5354
        %v5356 = vadd.f32 %v5276, %v5277
        %5357 = vadd.xlane.f32.xlu0 %v5356
        %v5358 = vpop.xlane.xlu0 %5357
        %v5359 = vadd.f32 %v5278, %v5279
        %5360 = vadd.xlane.f32.xlu0 %v5359
        %v5361 = vpop.xlane.xlu0 %5360
        %v5362 = vadd.f32 %v5280, %v5281
        %5363 = vadd.xlane.f32.xlu0 %v5362
        %v5364 = vpop.xlane.xlu0 %5363
        %v5365 = vadd.f32 %v5282, %v5283
        %5366 = vadd.xlane.f32.xlu0 %v5365
        %v5367 = vpop.xlane.xlu0 %5366
        %v5368 = vadd.f32 %v5284, %v5285
        %5369 = vadd.xlane.f32.xlu0 %v5368
        %v5370 = vpop.xlane.xlu0 %5369
        %v5371 = vadd.f32 %v5286, %v5287
        %5372 = vadd.xlane.f32.xlu0 %v5371
        %v5373 = vpop.xlane.xlu0 %5372
        %v5374 = vadd.f32 %v5288, %v5289
        %5375 = vadd.xlane.f32.xlu0 %v5374
        %v5376 = vpop.xlane.xlu0 %5375
        %v5377 = vadd.f32 %v5290, %v5291
        %5378 = vadd.xlane.f32.xlu0 %v5377
        %v5379 = vpop.xlane.xlu0 %5378
        %v5380 = vadd.f32 %v5292, %v5293
        %5381 = vadd.xlane.f32.xlu0 %v5380
        %v5382 = vpop.xlane.xlu0 %5381
        %v5383 = vadd.f32 %v5294, %v5295
        %5384 = vadd.xlane.f32.xlu0 %v5383
        %v5385 = vpop.xlane.xlu0 %5384
        %v5386 = vadd.f32 %v5296, %v5297
        %5387 = vadd.xlane.f32.xlu0 %v5386
        %v5388 = vpop.xlane.xlu0 %5387
        %v5389 = vadd.f32 %v5298, %v5299
        %5390 = vadd.xlane.f32.xlu0 %v5389
        %v5391 = vpop.xlane.xlu0 %5390
        %v5392 = vadd.f32 %v5300, %v5301
        %5393 = vadd.xlane.f32.xlu0 %v5392
        %v5394 = vpop.xlane.xlu0 %5393
        %v5395 = vadd.f32 %v5302, %v5303
        %5396 = vadd.xlane.f32.xlu0 %v5395
        %v5397 = vpop.xlane.xlu0 %5396
        %v5398 = vadd.f32 %v5304, %v5305
        %5399 = vadd.xlane.f32.xlu0 %v5398
        %v5400 = vpop.xlane.xlu0 %5399
        %v5401 = vadd.f32 %v5306, %v5307
        %5402 = vadd.xlane.f32.xlu0 %v5401
        %v5403 = vpop.xlane.xlu0 %5402
        %v5404 = vld [vmem:[#allocation14] sm:$0xff]
        %v5405 = vld [vmem:[#allocation14 + $0x8] sm:$0xff]
        %v5406 = vld [vmem:[#allocation14 + $0x10] sm:$0xff]
        %v5407 = vld [vmem:[#allocation14 + $0x18] sm:$0xff]
        %v5408 = vld [vmem:[#allocation14 + $0x20] sm:$0xff]
        %v5409 = vld [vmem:[#allocation14 + $0x28] sm:$0xff]
        %v5410 = vld [vmem:[#allocation14 + $0x30] sm:$0xff]
        %v5411 = vld [vmem:[#allocation14 + $0x38] sm:$0xff]
        %v5412 = vld [vmem:[#allocation14 + $0x40] sm:$0xff]
        %v5413 = vld [vmem:[#allocation14 + $0x48] sm:$0xff]
        %v5414 = vld [vmem:[#allocation14 + $0x50] sm:$0xff]
        %v5415 = vld [vmem:[#allocation14 + $0x58] sm:$0xff]
        %v5416 = vld [vmem:[#allocation14 + $0x60] sm:$0xff]
        %v5417 = vld [vmem:[#allocation14 + $0x68] sm:$0xff]
        %v5418 = vld [vmem:[#allocation14 + $0x70] sm:$0xff]
        %v5419 = vld [vmem:[#allocation14 + $0x78] sm:$0xff]
        %v5420 = vld [vmem:[#allocation14 + $0x80] sm:$0xff]
        %v5421 = vld [vmem:[#allocation14 + $0x88] sm:$0xff]
        %v5422 = vld [vmem:[#allocation14 + $0x90] sm:$0xff]
        %v5423 = vld [vmem:[#allocation14 + $0x98] sm:$0xff]
        %v5424 = vld [vmem:[#allocation14 + $0xa0] sm:$0xff]
        %v5425 = vld [vmem:[#allocation14 + $0xa8] sm:$0xff]
        %v5426 = vld [vmem:[#allocation14 + $0xb0] sm:$0xff]
        %v5427 = vld [vmem:[#allocation14 + $0xb8] sm:$0xff]
        %v5428 = vld [vmem:[#allocation14 + $0xc0] sm:$0xff]
        %v5429 = vld [vmem:[#allocation14 + $0xc8] sm:$0xff]
        %v5430 = vld [vmem:[#allocation14 + $0xd0] sm:$0xff]
        %v5431 = vld [vmem:[#allocation14 + $0xd8] sm:$0xff]
        %v5432 = vld [vmem:[#allocation14 + $0xe0] sm:$0xff]
        %v5433 = vld [vmem:[#allocation14 + $0xe8] sm:$0xff]
        %v5434 = vld [vmem:[#allocation14 + $0xf0] sm:$0xff]
        %v5435 = vld [vmem:[#allocation14 + $0xf8] sm:$0xff]
        %5436 = vmatprep.subr.mxu0 0.0
        %5437 = vmatpush1.msra.mxu0 %v5404
        %5438 = vmatprep.subr.mxu0 0.0
        %5439 = vmatpush1.msra.mxu0 %v5405
        %5440 = vmatprep.subr.mxu0 0.0
        %5441 = vmatpush1.msra.mxu0 %v5406
        %5442 = vmatprep.subr.mxu0 0.0
        %5443 = vmatpush1.msra.mxu0 %v5407
        %5444 = vmatprep.subr.mxu0 0.0
        %5445 = vmatpush1.msra.mxu0 %v5408
        %5446 = vmatprep.subr.mxu0 0.0
        %5447 = vmatpush1.msra.mxu0 %v5409
        %5448 = vmatprep.subr.mxu0 0.0
        %5449 = vmatpush1.msra.mxu0 %v5410
        %5450 = vmatprep.subr.mxu0 0.0
        %5451 = vmatpush1.msra.mxu0 %v5411
        %5452 = vmatprep.subr.mxu0 0.0
        %5453 = vmatpush1.msra.mxu0 %v5412
        %5454 = vmatprep.subr.mxu0 0.0
        %5455 = vmatpush1.msra.mxu0 %v5413
        %5456 = vmatprep.subr.mxu0 0.0
        %5457 = vmatpush1.msra.mxu0 %v5414
        %5458 = vmatprep.subr.mxu0 0.0
        %5459 = vmatpush1.msra.mxu0 %v5415
        %5460 = vmatprep.subr.mxu0 0.0
        %5461 = vmatpush1.msra.mxu0 %v5416
        %5462 = vmatprep.subr.mxu0 0.0
        %5463 = vmatpush1.msra.mxu0 %v5417
        %5464 = vmatprep.subr.mxu0 0.0
        %5465 = vmatpush1.msra.mxu0 %v5418
        %5466 = vmatprep.subr.mxu0 0.0
        %5467 = vmatpush1.msra.mxu0 %v5419
        %5468 = vmatprep.subr.mxu0 0.0
        %5469 = vmatpush1.msra.mxu0 %v5420
        %5470 = vmatprep.subr.mxu0 0.0
        %5471 = vmatpush1.msra.mxu0 %v5421
        %5472 = vmatprep.subr.mxu0 0.0
        %5473 = vmatpush1.msra.mxu0 %v5422
        %5474 = vmatprep.subr.mxu0 0.0
        %5475 = vmatpush1.msra.mxu0 %v5423
        %5476 = vmatprep.subr.mxu0 0.0
        %5477 = vmatpush1.msra.mxu0 %v5424
        %5478 = vmatprep.subr.mxu0 0.0
        %5479 = vmatpush1.msra.mxu0 %v5425
        %5480 = vmatprep.subr.mxu0 0.0
        %5481 = vmatpush1.msra.mxu0 %v5426
        %5482 = vmatprep.subr.mxu0 0.0
        %5483 = vmatpush1.msra.mxu0 %v5427
        %5484 = vmatprep.subr.mxu0 0.0
        %5485 = vmatpush1.msra.mxu0 %v5428
        %5486 = vmatprep.subr.mxu0 0.0
        %5487 = vmatpush1.msra.mxu0 %v5429
        %5488 = vmatprep.subr.mxu0 0.0
        %5489 = vmatpush1.msra.mxu0 %v5430
        %5490 = vmatprep.subr.mxu0 0.0
        %5491 = vmatpush1.msra.mxu0 %v5431
        %5492 = vmatprep.subr.mxu0 0.0
        %5493 = vmatpush1.msra.mxu0 %v5432
        %5494 = vmatprep.subr.mxu0 0.0
        %5495 = vmatpush1.msra.mxu0 %v5433
        %5496 = vmatprep.subr.mxu0 0.0
        %5497 = vmatpush1.msra.mxu0 %v5434
        %5498 = vmatprep.subr.mxu0 0.0
        %5499 = vmatpush1.msra.mxu0 %v5435
        %5500 = vmatprep.mubr.f32.mxu0 %v5088
        %5501 = vmatmul.mubr.f32.gmra.mrb[0].mxu0 %v5086
        %v5502 = vpop.f32.mrb[0].mxu0
        %v5503 = vadd.f32 0.0, %v5502
        %v5504 = vpop.f32.mrb[0].mxu0
        %5505 = vmatprep.mubr.f32.mxu0 %v5092
        %5506 = vmatmul.mubr.f32.gmra.mrb[0].mxu0 %v5090
        %v5507 = vpop.f32.mrb[0].mxu0
        %v5508 = vadd.f32 0.0, %v5507
        %v5509 = vpop.f32.mrb[0].mxu0
        %5510 = vmatprep.mubr.f32.mxu0 %v5098
        %5511 = vmatmul.mubr.f32.gmra.mrb[0].mxu0 %v5096
        %v5512 = vpop.f32.mrb[0].mxu0
        %v5513 = vadd.f32 0.0, %v5512
        %v5514 = vpop.f32.mrb[0].mxu0
        %5515 = vmatprep.mubr.f32.mxu0 %v5102
        %5516 = vmatmul.mubr.f32.gmra.mrb[0].mxu0 %v5100
        %v5517 = vpop.f32.mrb[0].mxu0
        %v5518 = vadd.f32 0.0, %v5517
        %v5519 = vpop.f32.mrb[0].mxu0
        %5520 = vmatprep.mubr.f32.mxu0 %v5108
        %5521 = vmatmul.mubr.f32.gmra.mrb[0].mxu0 %v5106
        %v5522 = vpop.f32.mrb[0].mxu0
        %v5523 = vadd.f32 0.0, %v5522
        %v5524 = vpop.f32.mrb[0].mxu0
        %5525 = vmatprep.mubr.f32.mxu0 %v5112
        %5526 = vmatmul.mubr.f32.gmra.mrb[0].mxu0 %v5110
        %v5527 = vpop.f32.mrb[0].mxu0
        %v5528 = vadd.f32 0.0, %v5527
        %v5529 = vpop.f32.mrb[0].mxu0
        %5530 = vmatprep.mubr.f32.mxu0 %v5118
        %5531 = vmatmul.mubr.f32.gmra.mrb[0].mxu0 %v5116
        %v5532 = vpop.f32.mrb[0].mxu0
        %v5533 = vadd.f32 0.0, %v5532
        %v5534 = vpop.f32.mrb[0].mxu0
        %5535 = vmatprep.mubr.f32.mxu0 %v5122
        %5536 = vmatmul.mubr.f32.gmra.mrb[0].mxu0 %v5120
        %v5537 = vpop.f32.mrb[0].mxu0
        %v5538 = vadd.f32 0.0, %v5537
        %v5539 = vpop.f32.mrb[0].mxu0
        %5540 = vmatprep.mubr.f32.mxu0 %v5128
        %5541 = vmatmul.mubr.f32.gmra.mrb[0].mxu0 %v5126
        %v5542 = vpop.f32.mrb[0].mxu0
        %v5543 = vadd.f32 0.0, %v5542
        %v5544 = vpop.f32.mrb[0].mxu0
        %5545 = vmatprep.mubr.f32.mxu0 %v5132
        %5546 = vmatmul.mubr.f32.gmra.mrb[0].mxu0 %v5130
        %v5547 = vpop.f32.mrb[0].mxu0
        %v5548 = vadd.f32 0.0, %v5547
        %v5549 = vpop.f32.mrb[0].mxu0
        %5550 = vmatprep.mubr.f32.mxu0 %v5138
        %5551 = vmatmul.mubr.f32.gmra.mrb[0].mxu0 %v5136
        %v5552 = vpop.f32.mrb[0].mxu0
        %v5553 = vadd.f32 0.0, %v5552
        %v5554 = vpop.f32.mrb[0].mxu0
        %5555 = vmatprep.mubr.f32.mxu0 %v5142
        %5556 = vmatmul.mubr.f32.gmra.mrb[0].mxu0 %v5140
        %v5557 = vpop.f32.mrb[0].mxu0
        %v5558 = vadd.f32 0.0, %v5557
        %v5559 = vpop.f32.mrb[0].mxu0
        %5560 = vmatprep.mubr.f32.mxu0 %v5148
        %5561 = vmatmul.mubr.f32.gmra.mrb[0].mxu0 %v5146
        %v5562 = vpop.f32.mrb[0].mxu0
        %v5563 = vadd.f32 0.0, %v5562
        %v5564 = vpop.f32.mrb[0].mxu0
        %5565 = vmatprep.mubr.f32.mxu0 %v5152
        %5566 = vmatmul.mubr.f32.gmra.mrb[0].mxu0 %v5150
        %v5567 = vpop.f32.mrb[0].mxu0
        %v5568 = vadd.f32 0.0, %v5567
        %v5569 = vpop.f32.mrb[0].mxu0
        %5570 = vmatprep.mubr.f32.mxu0 %v5158
        %5571 = vmatmul.mubr.f32.gmra.mrb[0].mxu0 %v5156
        %v5572 = vpop.f32.mrb[0].mxu0
        %v5573 = vadd.f32 0.0, %v5572
        %v5574 = vpop.f32.mrb[0].mxu0
        %5575 = vmatprep.mubr.f32.mxu0 %v5162
        %5576 = vmatmul.mubr.f32.gmra.mrb[0].mxu0 %v5160
        %v5577 = vpop.f32.mrb[0].mxu0
        %v5578 = vadd.f32 0.0, %v5577
        %v5579 = vpop.f32.mrb[0].mxu0
        %5580 = vmatprep.mubr.f32.mxu0 %v5168
        %5581 = vmatmul.mubr.f32.gmra.mrb[0].mxu0 %v5166
        %v5582 = vpop.f32.mrb[0].mxu0
        %v5583 = vadd.f32 0.0, %v5582
        %v5584 = vpop.f32.mrb[0].mxu0
        %5585 = vmatprep.mubr.f32.mxu0 %v5172
        %5586 = vmatmul.mubr.f32.gmra.mrb[0].mxu0 %v5170
        %v5587 = vpop.f32.mrb[0].mxu0
        %v5588 = vadd.f32 0.0, %v5587
        %v5589 = vpop.f32.mrb[0].mxu0
        %5590 = vmatprep.mubr.f32.mxu0 %v5178
        %5591 = vmatmul.mubr.f32.gmra.mrb[0].mxu0 %v5176
        %v5592 = vpop.f32.mrb[0].mxu0
        %v5593 = vadd.f32 0.0, %v5592
        %v5594 = vpop.f32.mrb[0].mxu0
        %5595 = vmatprep.mubr.f32.mxu0 %v5182
        %5596 = vmatmul.mubr.f32.gmra.mrb[0].mxu0 %v5180
        %v5597 = vpop.f32.mrb[0].mxu0
        %v5598 = vadd.f32 0.0, %v5597
        %v5599 = vpop.f32.mrb[0].mxu0
        %5600 = vmatprep.mubr.f32.mxu0 %v5188
        %5601 = vmatmul.mubr.f32.gmra.mrb[0].mxu0 %v5186
        %v5602 = vpop.f32.mrb[0].mxu0
        %v5603 = vadd.f32 0.0, %v5602
        %v5604 = vpop.f32.mrb[0].mxu0
        %5605 = vmatprep.mubr.f32.mxu0 %v5192
        %5606 = vmatmul.mubr.f32.gmra.mrb[0].mxu0 %v5190
        %v5607 = vpop.f32.mrb[0].mxu0
        %v5608 = vadd.f32 0.0, %v5607
        %v5609 = vpop.f32.mrb[0].mxu0
        %5610 = vmatprep.mubr.f32.mxu0 %v5198
        %5611 = vmatmul.mubr.f32.gmra.mrb[0].mxu0 %v5196
        %v5612 = vpop.f32.mrb[0].mxu0
        %v5613 = vadd.f32 0.0, %v5612
        %v5614 = vpop.f32.mrb[0].mxu0
        %5615 = vmatprep.mubr.f32.mxu0 %v5202
        %5616 = vmatmul.mubr.f32.gmra.mrb[0].mxu0 %v5200
        %v5617 = vpop.f32.mrb[0].mxu0
        %v5618 = vadd.f32 0.0, %v5617
        %v5619 = vpop.f32.mrb[0].mxu0
        %5620 = vmatprep.mubr.f32.mxu0 %v5208
        %5621 = vmatmul.mubr.f32.gmra.mrb[0].mxu0 %v5206
        %v5622 = vpop.f32.mrb[0].mxu0
        %v5623 = vadd.f32 0.0, %v5622
        %v5624 = vpop.f32.mrb[0].mxu0
        %5625 = vmatprep.mubr.f32.mxu0 %v5212
        %5626 = vmatmul.mubr.f32.gmra.mrb[0].mxu0 %v5210
        %v5627 = vpop.f32.mrb[0].mxu0
        %v5628 = vadd.f32 0.0, %v5627
        %v5629 = vpop.f32.mrb[0].mxu0
        %5630 = vmatprep.mubr.f32.mxu0 %v5218
        %5631 = vmatmul.mubr.f32.gmra.mrb[0].mxu0 %v5216
        %v5632 = vpop.f32.mrb[0].mxu0
        %v5633 = vadd.f32 0.0, %v5632
        %v5634 = vpop.f32.mrb[0].mxu0
        %5635 = vmatprep.mubr.f32.mxu0 %v5222
        %5636 = vmatmul.mubr.f32.gmra.mrb[0].mxu0 %v5220
        %v5637 = vpop.f32.mrb[0].mxu0
        %v5638 = vadd.f32 0.0, %v5637
        %v5639 = vpop.f32.mrb[0].mxu0
        %5640 = vmatprep.mubr.f32.mxu0 %v5228
        %5641 = vmatmul.mubr.f32.gmra.mrb[0].mxu0 %v5226
        %v5642 = vpop.f32.mrb[0].mxu0
        %v5643 = vadd.f32 0.0, %v5642
        %v5644 = vpop.f32.mrb[0].mxu0
        %5645 = vmatprep.mubr.f32.mxu0 %v5232
        %5646 = vmatmul.mubr.f32.gmra.mrb[0].mxu0 %v5230
        %v5647 = vpop.f32.mrb[0].mxu0
        %v5648 = vadd.f32 0.0, %v5647
        %v5649 = vpop.f32.mrb[0].mxu0
        %5650 = vmatprep.mubr.f32.mxu0 %v5238
        %5651 = vmatmul.mubr.f32.gmra.mrb[0].mxu0 %v5236
        %v5652 = vpop.f32.mrb[0].mxu0
        %v5653 = vadd.f32 0.0, %v5652
        %v5654 = vpop.f32.mrb[0].mxu0
        %5655 = vmatprep.mubr.f32.mxu0 %v5242
        %5656 = vmatmul.mubr.f32.gmra.mrb[0].mxu0 %v5240
        %v5657 = vpop.f32.mrb[0].mxu0
        %v5658 = vadd.f32 0.0, %v5657
        %v5659 = vpop.f32.mrb[0].mxu0
        %5660 = vdwg.mxu0
        %v5661 = vld [vmem:[%s14] sm:$0x1]
        %v5663 = vlaneseq
        %v5664 = vshrl.u32 %v5663, 7
        %v5665 = vsub.s32 0, %v5664
        %v5666 = vrot.slane %v5661, %v5665
        %v5668 = vadd.f32 %v5310, %v5666
        %v5669 = vadd.f32 %v5313, %v5666
        %v5670 = vadd.f32 %v5316, %v5666
        %v5671 = vadd.f32 %v5319, %v5666
        %v5672 = vadd.f32 %v5322, %v5666
        %v5673 = vadd.f32 %v5325, %v5666
        %v5674 = vadd.f32 %v5328, %v5666
        %v5675 = vadd.f32 %v5331, %v5666
        %v5676 = vadd.f32 %v5334, %v5666
        %v5677 = vadd.f32 %v5337, %v5666
        %v5678 = vadd.f32 %v5340, %v5666
        %v5679 = vadd.f32 %v5343, %v5666
        %v5680 = vadd.f32 %v5346, %v5666
        %v5681 = vadd.f32 %v5349, %v5666
        %v5682 = vadd.f32 %v5352, %v5666
        %v5683 = vadd.f32 %v5355, %v5666
        %v5684 = vadd.f32 %v5358, %v5666
        %v5685 = vadd.f32 %v5361, %v5666
        %v5686 = vadd.f32 %v5364, %v5666
        %v5687 = vadd.f32 %v5367, %v5666
        %v5688 = vadd.f32 %v5370, %v5666
        %v5689 = vadd.f32 %v5373, %v5666
        %v5690 = vadd.f32 %v5376, %v5666
        %v5691 = vadd.f32 %v5379, %v5666
        %v5692 = vadd.f32 %v5382, %v5666
        %v5693 = vadd.f32 %v5385, %v5666
        %v5694 = vadd.f32 %v5388, %v5666
        %v5695 = vadd.f32 %v5391, %v5666
        %v5696 = vadd.f32 %v5394, %v5666
        %v5697 = vadd.f32 %v5397, %v5666
        %v5698 = vadd.f32 %v5400, %v5666
        %v5699 = vadd.f32 %v5403, %v5666
        %v5700 = vmul.f32 %v5503, 2.0
        %v5701 = vmul.f32 %v5508, 2.0
        %v5702 = vmul.f32 %v5513, 2.0
        %v5703 = vmul.f32 %v5518, 2.0
        %v5704 = vmul.f32 %v5523, 2.0
        %v5705 = vmul.f32 %v5528, 2.0
        %v5706 = vmul.f32 %v5533, 2.0
        %v5707 = vmul.f32 %v5538, 2.0
        %v5708 = vmul.f32 %v5543, 2.0
        %v5709 = vmul.f32 %v5548, 2.0
        %v5710 = vmul.f32 %v5553, 2.0
        %v5711 = vmul.f32 %v5558, 2.0
        %v5712 = vmul.f32 %v5563, 2.0
        %v5713 = vmul.f32 %v5568, 2.0
        %v5714 = vmul.f32 %v5573, 2.0
        %v5715 = vmul.f32 %v5578, 2.0
        %v5716 = vmul.f32 %v5583, 2.0
        %v5717 = vmul.f32 %v5588, 2.0
        %v5718 = vmul.f32 %v5593, 2.0
        %v5719 = vmul.f32 %v5598, 2.0
        %v5720 = vmul.f32 %v5603, 2.0
        %v5721 = vmul.f32 %v5608, 2.0
        %v5722 = vmul.f32 %v5613, 2.0
        %v5723 = vmul.f32 %v5618, 2.0
        %v5724 = vmul.f32 %v5623, 2.0
        %v5725 = vmul.f32 %v5628, 2.0
        %v5726 = vmul.f32 %v5633, 2.0
        %v5727 = vmul.f32 %v5638, 2.0
        %v5728 = vmul.f32 %v5643, 2.0
        %v5729 = vmul.f32 %v5648, 2.0
        %v5730 = vmul.f32 %v5653, 2.0
        %v5731 = vmul.f32 %v5658, 2.0
        %v5732 = vsub.f32 %v5668, %v5700
        %v5733 = vsub.f32 %v5669, %v5701
        %v5734 = vsub.f32 %v5670, %v5702
        %v5735 = vsub.f32 %v5671, %v5703
        %v5736 = vsub.f32 %v5672, %v5704
        %v5737 = vsub.f32 %v5673, %v5705
        %v5738 = vsub.f32 %v5674, %v5706
        %v5739 = vsub.f32 %v5675, %v5707
        %v5740 = vsub.f32 %v5676, %v5708
        %v5741 = vsub.f32 %v5677, %v5709
        %v5742 = vsub.f32 %v5678, %v5710
        %v5743 = vsub.f32 %v5679, %v5711
        %v5744 = vsub.f32 %v5680, %v5712
        %v5745 = vsub.f32 %v5681, %v5713
        %v5746 = vsub.f32 %v5682, %v5714
        %v5747 = vsub.f32 %v5683, %v5715
        %v5748 = vsub.f32 %v5684, %v5716
        %v5749 = vsub.f32 %v5685, %v5717
        %v5750 = vsub.f32 %v5686, %v5718
        %v5751 = vsub.f32 %v5687, %v5719
        %v5752 = vsub.f32 %v5688, %v5720
        %v5753 = vsub.f32 %v5689, %v5721
        %v5754 = vsub.f32 %v5690, %v5722
        %v5755 = vsub.f32 %v5691, %v5723
        %v5756 = vsub.f32 %v5692, %v5724
        %v5757 = vsub.f32 %v5693, %v5725
        %v5758 = vsub.f32 %v5694, %v5726
        %v5759 = vsub.f32 %v5695, %v5727
        %v5760 = vsub.f32 %v5696, %v5728
        %v5761 = vsub.f32 %v5697, %v5729
        %v5762 = vsub.f32 %v5698, %v5730
        %v5763 = vsub.f32 %v5699, %v5731
        %v5764 = vmax.f32 %v5732, 0.0
        %v5765 = vmax.f32 %v5733, 0.0
        %v5766 = vmax.f32 %v5734, 0.0
        %v5767 = vmax.f32 %v5735, 0.0
        %v5768 = vmax.f32 %v5736, 0.0
        %v5769 = vmax.f32 %v5737, 0.0
        %v5770 = vmax.f32 %v5738, 0.0
        %v5771 = vmax.f32 %v5739, 0.0
        %v5772 = vmax.f32 %v5740, 0.0
        %v5773 = vmax.f32 %v5741, 0.0
        %v5774 = vmax.f32 %v5742, 0.0
        %v5775 = vmax.f32 %v5743, 0.0
        %v5776 = vmax.f32 %v5744, 0.0
        %v5777 = vmax.f32 %v5745, 0.0
        %v5778 = vmax.f32 %v5746, 0.0
        %v5779 = vmax.f32 %v5747, 0.0
        %v5780 = vmax.f32 %v5748, 0.0
        %v5781 = vmax.f32 %v5749, 0.0
        %v5782 = vmax.f32 %v5750, 0.0
        %v5783 = vmax.f32 %v5751, 0.0
        %v5784 = vmax.f32 %v5752, 0.0
        %v5785 = vmax.f32 %v5753, 0.0
        %v5786 = vmax.f32 %v5754, 0.0
        %v5787 = vmax.f32 %v5755, 0.0
        %v5788 = vmax.f32 %v5756, 0.0
        %v5789 = vmax.f32 %v5757, 0.0
        %v5790 = vmax.f32 %v5758, 0.0
        %v5791 = vmax.f32 %v5759, 0.0
        %v5792 = vmax.f32 %v5760, 0.0
        %v5793 = vmax.f32 %v5761, 0.0
        %v5794 = vmax.f32 %v5762, 0.0
        %v5795 = vmax.f32 %v5763, 0.0
        %v5796 = vrsqrt.pop %v5764
        %v5797 = vmul.f32 %v5764, %v5796
        %vm5798 = vcmp.eq.f32.partialorder %v5764, inf
        %v5799 = vsel %vm5798, %v5764, %v5797
        %vm5800 = vcmp.eq.f32.partialorder %v5764, 0.0
        %v5801 = vand.u32 %v5764, 2147483648
        %v5802 = vsel %vm5800, %v5801, %v5799
        %v5803 = vrsqrt.pop %v5765
        %v5804 = vmul.f32 %v5765, %v5803
        %vm5805 = vcmp.eq.f32.partialorder %v5765, inf
        %v5806 = vsel %vm5805, %v5765, %v5804
        %vm5807 = vcmp.eq.f32.partialorder %v5765, 0.0
        %v5808 = vand.u32 %v5765, 2147483648
        %v5809 = vsel %vm5807, %v5808, %v5806
        %v5810 = vrsqrt.pop %v5766
        %v5811 = vmul.f32 %v5766, %v5810
        %vm5812 = vcmp.eq.f32.partialorder %v5766, inf
        %v5813 = vsel %vm5812, %v5766, %v5811
        %vm5814 = vcmp.eq.f32.partialorder %v5766, 0.0
        %v5815 = vand.u32 %v5766, 2147483648
        %v5816 = vsel %vm5814, %v5815, %v5813
        %v5817 = vrsqrt.pop %v5767
        %v5818 = vmul.f32 %v5767, %v5817
        %vm5819 = vcmp.eq.f32.partialorder %v5767, inf
        %v5820 = vsel %vm5819, %v5767, %v5818
        %vm5821 = vcmp.eq.f32.partialorder %v5767, 0.0
        %v5822 = vand.u32 %v5767, 2147483648
        %v5823 = vsel %vm5821, %v5822, %v5820
        %v5824 = vrsqrt.pop %v5768
        %v5825 = vmul.f32 %v5768, %v5824
        %vm5826 = vcmp.eq.f32.partialorder %v5768, inf
        %v5827 = vsel %vm5826, %v5768, %v5825
        %vm5828 = vcmp.eq.f32.partialorder %v5768, 0.0
        %v5829 = vand.u32 %v5768, 2147483648
        %v5830 = vsel %vm5828, %v5829, %v5827
        %v5831 = vrsqrt.pop %v5769
        %v5832 = vmul.f32 %v5769, %v5831
        %vm5833 = vcmp.eq.f32.partialorder %v5769, inf
        %v5834 = vsel %vm5833, %v5769, %v5832
        %vm5835 = vcmp.eq.f32.partialorder %v5769, 0.0
        %v5836 = vand.u32 %v5769, 2147483648
        %v5837 = vsel %vm5835, %v5836, %v5834
        %v5838 = vrsqrt.pop %v5770
        %v5839 = vmul.f32 %v5770, %v5838
        %vm5840 = vcmp.eq.f32.partialorder %v5770, inf
        %v5841 = vsel %vm5840, %v5770, %v5839
        %vm5842 = vcmp.eq.f32.partialorder %v5770, 0.0
        %v5843 = vand.u32 %v5770, 2147483648
        %v5844 = vsel %vm5842, %v5843, %v5841
        %v5845 = vrsqrt.pop %v5771
        %v5846 = vmul.f32 %v5771, %v5845
        %vm5847 = vcmp.eq.f32.partialorder %v5771, inf
        %v5848 = vsel %vm5847, %v5771, %v5846
        %vm5849 = vcmp.eq.f32.partialorder %v5771, 0.0
        %v5850 = vand.u32 %v5771, 2147483648
        %v5851 = vsel %vm5849, %v5850, %v5848
        %v5852 = vrsqrt.pop %v5772
        %v5853 = vmul.f32 %v5772, %v5852
        %vm5854 = vcmp.eq.f32.partialorder %v5772, inf
        %v5855 = vsel %vm5854, %v5772, %v5853
        %vm5856 = vcmp.eq.f32.partialorder %v5772, 0.0
        %v5857 = vand.u32 %v5772, 2147483648
        %v5858 = vsel %vm5856, %v5857, %v5855
        %v5859 = vrsqrt.pop %v5773
        %v5860 = vmul.f32 %v5773, %v5859
        %vm5861 = vcmp.eq.f32.partialorder %v5773, inf
        %v5862 = vsel %vm5861, %v5773, %v5860
        %vm5863 = vcmp.eq.f32.partialorder %v5773, 0.0
        %v5864 = vand.u32 %v5773, 2147483648
        %v5865 = vsel %vm5863, %v5864, %v5862
        %v5866 = vrsqrt.pop %v5774
        %v5867 = vmul.f32 %v5774, %v5866
        %vm5868 = vcmp.eq.f32.partialorder %v5774, inf
        %v5869 = vsel %vm5868, %v5774, %v5867
        %vm5870 = vcmp.eq.f32.partialorder %v5774, 0.0
        %v5871 = vand.u32 %v5774, 2147483648
        %v5872 = vsel %vm5870, %v5871, %v5869
        %v5873 = vrsqrt.pop %v5775
        %v5874 = vmul.f32 %v5775, %v5873
        %vm5875 = vcmp.eq.f32.partialorder %v5775, inf
        %v5876 = vsel %vm5875, %v5775, %v5874
        %vm5877 = vcmp.eq.f32.partialorder %v5775, 0.0
        %v5878 = vand.u32 %v5775, 2147483648
        %v5879 = vsel %vm5877, %v5878, %v5876
        %v5880 = vrsqrt.pop %v5776
        %v5881 = vmul.f32 %v5776, %v5880
        %vm5882 = vcmp.eq.f32.partialorder %v5776, inf
        %v5883 = vsel %vm5882, %v5776, %v5881
        %vm5884 = vcmp.eq.f32.partialorder %v5776, 0.0
        %v5885 = vand.u32 %v5776, 2147483648
        %v5886 = vsel %vm5884, %v5885, %v5883
        %v5887 = vrsqrt.pop %v5777
        %v5888 = vmul.f32 %v5777, %v5887
        %vm5889 = vcmp.eq.f32.partialorder %v5777, inf
        %v5890 = vsel %vm5889, %v5777, %v5888
        %vm5891 = vcmp.eq.f32.partialorder %v5777, 0.0
        %v5892 = vand.u32 %v5777, 2147483648
        %v5893 = vsel %vm5891, %v5892, %v5890
        %v5894 = vrsqrt.pop %v5778
        %v5895 = vmul.f32 %v5778, %v5894
        %vm5896 = vcmp.eq.f32.partialorder %v5778, inf
        %v5897 = vsel %vm5896, %v5778, %v5895
        %vm5898 = vcmp.eq.f32.partialorder %v5778, 0.0
        %v5899 = vand.u32 %v5778, 2147483648
        %v5900 = vsel %vm5898, %v5899, %v5897
        %v5901 = vrsqrt.pop %v5779
        %v5902 = vmul.f32 %v5779, %v5901
        %vm5903 = vcmp.eq.f32.partialorder %v5779, inf
        %v5904 = vsel %vm5903, %v5779, %v5902
        %vm5905 = vcmp.eq.f32.partialorder %v5779, 0.0
        %v5906 = vand.u32 %v5779, 2147483648
        %v5907 = vsel %vm5905, %v5906, %v5904
        %v5908 = vrsqrt.pop %v5780
        %v5909 = vmul.f32 %v5780, %v5908
        %vm5910 = vcmp.eq.f32.partialorder %v5780, inf
        %v5911 = vsel %vm5910, %v5780, %v5909
        %vm5912 = vcmp.eq.f32.partialorder %v5780, 0.0
        %v5913 = vand.u32 %v5780, 2147483648
        %v5914 = vsel %vm5912, %v5913, %v5911
        %v5915 = vrsqrt.pop %v5781
        %v5916 = vmul.f32 %v5781, %v5915
        %vm5917 = vcmp.eq.f32.partialorder %v5781, inf
        %v5918 = vsel %vm5917, %v5781, %v5916
        %vm5919 = vcmp.eq.f32.partialorder %v5781, 0.0
        %v5920 = vand.u32 %v5781, 2147483648
        %v5921 = vsel %vm5919, %v5920, %v5918
        %v5922 = vrsqrt.pop %v5782
        %v5923 = vmul.f32 %v5782, %v5922
        %vm5924 = vcmp.eq.f32.partialorder %v5782, inf
        %v5925 = vsel %vm5924, %v5782, %v5923
        %vm5926 = vcmp.eq.f32.partialorder %v5782, 0.0
        %v5927 = vand.u32 %v5782, 2147483648
        %v5928 = vsel %vm5926, %v5927, %v5925
        %v5929 = vrsqrt.pop %v5783
        %v5930 = vmul.f32 %v5783, %v5929
        %vm5931 = vcmp.eq.f32.partialorder %v5783, inf
        %v5932 = vsel %vm5931, %v5783, %v5930
        %vm5933 = vcmp.eq.f32.partialorder %v5783, 0.0
        %v5934 = vand.u32 %v5783, 2147483648
        %v5935 = vsel %vm5933, %v5934, %v5932
        %v5936 = vrsqrt.pop %v5784
        %v5937 = vmul.f32 %v5784, %v5936
        %vm5938 = vcmp.eq.f32.partialorder %v5784, inf
        %v5939 = vsel %vm5938, %v5784, %v5937
        %vm5940 = vcmp.eq.f32.partialorder %v5784, 0.0
        %v5941 = vand.u32 %v5784, 2147483648
        %v5942 = vsel %vm5940, %v5941, %v5939
        %v5943 = vrsqrt.pop %v5785
        %v5944 = vmul.f32 %v5785, %v5943
        %vm5945 = vcmp.eq.f32.partialorder %v5785, inf
        %v5946 = vsel %vm5945, %v5785, %v5944
        %vm5947 = vcmp.eq.f32.partialorder %v5785, 0.0
        %v5948 = vand.u32 %v5785, 2147483648
        %v5949 = vsel %vm5947, %v5948, %v5946
        %v5950 = vrsqrt.pop %v5786
        %v5951 = vmul.f32 %v5786, %v5950
        %vm5952 = vcmp.eq.f32.partialorder %v5786, inf
        %v5953 = vsel %vm5952, %v5786, %v5951
        %vm5954 = vcmp.eq.f32.partialorder %v5786, 0.0
        %v5955 = vand.u32 %v5786, 2147483648
        %v5956 = vsel %vm5954, %v5955, %v5953
        %v5957 = vrsqrt.pop %v5787
        %v5958 = vmul.f32 %v5787, %v5957
        %vm5959 = vcmp.eq.f32.partialorder %v5787, inf
        %v5960 = vsel %vm5959, %v5787, %v5958
        %vm5961 = vcmp.eq.f32.partialorder %v5787, 0.0
        %v5962 = vand.u32 %v5787, 2147483648
        %v5963 = vsel %vm5961, %v5962, %v5960
        %v5964 = vrsqrt.pop %v5788
        %v5965 = vmul.f32 %v5788, %v5964
        %vm5966 = vcmp.eq.f32.partialorder %v5788, inf
        %v5967 = vsel %vm5966, %v5788, %v5965
        %vm5968 = vcmp.eq.f32.partialorder %v5788, 0.0
        %v5969 = vand.u32 %v5788, 2147483648
        %v5970 = vsel %vm5968, %v5969, %v5967
        %v5971 = vrsqrt.pop %v5789
        %v5972 = vmul.f32 %v5789, %v5971
        %vm5973 = vcmp.eq.f32.partialorder %v5789, inf
        %v5974 = vsel %vm5973, %v5789, %v5972
        %vm5975 = vcmp.eq.f32.partialorder %v5789, 0.0
        %v5976 = vand.u32 %v5789, 2147483648
        %v5977 = vsel %vm5975, %v5976, %v5974
        %v5978 = vrsqrt.pop %v5790
        %v5979 = vmul.f32 %v5790, %v5978
        %vm5980 = vcmp.eq.f32.partialorder %v5790, inf
        %v5981 = vsel %vm5980, %v5790, %v5979
        %vm5982 = vcmp.eq.f32.partialorder %v5790, 0.0
        %v5983 = vand.u32 %v5790, 2147483648
        %v5984 = vsel %vm5982, %v5983, %v5981
        %v5985 = vrsqrt.pop %v5791
        %v5986 = vmul.f32 %v5791, %v5985
        %vm5987 = vcmp.eq.f32.partialorder %v5791, inf
        %v5988 = vsel %vm5987, %v5791, %v5986
        %vm5989 = vcmp.eq.f32.partialorder %v5791, 0.0
        %v5990 = vand.u32 %v5791, 2147483648
        %v5991 = vsel %vm5989, %v5990, %v5988
        %v5992 = vrsqrt.pop %v5792
        %v5993 = vmul.f32 %v5792, %v5992
        %vm5994 = vcmp.eq.f32.partialorder %v5792, inf
        %v5995 = vsel %vm5994, %v5792, %v5993
        %vm5996 = vcmp.eq.f32.partialorder %v5792, 0.0
        %v5997 = vand.u32 %v5792, 2147483648
        %v5998 = vsel %vm5996, %v5997, %v5995
        %v5999 = vrsqrt.pop %v5793
        %v6000 = vmul.f32 %v5793, %v5999
        %vm6001 = vcmp.eq.f32.partialorder %v5793, inf
        %v6002 = vsel %vm6001, %v5793, %v6000
        %vm6003 = vcmp.eq.f32.partialorder %v5793, 0.0
        %v6004 = vand.u32 %v5793, 2147483648
        %v6005 = vsel %vm6003, %v6004, %v6002
        %v6006 = vrsqrt.pop %v5794
        %v6007 = vmul.f32 %v5794, %v6006
        %vm6008 = vcmp.eq.f32.partialorder %v5794, inf
        %v6009 = vsel %vm6008, %v5794, %v6007
        %vm6010 = vcmp.eq.f32.partialorder %v5794, 0.0
        %v6011 = vand.u32 %v5794, 2147483648
        %v6012 = vsel %vm6010, %v6011, %v6009
        %v6013 = vrsqrt.pop %v5795
        %v6014 = vmul.f32 %v5795, %v6013
        %vm6015 = vcmp.eq.f32.partialorder %v5795, inf
        %v6016 = vsel %vm6015, %v5795, %v6014
        %vm6017 = vcmp.eq.f32.partialorder %v5795, 0.0
        %v6018 = vand.u32 %v5795, 2147483648
        %v6019 = vsel %vm6017, %v6018, %v6016
        %v6020 = vlaneseq
        %v6021 = vand.u32 %v6020, 127
        %vm6022 = vcmp.lt.s32.totalorder %v6021, 10
        %v6023 = vsel %vm6022, %v5802, 0.0
        %v6024 = vsel %vm6022, %v5809, 0.0
        %v6025 = vsel %vm6022, %v5816, 0.0
        %v6026 = vsel %vm6022, %v5823, 0.0
        %v6027 = vsel %vm6022, %v5830, 0.0
        %v6028 = vsel %vm6022, %v5837, 0.0
        %v6029 = vsel %vm6022, %v5844, 0.0
        %v6030 = vsel %vm6022, %v5851, 0.0
        %v6031 = vsel %vm6022, %v5858, 0.0
        %v6032 = vsel %vm6022, %v5865, 0.0
        %v6033 = vsel %vm6022, %v5872, 0.0
        %v6034 = vsel %vm6022, %v5879, 0.0
        %v6035 = vsel %vm6022, %v5886, 0.0
        %v6036 = vsel %vm6022, %v5893, 0.0
        %v6037 = vsel %vm6022, %v5900, 0.0
        %v6038 = vsel %vm6022, %v5907, 0.0
        %v6039 = vsel %vm6022, %v5914, 0.0
        %v6040 = vsel %vm6022, %v5921, 0.0
        %v6041 = vsel %vm6022, %v5928, 0.0
        %v6042 = vsel %vm6022, %v5935, 0.0
        %v6043 = vsel %vm6022, %v5942, 0.0
        %v6044 = vsel %vm6022, %v5949, 0.0
        %v6045 = vsel %vm6022, %v5956, 0.0
        %v6046 = vsel %vm6022, %v5963, 0.0
        %v6047 = vsel %vm6022, %v5970, 0.0
        %v6048 = vsel %vm6022, %v5977, 0.0
        %v6049 = vsel %vm6022, %v5984, 0.0
        %v6050 = vsel %vm6022, %v5991, 0.0
        %v6051 = vsel %vm6022, %v5998, 0.0
        %v6052 = vsel %vm6022, %v6005, 0.0
        %v6053 = vsel %vm6022, %v6012, 0.0
        %v6054 = vsel %vm6022, %v6019, 0.0
        %6055 = vadd.xlane.f32.xlu0 %v6023
        %v6056 = vpop.xlane.xlu0 %6055
        %6057 = vadd.xlane.f32.xlu0 %v6024
        %v6058 = vpop.xlane.xlu0 %6057
        %6059 = vadd.xlane.f32.xlu0 %v6025
        %v6060 = vpop.xlane.xlu0 %6059
        %6061 = vadd.xlane.f32.xlu0 %v6026
        %v6062 = vpop.xlane.xlu0 %6061
        %6063 = vadd.xlane.f32.xlu0 %v6027
        %v6064 = vpop.xlane.xlu0 %6063
        %6065 = vadd.xlane.f32.xlu0 %v6028
        %v6066 = vpop.xlane.xlu0 %6065
        %6067 = vadd.xlane.f32.xlu0 %v6029
        %v6068 = vpop.xlane.xlu0 %6067
        %6069 = vadd.xlane.f32.xlu0 %v6030
        %v6070 = vpop.xlane.xlu0 %6069
        %6071 = vadd.xlane.f32.xlu0 %v6031
        %v6072 = vpop.xlane.xlu0 %6071
        %6073 = vadd.xlane.f32.xlu0 %v6032
        %v6074 = vpop.xlane.xlu0 %6073
        %6075 = vadd.xlane.f32.xlu0 %v6033
        %v6076 = vpop.xlane.xlu0 %6075
        %6077 = vadd.xlane.f32.xlu0 %v6034
        %v6078 = vpop.xlane.xlu0 %6077
        %6079 = vadd.xlane.f32.xlu0 %v6035
        %v6080 = vpop.xlane.xlu0 %6079
        %6081 = vadd.xlane.f32.xlu0 %v6036
        %v6082 = vpop.xlane.xlu0 %6081
        %6083 = vadd.xlane.f32.xlu0 %v6037
        %v6084 = vpop.xlane.xlu0 %6083
        %6085 = vadd.xlane.f32.xlu0 %v6038
        %v6086 = vpop.xlane.xlu0 %6085
        %6087 = vadd.xlane.f32.xlu0 %v6039
        %v6088 = vpop.xlane.xlu0 %6087
        %6089 = vadd.xlane.f32.xlu0 %v6040
        %v6090 = vpop.xlane.xlu0 %6089
        %6091 = vadd.xlane.f32.xlu0 %v6041
        %v6092 = vpop.xlane.xlu0 %6091
        %6093 = vadd.xlane.f32.xlu0 %v6042
        %v6094 = vpop.xlane.xlu0 %6093
        %6095 = vadd.xlane.f32.xlu0 %v6043
        %v6096 = vpop.xlane.xlu0 %6095
        %6097 = vadd.xlane.f32.xlu0 %v6044
        %v6098 = vpop.xlane.xlu0 %6097
        %6099 = vadd.xlane.f32.xlu0 %v6045
        %v6100 = vpop.xlane.xlu0 %6099
        %6101 = vadd.xlane.f32.xlu0 %v6046
        %v6102 = vpop.xlane.xlu0 %6101
        %6103 = vadd.xlane.f32.xlu0 %v6047
        %v6104 = vpop.xlane.xlu0 %6103
        %6105 = vadd.xlane.f32.xlu0 %v6048
        %v6106 = vpop.xlane.xlu0 %6105
        %6107 = vadd.xlane.f32.xlu0 %v6049
        %v6108 = vpop.xlane.xlu0 %6107
        %6109 = vadd.xlane.f32.xlu0 %v6050
        %v6110 = vpop.xlane.xlu0 %6109
        %6111 = vadd.xlane.f32.xlu0 %v6051
        %v6112 = vpop.xlane.xlu0 %6111
        %6113 = vadd.xlane.f32.xlu0 %v6052
        %v6114 = vpop.xlane.xlu0 %6113
        %6115 = vadd.xlane.f32.xlu0 %v6053
        %v6116 = vpop.xlane.xlu0 %6115
        %6117 = vadd.xlane.f32.xlu0 %v6054
        %v6118 = vpop.xlane.xlu0 %6117
        %v6119 = vrcp.pop %v6056
        %v6120 = vmul.f32 1.0, %v6119
        %v6121 = vrcp.pop %v6058
        %v6122 = vmul.f32 1.0, %v6121
        %v6123 = vrcp.pop %v6060
        %v6124 = vmul.f32 1.0, %v6123
        %v6125 = vrcp.pop %v6062
        %v6126 = vmul.f32 1.0, %v6125
        %v6127 = vrcp.pop %v6064
        %v6128 = vmul.f32 1.0, %v6127
        %v6129 = vrcp.pop %v6066
        %v6130 = vmul.f32 1.0, %v6129
        %v6131 = vrcp.pop %v6068
        %v6132 = vmul.f32 1.0, %v6131
        %v6133 = vrcp.pop %v6070
        %v6134 = vmul.f32 1.0, %v6133
        %v6135 = vrcp.pop %v6072
        %v6136 = vmul.f32 1.0, %v6135
        %v6137 = vrcp.pop %v6074
        %v6138 = vmul.f32 1.0, %v6137
        %v6139 = vrcp.pop %v6076
        %v6140 = vmul.f32 1.0, %v6139
        %v6141 = vrcp.pop %v6078
        %v6142 = vmul.f32 1.0, %v6141
        %v6143 = vrcp.pop %v6080
        %v6144 = vmul.f32 1.0, %v6143
        %v6145 = vrcp.pop %v6082
        %v6146 = vmul.f32 1.0, %v6145
        %v6147 = vrcp.pop %v6084
        %v6148 = vmul.f32 1.0, %v6147
        %v6149 = vrcp.pop %v6086
        %v6150 = vmul.f32 1.0, %v6149
        %v6151 = vrcp.pop %v6088
        %v6152 = vmul.f32 1.0, %v6151
        %v6153 = vrcp.pop %v6090
        %v6154 = vmul.f32 1.0, %v6153
        %v6155 = vrcp.pop %v6092
        %v6156 = vmul.f32 1.0, %v6155
        %v6157 = vrcp.pop %v6094
        %v6158 = vmul.f32 1.0, %v6157
        %v6159 = vrcp.pop %v6096
        %v6160 = vmul.f32 1.0, %v6159
        %v6161 = vrcp.pop %v6098
        %v6162 = vmul.f32 1.0, %v6161
        %v6163 = vrcp.pop %v6100
        %v6164 = vmul.f32 1.0, %v6163
        %v6165 = vrcp.pop %v6102
        %v6166 = vmul.f32 1.0, %v6165
        %v6167 = vrcp.pop %v6104
        %v6168 = vmul.f32 1.0, %v6167
        %v6169 = vrcp.pop %v6106
        %v6170 = vmul.f32 1.0, %v6169
        %v6171 = vrcp.pop %v6108
        %v6172 = vmul.f32 1.0, %v6171
        %v6173 = vrcp.pop %v6110
        %v6174 = vmul.f32 1.0, %v6173
        %v6175 = vrcp.pop %v6112
        %v6176 = vmul.f32 1.0, %v6175
        %v6177 = vrcp.pop %v6114
        %v6178 = vmul.f32 1.0, %v6177
        %v6179 = vrcp.pop %v6116
        %v6180 = vmul.f32 1.0, %v6179
        %v6181 = vrcp.pop %v6118
        %v6182 = vmul.f32 1.0, %v6181
        %v6183 = vmul.f32 %v5802, %v6120
        %v6184 = vmul.f32 %v5809, %v6122
        %v6185 = vmul.f32 %v5816, %v6124
        %v6186 = vmul.f32 %v5823, %v6126
        %v6187 = vmul.f32 %v5830, %v6128
        %v6188 = vmul.f32 %v5837, %v6130
        %v6189 = vmul.f32 %v5844, %v6132
        %v6190 = vmul.f32 %v5851, %v6134
        %v6191 = vmul.f32 %v5858, %v6136
        %v6192 = vmul.f32 %v5865, %v6138
        %v6193 = vmul.f32 %v5872, %v6140
        %v6194 = vmul.f32 %v5879, %v6142
        %v6195 = vmul.f32 %v5886, %v6144
        %v6196 = vmul.f32 %v5893, %v6146
        %v6197 = vmul.f32 %v5900, %v6148
        %v6198 = vmul.f32 %v5907, %v6150
        %v6199 = vmul.f32 %v5914, %v6152
        %v6200 = vmul.f32 %v5921, %v6154
        %v6201 = vmul.f32 %v5928, %v6156
        %v6202 = vmul.f32 %v5935, %v6158
        %v6203 = vmul.f32 %v5942, %v6160
        %v6204 = vmul.f32 %v5949, %v6162
        %v6205 = vmul.f32 %v5956, %v6164
        %v6206 = vmul.f32 %v5963, %v6166
        %v6207 = vmul.f32 %v5970, %v6168
        %v6208 = vmul.f32 %v5977, %v6170
        %v6209 = vmul.f32 %v5984, %v6172
        %v6210 = vmul.f32 %v5991, %v6174
        %v6211 = vmul.f32 %v5998, %v6176
        %v6212 = vmul.f32 %v6005, %v6178
        %v6213 = vmul.f32 %v6012, %v6180
        %v6214 = vmul.f32 %v6019, %v6182
        %v6215 = vsub.f32 1.0, %v6183
        %v6216 = vsub.f32 1.0, %v6184
        %v6217 = vsub.f32 1.0, %v6185
        %v6218 = vsub.f32 1.0, %v6186
        %v6219 = vsub.f32 1.0, %v6187
        %v6220 = vsub.f32 1.0, %v6188
        %v6221 = vsub.f32 1.0, %v6189
        %v6222 = vsub.f32 1.0, %v6190
        %v6223 = vsub.f32 1.0, %v6191
        %v6224 = vsub.f32 1.0, %v6192
        %v6225 = vsub.f32 1.0, %v6193
        %v6226 = vsub.f32 1.0, %v6194
        %v6227 = vsub.f32 1.0, %v6195
        %v6228 = vsub.f32 1.0, %v6196
        %v6229 = vsub.f32 1.0, %v6197
        %v6230 = vsub.f32 1.0, %v6198
        %v6231 = vsub.f32 1.0, %v6199
        %v6232 = vsub.f32 1.0, %v6200
        %v6233 = vsub.f32 1.0, %v6201
        %v6234 = vsub.f32 1.0, %v6202
        %v6235 = vsub.f32 1.0, %v6203
        %v6236 = vsub.f32 1.0, %v6204
        %v6237 = vsub.f32 1.0, %v6205
        %v6238 = vsub.f32 1.0, %v6206
        %v6239 = vsub.f32 1.0, %v6207
        %v6240 = vsub.f32 1.0, %v6208
        %v6241 = vsub.f32 1.0, %v6209
        %v6242 = vsub.f32 1.0, %v6210
        %v6243 = vsub.f32 1.0, %v6211
        %v6244 = vsub.f32 1.0, %v6212
        %v6245 = vsub.f32 1.0, %v6213
        %v6246 = vsub.f32 1.0, %v6214
        %v6247 = vsel %vm6022, %v6215, 0.0
        %v6248 = vsel %vm6022, %v6216, 0.0
        %v6249 = vsel %vm6022, %v6217, 0.0
        %v6250 = vsel %vm6022, %v6218, 0.0
        %v6251 = vsel %vm6022, %v6219, 0.0
        %v6252 = vsel %vm6022, %v6220, 0.0
        %v6253 = vsel %vm6022, %v6221, 0.0
        %v6254 = vsel %vm6022, %v6222, 0.0
        %v6255 = vsel %vm6022, %v6223, 0.0
        %v6256 = vsel %vm6022, %v6224, 0.0
        %v6257 = vsel %vm6022, %v6225, 0.0
        %v6258 = vsel %vm6022, %v6226, 0.0
        %v6259 = vsel %vm6022, %v6227, 0.0
        %v6260 = vsel %vm6022, %v6228, 0.0
        %v6261 = vsel %vm6022, %v6229, 0.0
        %v6262 = vsel %vm6022, %v6230, 0.0
        %v6263 = vsel %vm6022, %v6231, 0.0
        %v6264 = vsel %vm6022, %v6232, 0.0
        %v6265 = vsel %vm6022, %v6233, 0.0
        %v6266 = vsel %vm6022, %v6234, 0.0
        %v6267 = vsel %vm6022, %v6235, 0.0
        %v6268 = vsel %vm6022, %v6236, 0.0
        %v6269 = vsel %vm6022, %v6237, 0.0
        %v6270 = vsel %vm6022, %v6238, 0.0
        %v6271 = vsel %vm6022, %v6239, 0.0
        %v6272 = vsel %vm6022, %v6240, 0.0
        %v6273 = vsel %vm6022, %v6241, 0.0
        %v6274 = vsel %vm6022, %v6242, 0.0
        %v6275 = vsel %vm6022, %v6243, 0.0
        %v6276 = vsel %vm6022, %v6244, 0.0
        %v6277 = vsel %vm6022, %v6245, 0.0
        %v6278 = vsel %vm6022, %v6246, 0.0
        %6279 = vst [vmem:[%s615] sm:$0xff] %v6247
        %6280 = vst [vmem:[%s615 + $0x8] sm:$0xff] %v6248
        %6281 = vst [vmem:[%s615 + $0x10] sm:$0xff] %v6249
        %6282 = vst [vmem:[%s615 + $0x18] sm:$0xff] %v6250
        %6283 = vst [vmem:[%s615 + $0x20] sm:$0xff] %v6251
        %6284 = vst [vmem:[%s615 + $0x28] sm:$0xff] %v6252
        %6285 = vst [vmem:[%s615 + $0x30] sm:$0xff] %v6253
        %6286 = vst [vmem:[%s615 + $0x38] sm:$0xff] %v6254
        %6287 = vst [vmem:[%s615 + $0x40] sm:$0xff] %v6255
        %6288 = vst [vmem:[%s615 + $0x48] sm:$0xff] %v6256
        %6289 = vst [vmem:[%s615 + $0x50] sm:$0xff] %v6257
        %6290 = vst [vmem:[%s615 + $0x58] sm:$0xff] %v6258
        %6291 = vst [vmem:[%s615 + $0x60] sm:$0xff] %v6259
        %6292 = vst [vmem:[%s615 + $0x68] sm:$0xff] %v6260
        %6293 = vst [vmem:[%s615 + $0x70] sm:$0xff] %v6261
        %6294 = vst [vmem:[%s615 + $0x78] sm:$0xff] %v6262
        %6295 = vst [vmem:[%s615 + $0x80] sm:$0xff] %v6263
        %6296 = vst [vmem:[%s615 + $0x88] sm:$0xff] %v6264
        %6297 = vst [vmem:[%s615 + $0x90] sm:$0xff] %v6265
        %6298 = vst [vmem:[%s615 + $0x98] sm:$0xff] %v6266
        %6299 = vst [vmem:[%s615 + $0xa0] sm:$0xff] %v6267
        %6300 = vst [vmem:[%s615 + $0xa8] sm:$0xff] %v6268
        %6301 = vst [vmem:[%s615 + $0xb0] sm:$0xff] %v6269
        %6302 = vst [vmem:[%s615 + $0xb8] sm:$0xff] %v6270
        %6303 = vst [vmem:[%s615 + $0xc0] sm:$0xff] %v6271
        %6304 = vst [vmem:[%s615 + $0xc8] sm:$0xff] %v6272
        %6305 = vst [vmem:[%s615 + $0xd0] sm:$0xff] %v6273
        %6306 = vst [vmem:[%s615 + $0xd8] sm:$0xff] %v6274
        %6307 = vst [vmem:[%s615 + $0xe0] sm:$0xff] %v6275
        %6308 = vst [vmem:[%s615 + $0xe8] sm:$0xff] %v6276
        %6309 = vst [vmem:[%s615 + $0xf0] sm:$0xff] %v6277
        %6310 = vst [vmem:[%s615 + $0xf8] sm:$0xff] %v6278
        %s6311 = sand.u32 %s364, 1
        %s6312 = scalar_lea.sflag [#allocation4], %s6311
        %s6313 = sand.u32 %s364, 1
        %s6314 = smul.addr %s6313, 256
        %s6315 = scalar_lea.vmem [#allocation16], %s6314
        // Predicated region
        $region113: #{tpu_custom_call.1} parent=79 // pred_check
          %p6316 = pneg %p374
        $region114: #{tpu_custom_call.1} parent=79 // pred_check_branch
          %6318 = sbr.rel (%p6316) target = $region116
        $region115: #{tpu_custom_call.1} parent=79 // pred_region
          %s6319 = smul.u32 32, %s36
          %s6321 = ssub.s32 4096, 4096
          %6322 = vsyncadd %s6312, %s6321
          %s6323 = smul.addr %s6319, 128
          %s6324 = scalar_lea.hbm %s15, %s6323
          %s6325 = sshll.u32 %s6315, 4
          %s6326 = int_to_ptr.vmem [resolvable:$true] %s6325
          %6331 = dma.vmem_to_hbm [thread:$0]  %s6326, 4096, %s6324, %s6312, 128, 128, 8
        $region116: #{tpu_custom_call.1} parent=79 // pred_fallthru
          _
      $region80: #{tpu_custom_call.1} parent=5 // pred_fallthru
        _
      %p6332 = scmp.le.s32.totalorder 2, %s31
      // Predicated region
      $region117: #{tpu_custom_call.1} parent=5 // pred_check
        %p6333 = pneg %p6332
      $region118: #{tpu_custom_call.1} parent=5 // pred_check_branch
        %6335 = sbr.rel (%p6333) target = $region120
      $region119: #{tpu_custom_call.1} parent=5 // pred_region
        %s6336 = ssub.s32 %s31, 2
        // Predicated region
        $region121: #{tpu_custom_call.1} parent=119 // pred_check
          %p6337 = pneg %p380
        $region122: #{tpu_custom_call.1} parent=119 // pred_check_branch
          %6339 = sbr.rel (%p6337) target = $region124
        $region123: #{tpu_custom_call.1} parent=119 // pred_region
          %s6340 = sand.u32 %s365, 1
          %s6341 = scalar_lea.sflag [#allocation4], %s6340
          %s6342 = sand.u32 %s365, 1
          %s6343 = smul.addr %s6342, 256
          %s6344 = scalar_lea.vmem [#allocation16], %s6343
          %6345 = dma.done %s6341, 4096
        $region124: #{tpu_custom_call.1} parent=119 // pred_fallthru
          _
      $region120: #{tpu_custom_call.1} parent=5 // pred_fallthru
        _
    $region6: #{tpu_custom_call.1} parent=1 // loop_footer
      %s35 = sadd.s32 1, %s31
    $region7: #{tpu_custom_call.1} parent=1 // loop_footer_branch
      %30 = sbr.rel target = $region3
    $region8: #{tpu_custom_call.1} parent=1 // loop_exit
      _
    %6346 = vsyncpa [#allocation3], 1
    %s6347 = scalar_lea.sflag [#allocation3], 1
    %6348 = vsyncpa %s6347, 1
    %6349 = vsyncpa [#allocation6], 1
    %6350 = vsyncpa [#allocation9], 1
    %6351 = vsyncpa [#allocation12], 1
    %6352 = vsyncpa [#allocation15], 1
    %6353 = vsyncpa [#allocation4], 1
    %s6354 = scalar_lea.sflag [#allocation4], 1
    %6355 = vsyncpa %s6354, 1

</llo_original>
